<compile_context>
chip_gen: v5e
topology: v5e:2x2
jax: 0.10.0
libtpu: 0.0.40
codegen_flags: <defaults>
</compile_context>

<pallas_src>
from functools import partial

import numpy as np
import jax
import jax.numpy as jnp
from jax.experimental import pallas as pl
from jax.experimental.pallas import tpu as pltpu


# ---------------------------------------------------------------------------
# Fused kernel: stem conv/bn/relu + num_blocks BasicBlocks, `ips` images/step.
# ---------------------------------------------------------------------------
def _make_fused_kernel(H, width, C, ips, num_blocks):
    WC = width * C
    M = ips * H                                # GEMM M rows per grid step

    def kernel(x_ref, w_ref, b_ref, o_ref, halo_ref, res_ref):
        # Rows whose vertical neighbour lies in a different image (or outside
        # the block): those conv taps must read zero padding.  The same masks
        # also cover the two never-written halo border rows (7 and M+8), so
        # the halo scratch never needs zero-initialisation -- garbage there is
        # always discarded by the select.
        row = jax.lax.broadcasted_iota(jnp.int32, (M, 1), 0) % H
        not_top = row != 0                     # a row above exists in-image
        not_bot = row != (H - 1)               # a row below exists in-image

        def conv_bn(act, s):
            """3x3 conv (stride 1, pad 1) + folded eval-mode BatchNorm.

            act: (M, W*C) f32, lane-folded (lane index = w*C + ci).
            The dw taps + horizontal zero padding live inside the
            block-tridiagonal (W*C, W*C) weight; the dh = -1/+1 taps come
            from sublane-shifted reads of the halo scratch, masked at image
            rows 0 and H-1.  Accumulation and epilogue stay f32.
            """
            halo_ref[8:8 + M, :] = act                            # aligned store
            mid = act.astype(jnp.bfloat16)
            dn = jnp.where(not_top, halo_ref[7:7 + M, :], 0.0).astype(jnp.bfloat16)
            up = jnp.where(not_bot, halo_ref[9:9 + M, :], 0.0).astype(jnp.bfloat16)
            acc = (jnp.dot(dn, w_ref[3 * s + 0], preferred_element_type=jnp.float32)
                   + jnp.dot(mid, w_ref[3 * s + 1], preferred_element_type=jnp.float32)
                   + jnp.dot(up, w_ref[3 * s + 2], preferred_element_type=jnp.float32))
            return acc + b_ref[s]              # folded BN bias (scale in weights)

        # --- stem: relu(bn1(conv1(x))) --------------------------------------
        y = jnp.maximum(conv_bn(x_ref[...], 0), 0.0)

        # --- layer1: post-activation BasicBlocks ------------------------------
        # TODO(synk): switch to lax.fori_loop over a stage index if num_blocks
        # grows beyond ~3 (bounds vreg live ranges / compile size).
        for blk in range(num_blocks):
            res_ref[...] = y                   # identity input of this block
            h1 = jnp.maximum(conv_bn(y, 1 + 2 * blk), 0.0)
            y = jnp.maximum(conv_bn(h1, 2 + 2 * blk) + res_ref[...], 0.0)

        o_ref[...] = y                         # (M, W*C) lane-dense, unmasked

    return kernel


# ---------------------------------------------------------------------------
# Public forward:  relu(bn1(conv1(x))) -> layer1, all inside one pallas_call.
# ---------------------------------------------------------------------------
@partial(jax.jit, static_argnames=("images_per_step",))
def resnet1layer_forward(x_nchw, packed, images_per_step=8):
    """x_nchw: [N, Cin, H, W].  Returns layer1 output in NCHW: [N, C, H, W]."""
    w, b = packed["w"], packed["b"]            # (S*3, WC, WC) bf16, (S, 1, WC) f32
    n_stages = b.shape[0]
    num_blocks = (n_stages - 1) // 2
    WC = w.shape[-1]
    N, cin, H, width = x_nchw.shape
    C = WC // width

    # Several images per grid step (keep N/ips even when tuning for v7x
    # megacore; at these sizes VMEM is never the constraint).
    ips = max(1, min(images_per_step, N))
    n_steps = pl.cdiv(N, ips)
    n_pad = n_steps * ips
    rows = ips * H                             # GEMM M per step

    # NCHW -> lane-folded (N*H, W*C): channels (zero-padded to C) minor, W next.
    x = jnp.transpose(x_nchw, (0, 2, 3, 1)).astype(jnp.float32)
    x = jnp.pad(x, ((0, n_pad - N), (0, 0), (0, 0), (0, C - cin)))
    xin = x.reshape(n_pad * H, WC)

    out = pl.pallas_call(
        _make_fused_kernel(H, width, C, ips, num_blocks),
        out_shape=jax.ShapeDtypeStruct((n_pad * H, WC), jnp.float32),
        grid=(n_steps,),
        in_specs=[
            pl.BlockSpec((rows, WC), lambda n: (n, 0)),
            pl.BlockSpec(w.shape, lambda n: (0, 0, 0)),   # constant -> DMA'd once
            pl.BlockSpec(b.shape, lambda n: (0, 0, 0)),
        ],
        out_specs=pl.BlockSpec((rows, WC), lambda n: (n, 0)),
        scratch_shapes=[
            pltpu.VMEM((rows + 16, WC), jnp.float32),     # vertical-halo scratch
            pltpu.VMEM((rows, WC), jnp.float32),          # residual identity
        ],
        compiler_params=pltpu.CompilerParams(
            dimension_semantics=("parallel",)),
    )(xin, w, b)

    out = out[:N * H].reshape(N, H, width, C)
    return jnp.transpose(out, (0, 3, 1, 2))               # NCHW


# ---------------------------------------------------------------------------
# Parameter construction (mirrors the module's __init__ init) and packing.
# ---------------------------------------------------------------------------
def _kaiming_conv(key, cin, cout, k=3):
    # nn.init.kaiming_normal_(mode='fan_out', nonlinearity='relu')
    fan_out = k * k * cout
    std = (2.0 / fan_out) ** 0.5
    return jax.random.normal(key, (k, k, cin, cout), jnp.float32) * std  # HWIO


def _bn_fold(c, eps=1e-5):
    # BatchNorm2d with weight=1, bias=0, running_mean=0, running_var=1 (eval).
    gamma = jnp.ones((c,), jnp.float32)
    beta = jnp.zeros((c,), jnp.float32)
    mean = jnp.zeros((c,), jnp.float32)
    var = jnp.ones((c,), jnp.float32)
    scale = gamma / jnp.sqrt(var + eps)
    return scale, beta - mean * scale


def make_raw_params(key, in_planes=16, num_blocks=2):
    keys = jax.random.split(key, 1 + 2 * num_blocks)
    params = {
        "conv1_w": _kaiming_conv(keys[0], 3, in_planes),
        "bn1": _bn_fold(in_planes),
        "layer1": [],
    }
    for blk in range(num_blocks):
        params["layer1"].append({
            "conv1_w": _kaiming_conv(keys[1 + 2 * blk], in_planes, in_planes),
            "bn1": _bn_fold(in_planes),
            "conv2_w": _kaiming_conv(keys[2 + 2 * blk], in_planes, in_planes),
            "bn2": _bn_fold(in_planes),
        })
    return params


def pack_params(raw, width):
    """One-time packing (numpy, host-side):

    * BN scale folded into the conv weights (exact in fp32, then bf16 cast).
    * Per stage, three block-tridiagonal (W*C, W*C) matrices (one per vertical
      tap dh):  B[dh][w'*C + ci, w*C + co] = W[dh, w - w' + 1, ci, co] * scale[co],
      zero outside |w - w'| <= 1 (this encodes the horizontal zero padding).
    * Folded BN bias tiled over w to (1, W*C).
    """
    C = int(raw["conv1_w"].shape[-1])

    def fold(w_hwio, bn, cin):
        scale = np.asarray(bn[0], np.float32)
        bias = np.asarray(bn[1], np.float32)
        w = np.zeros((3, 3, C, C), np.float32)
        w[:, :, :cin, :] = np.asarray(w_hwio, np.float32)   # zero-pad Cin -> C
        w = w * scale[None, None, None, :]                   # fold BN scale
        return w, np.tile(bias, width)                       # bias[w*C+co]=bias[co]

    def tridiag(w):                                          # w: (3, 3, C, C)
        B = np.zeros((3, width * C, width * C), np.float32)
        for dh in range(3):
            for dw in range(3):
                blk = w[dh, dw]                              # (ci, co)
                for col in range(width):
                    src = col + dw - 1
                    if 0 <= src < width:
                        B[dh, src * C:(src + 1) * C, col * C:(col + 1) * C] = blk
        return B

    w_list, b_list = [], []
    w0, b0 = fold(raw["conv1_w"], raw["bn1"], cin=int(raw["conv1_w"].shape[-2]))
    w_list.append(tridiag(w0))
    b_list.append(b0)
    for blk_p in raw["layer1"]:
        w1, b1 = fold(blk_p["conv1_w"], blk_p["bn1"], cin=C)
        w2, b2 = fold(blk_p["conv2_w"], blk_p["bn2"], cin=C)
        w_list += [tridiag(w1), tridiag(w2)]
        b_list += [b1, b2]

    return {
        "w": jnp.asarray(np.concatenate(w_list, axis=0), jnp.bfloat16),  # (S*3,WC,WC)
        "b": jnp.asarray(np.stack(b_list)[:, None, :], jnp.float32),     # (S,1,WC)
    }


# ---------------------------------------------------------------------------
# Pure-JAX reference (for the value-level layout/semantics check).
# ---------------------------------------------------------------------------
def _conv3x3_ref(x_nhwc, w_hwio):
    return jax.lax.conv_general_dilated(
        x_nhwc, w_hwio, window_strides=(1, 1), padding=((1, 1), (1, 1)),
        dimension_numbers=("NHWC", "HWIO", "NHWC"))


def forward_ref(x_nhwc, raw):
    s, b = raw["bn1"]
    out = jnp.maximum(_conv3x3_ref(x_nhwc, raw["conv1_w"]) * s + b, 0.0)
    for blk in raw["layer1"]:
        ident = out
        s1, b1 = blk["bn1"]
        h = jnp.maximum(_conv3x3_ref(out, blk["conv1_w"]) * s1 + b1, 0.0)
        s2, b2 = blk["bn2"]
        out = jnp.maximum(_conv3x3_ref(h, blk["conv2_w"]) * s2 + b2 + ident, 0.0)
    return out


if __name__ == "__main__":
    key = jax.random.PRNGKey(0)
    k_x, k_p = jax.random.split(key)
    # small CIFAR-like input: batch=2, 3 channels, 16x16 spatial
    x = jax.random.normal(k_x, (2, 3, 16, 16), jnp.float32)
    raw = make_raw_params(k_p, in_planes=16, num_blocks=2)
    packed = pack_params(raw, width=16)

    y = resnet1layer_forward(x, packed)
    jax.block_until_ready(y)
    assert y.shape == (2, 16, 16, 16), y.shape

    # Value-level check against a pure-JAX reference (guards NCHW/NHWC,
    # lane-folding and halo/mask bugs; tolerance covers bf16 MXU operands
    # with f32 accumulation).
    y_ref = jnp.transpose(forward_ref(jnp.transpose(x, (0, 2, 3, 1)), raw),
                          (0, 3, 1, 2))
    err = float(jnp.max(jnp.abs(y - y_ref)))
    assert err < 1e-1, f"max abs err vs reference: {err}"
    print("KERNEL_OK")
</pallas_src>

<mosaic_0001>
module attributes {stable_mosaic.version = 11 : i64} {
  func.func @kernel(%arg0: i32, %arg1: memref<32x256xf32, #tpu.memory_space<vmem>>, %arg2: memref<15x256x256xbf16, #tpu.memory_space<vmem>>, %arg3: memref<5x1x256xf32, #tpu.memory_space<vmem>>, %arg4: memref<32x256xf32, #tpu.memory_space<vmem>>, %arg5: memref<48x256xf32, #tpu.memory_space<vmem>>, %arg6: memref<32x256xf32, #tpu.memory_space<vmem>>) attributes {dimension_semantics = [#tpu.dimension_semantics<parallel>], iteration_bounds = array<i64: 1>, scalar_prefetch = 0 : i64, scratch_operands = 2 : i64, tpu.core_type = #tpu.core_type<tc>, window_params = [{transform_indices = @transform_0, window_bounds = array<i64: 32, 256>}, {pipeline_mode = #tpu.pipeline_mode<synchronous>, transform_indices = @transform_1, window_bounds = array<i64: 15, 256, 256>}, {pipeline_mode = #tpu.pipeline_mode<synchronous>, transform_indices = @transform_2, window_bounds = array<i64: 5, 1, 256>}, {transform_indices = @transform_3, window_bounds = array<i64: 32, 256>}]} {
    %0 = tpu.iota {dimensions = array<i32: 0>} : vector<32x1xi32>
    %c16_i32 = arith.constant 16 : i32
    %c0_i32 = arith.constant 0 : i32
    %1 = arith.cmpi eq, %c16_i32, %c0_i32 : i32
    %c1_i32 = arith.constant 1 : i32
    %2 = arith.select %1, %c1_i32, %c16_i32 : i32
    %3 = vector.broadcast %2 : i32 to vector<32x1xi32>
    %4 = arith.remsi %0, %3 : vector<32x1xi32>
    %c0_i32_0 = arith.constant 0 : i32
    %5 = vector.broadcast %c0_i32_0 : i32 to vector<32x1xi32>
    %6 = arith.cmpi ne, %4, %5 : vector<32x1xi32>
    %c0_i32_1 = arith.constant 0 : i32
    %7 = vector.broadcast %c0_i32_1 : i32 to vector<32x1xi32>
    %8 = arith.cmpi slt, %4, %7 : vector<32x1xi32>
    %c0_i32_2 = arith.constant 0 : i32
    %9 = arith.cmpi slt, %2, %c0_i32_2 : i32
    %10 = vector.broadcast %9 : i1 to vector<32x1xi1>
    %11 = vector.broadcast %10 : vector<32x1xi1> to vector<32x1xi1>
    %12 = arith.xori %8, %11 : vector<32x1xi1>
    %13 = arith.andi %12, %6 : vector<32x1xi1>
    %14 = vector.broadcast %2 : i32 to vector<32x1xi32>
    %15 = arith.addi %4, %14 : vector<32x1xi32>
    %16 = arith.select %13, %15, %4 : vector<32x1xi1>, vector<32x1xi32>
    %c0_i32_3 = arith.constant 0 : i32
    %17 = vector.broadcast %c0_i32_3 : i32 to vector<32x1xi32>
    %18 = arith.cmpi ne, %16, %17 : vector<32x1xi32>
    %c15_i32 = arith.constant 15 : i32
    %19 = vector.broadcast %c15_i32 : i32 to vector<32x1xi32>
    %20 = arith.cmpi ne, %16, %19 : vector<32x1xi32>
    %c0 = arith.constant 0 : index
    %c0_4 = arith.constant 0 : index
    %21 = vector.load %arg1[%c0, %c0_4] : memref<32x256xf32, #tpu.memory_space<vmem>>, vector<32x256xf32>
    %c8 = arith.constant 8 : index
    %c0_5 = arith.constant 0 : index
    %22 = vector.load %arg5[%c8, %c0_5] : memref<48x256xf32, #tpu.memory_space<vmem>>, vector<32x256xf32>
    tpu.vector_store %arg5[%c8, %c0_5], %21 {strides = array<i32>} : memref<48x256xf32, #tpu.memory_space<vmem>>, vector<32x256xf32>,
    %23 = arith.truncf %21 : vector<32x256xf32> to vector<32x256xbf16>
    %c7 = arith.constant 7 : index
    %c0_6 = arith.constant 0 : index
    %24 = vector.load %arg5[%c7, %c0_6] : memref<48x256xf32, #tpu.memory_space<vmem>>, vector<32x256xf32>
    %cst = arith.constant 0.000000e+00 : f32
    %25 = vector.shape_cast %18 : vector<32x1xi1> to vector<32x1xi1>
    %26 = vector.broadcast %25 : vector<32x1xi1> to vector<32x256xi1>
    %27 = vector.broadcast %cst : f32 to vector<32x256xf32>
    %28 = arith.select %26, %24, %27 : vector<32x256xi1>, vector<32x256xf32>
    %29 = arith.truncf %28 : vector<32x256xf32> to vector<32x256xbf16>
    %c9 = arith.constant 9 : index
    %c0_7 = arith.constant 0 : index
    %30 = vector.load %arg5[%c9, %c0_7] : memref<48x256xf32, #tpu.memory_space<vmem>>, vector<32x256xf32>
    %cst_8 = arith.constant 0.000000e+00 : f32
    %31 = vector.shape_cast %20 : vector<32x1xi1> to vector<32x1xi1>
    %32 = vector.broadcast %31 : vector<32x1xi1> to vector<32x256xi1>
    %33 = vector.broadcast %cst_8 : f32 to vector<32x256xf32>
    %34 = arith.select %32, %30, %33 : vector<32x256xi1>, vector<32x256xf32>
    %35 = arith.truncf %34 : vector<32x256xf32> to vector<32x256xbf16>
    %c0_9 = arith.constant 0 : index
    %c0_10 = arith.constant 0 : index
    %c0_11 = arith.constant 0 : index
    %36 = vector.load %arg2[%c0_9, %c0_10, %c0_11] : memref<15x256x256xbf16, #tpu.memory_space<vmem>>, vector<1x256x256xbf16>
    %37 = vector.shape_cast %36 : vector<1x256x256xbf16> to vector<256x256xbf16>
    %cst_12 = arith.constant dense<0.000000e+00> : vector<32x256xf32>
    %38 = tpu.matmul %29, %37, %cst_12 {dimension_numbers = #tpu.dot_dimension_numbers<[1], [0], [0], [1], [0, 0, 1, 1], [], []>} : vector<32x256xbf16>, vector<256x256xbf16>, vector<32x256xf32> -> vector<32x256xf32>
    %c1 = arith.constant 1 : index
    %c0_13 = arith.constant 0 : index
    %c0_14 = arith.constant 0 : index
    %39 = vector.load %arg2[%c1, %c0_13, %c0_14] : memref<15x256x256xbf16, #tpu.memory_space<vmem>>, vector<1x256x256xbf16>
    %40 = vector.shape_cast %39 : vector<1x256x256xbf16> to vector<256x256xbf16>
    %cst_15 = arith.constant dense<0.000000e+00> : vector<32x256xf32>
    %41 = tpu.matmul %23, %40, %cst_15 {dimension_numbers = #tpu.dot_dimension_numbers<[1], [0], [0], [1], [0, 0, 1, 1], [], []>} : vector<32x256xbf16>, vector<256x256xbf16>, vector<32x256xf32> -> vector<32x256xf32>
    %42 = arith.addf %38, %41 : vector<32x256xf32>
    %c2 = arith.constant 2 : index
    %c0_16 = arith.constant 0 : index
    %c0_17 = arith.constant 0 : index
    %43 = vector.load %arg2[%c2, %c0_16, %c0_17] : memref<15x256x256xbf16, #tpu.memory_space<vmem>>, vector<1x256x256xbf16>
    %44 = vector.shape_cast %43 : vector<1x256x256xbf16> to vector<256x256xbf16>
    %cst_18 = arith.constant dense<0.000000e+00> : vector<32x256xf32>
    %45 = tpu.matmul %35, %44, %cst_18 {dimension_numbers = #tpu.dot_dimension_numbers<[1], [0], [0], [1], [0, 0, 1, 1], [], []>} : vector<32x256xbf16>, vector<256x256xbf16>, vector<32x256xf32> -> vector<32x256xf32>
    %46 = arith.addf %42, %45 : vector<32x256xf32>
    %c0_19 = arith.constant 0 : index
    %c0_20 = arith.constant 0 : index
    %c0_21 = arith.constant 0 : index
    %47 = vector.load %arg3[%c0_19, %c0_20, %c0_21] : memref<5x1x256xf32, #tpu.memory_space<vmem>>, vector<1x1x256xf32>
    %48 = vector.shape_cast %47 : vector<1x1x256xf32> to vector<1x256xf32>
    %49 = vector.broadcast %48 : vector<1x256xf32> to vector<32x256xf32>
    %50 = arith.addf %46, %49 : vector<32x256xf32>
    %cst_22 = arith.constant 0.000000e+00 : f32
    %51 = vector.broadcast %cst_22 : f32 to vector<32x256xf32>
    %52 = arith.maximumf %50, %51 : vector<32x256xf32>
    %c0_23 = arith.constant 0 : index
    %c0_24 = arith.constant 0 : index
    %53 = vector.load %arg6[%c0_23, %c0_24] : memref<32x256xf32, #tpu.memory_space<vmem>>, vector<32x256xf32>
    tpu.vector_store %arg6[%c0_23, %c0_24], %52 {strides = array<i32>} : memref<32x256xf32, #tpu.memory_space<vmem>>, vector<32x256xf32>,
    %c8_25 = arith.constant 8 : index
    %c0_26 = arith.constant 0 : index
    %54 = vector.load %arg5[%c8_25, %c0_26] : memref<48x256xf32, #tpu.memory_space<vmem>>, vector<32x256xf32>
    tpu.vector_store %arg5[%c8_25, %c0_26], %52 {strides = array<i32>} : memref<48x256xf32, #tpu.memory_space<vmem>>, vector<32x256xf32>,
    %55 = arith.truncf %52 : vector<32x256xf32> to vector<32x256xbf16>
    %c7_27 = arith.constant 7 : index
    %c0_28 = arith.constant 0 : index
    %56 = vector.load %arg5[%c7_27, %c0_28] : memref<48x256xf32, #tpu.memory_space<vmem>>, vector<32x256xf32>
    %cst_29 = arith.constant 0.000000e+00 : f32
    %57 = vector.shape_cast %18 : vector<32x1xi1> to vector<32x1xi1>
    %58 = vector.broadcast %57 : vector<32x1xi1> to vector<32x256xi1>
    %59 = vector.broadcast %cst_29 : f32 to vector<32x256xf32>
    %60 = arith.select %58, %56, %59 : vector<32x256xi1>, vector<32x256xf32>
    %61 = arith.truncf %60 : vector<32x256xf32> to vector<32x256xbf16>
    %c9_30 = arith.constant 9 : index
    %c0_31 = arith.constant 0 : index
    %62 = vector.load %arg5[%c9_30, %c0_31] : memref<48x256xf32, #tpu.memory_space<vmem>>, vector<32x256xf32>
    %cst_32 = arith.constant 0.000000e+00 : f32
    %63 = vector.shape_cast %20 : vector<32x1xi1> to vector<32x1xi1>
    %64 = vector.broadcast %63 : vector<32x1xi1> to vector<32x256xi1>
    %65 = vector.broadcast %cst_32 : f32 to vector<32x256xf32>
    %66 = arith.select %64, %62, %65 : vector<32x256xi1>, vector<32x256xf32>
    %67 = arith.truncf %66 : vector<32x256xf32> to vector<32x256xbf16>
    %c3 = arith.constant 3 : index
    %c0_33 = arith.constant 0 : index
    %c0_34 = arith.constant 0 : index
    %68 = vector.load %arg2[%c3, %c0_33, %c0_34] : memref<15x256x256xbf16, #tpu.memory_space<vmem>>, vector<1x256x256xbf16>
    %69 = vector.shape_cast %68 : vector<1x256x256xbf16> to vector<256x256xbf16>
    %cst_35 = arith.constant dense<0.000000e+00> : vector<32x256xf32>
    %70 = tpu.matmul %61, %69, %cst_35 {dimension_numbers = #tpu.dot_dimension_numbers<[1], [0], [0], [1], [0, 0, 1, 1], [], []>} : vector<32x256xbf16>, vector<256x256xbf16>, vector<32x256xf32> -> vector<32x256xf32>
    %c4 = arith.constant 4 : index
    %c0_36 = arith.constant 0 : index
    %c0_37 = arith.constant 0 : index
    %71 = vector.load %arg2[%c4, %c0_36, %c0_37] : memref<15x256x256xbf16, #tpu.memory_space<vmem>>, vector<1x256x256xbf16>
    %72 = vector.shape_cast %71 : vector<1x256x256xbf16> to vector<256x256xbf16>
    %cst_38 = arith.constant dense<0.000000e+00> : vector<32x256xf32>
    %73 = tpu.matmul %55, %72, %cst_38 {dimension_numbers = #tpu.dot_dimension_numbers<[1], [0], [0], [1], [0, 0, 1, 1], [], []>} : vector<32x256xbf16>, vector<256x256xbf16>, vector<32x256xf32> -> vector<32x256xf32>
    %74 = arith.addf %70, %73 : vector<32x256xf32>
    %c5 = arith.constant 5 : index
    %c0_39 = arith.constant 0 : index
    %c0_40 = arith.constant 0 : index
    %75 = vector.load %arg2[%c5, %c0_39, %c0_40] : memref<15x256x256xbf16, #tpu.memory_space<vmem>>, vector<1x256x256xbf16>
    %76 = vector.shape_cast %75 : vector<1x256x256xbf16> to vector<256x256xbf16>
    %cst_41 = arith.constant dense<0.000000e+00> : vector<32x256xf32>
    %77 = tpu.matmul %67, %76, %cst_41 {dimension_numbers = #tpu.dot_dimension_numbers<[1], [0], [0], [1], [0, 0, 1, 1], [], []>} : vector<32x256xbf16>, vector<256x256xbf16>, vector<32x256xf32> -> vector<32x256xf32>
    %78 = arith.addf %74, %77 : vector<32x256xf32>
    %c1_42 = arith.constant 1 : index
    %c0_43 = arith.constant 0 : index
    %c0_44 = arith.constant 0 : index
    %79 = vector.load %arg3[%c1_42, %c0_43, %c0_44] : memref<5x1x256xf32, #tpu.memory_space<vmem>>, vector<1x1x256xf32>
    %80 = vector.shape_cast %79 : vector<1x1x256xf32> to vector<1x256xf32>
    %81 = vector.broadcast %80 : vector<1x256xf32> to vector<32x256xf32>
    %82 = arith.addf %78, %81 : vector<32x256xf32>
    %cst_45 = arith.constant 0.000000e+00 : f32
    %83 = vector.broadcast %cst_45 : f32 to vector<32x256xf32>
    %84 = arith.maximumf %82, %83 : vector<32x256xf32>
    %c8_46 = arith.constant 8 : index
    %c0_47 = arith.constant 0 : index
    %85 = vector.load %arg5[%c8_46, %c0_47] : memref<48x256xf32, #tpu.memory_space<vmem>>, vector<32x256xf32>
    tpu.vector_store %arg5[%c8_46, %c0_47], %84 {strides = array<i32>} : memref<48x256xf32, #tpu.memory_space<vmem>>, vector<32x256xf32>,
    %86 = arith.truncf %84 : vector<32x256xf32> to vector<32x256xbf16>
    %c7_48 = arith.constant 7 : index
    %c0_49 = arith.constant 0 : index
    %87 = vector.load %arg5[%c7_48, %c0_49] : memref<48x256xf32, #tpu.memory_space<vmem>>, vector<32x256xf32>
    %cst_50 = arith.constant 0.000000e+00 : f32
    %88 = vector.shape_cast %18 : vector<32x1xi1> to vector<32x1xi1>
    %89 = vector.broadcast %88 : vector<32x1xi1> to vector<32x256xi1>
    %90 = vector.broadcast %cst_50 : f32 to vector<32x256xf32>
    %91 = arith.select %89, %87, %90 : vector<32x256xi1>, vector<32x256xf32>
    %92 = arith.truncf %91 : vector<32x256xf32> to vector<32x256xbf16>
    %c9_51 = arith.constant 9 : index
    %c0_52 = arith.constant 0 : index
    %93 = vector.load %arg5[%c9_51, %c0_52] : memref<48x256xf32, #tpu.memory_space<vmem>>, vector<32x256xf32>
    %cst_53 = arith.constant 0.000000e+00 : f32
    %94 = vector.shape_cast %20 : vector<32x1xi1> to vector<32x1xi1>
    %95 = vector.broadcast %94 : vector<32x1xi1> to vector<32x256xi1>
    %96 = vector.broadcast %cst_53 : f32 to vector<32x256xf32>
    %97 = arith.select %95, %93, %96 : vector<32x256xi1>, vector<32x256xf32>
    %98 = arith.truncf %97 : vector<32x256xf32> to vector<32x256xbf16>
    %c6 = arith.constant 6 : index
    %c0_54 = arith.constant 0 : index
    %c0_55 = arith.constant 0 : index
    %99 = vector.load %arg2[%c6, %c0_54, %c0_55] : memref<15x256x256xbf16, #tpu.memory_space<vmem>>, vector<1x256x256xbf16>
    %100 = vector.shape_cast %99 : vector<1x256x256xbf16> to vector<256x256xbf16>
    %cst_56 = arith.constant dense<0.000000e+00> : vector<32x256xf32>
    %101 = tpu.matmul %92, %100, %cst_56 {dimension_numbers = #tpu.dot_dimension_numbers<[1], [0], [0], [1], [0, 0, 1, 1], [], []>} : vector<32x256xbf16>, vector<256x256xbf16>, vector<32x256xf32> -> vector<32x256xf32>
    %c7_57 = arith.constant 7 : index
    %c0_58 = arith.constant 0 : index
    %c0_59 = arith.constant 0 : index
    %102 = vector.load %arg2[%c7_57, %c0_58, %c0_59] : memref<15x256x256xbf16, #tpu.memory_space<vmem>>, vector<1x256x256xbf16>
    %103 = vector.shape_cast %102 : vector<1x256x256xbf16> to vector<256x256xbf16>
    %cst_60 = arith.constant dense<0.000000e+00> : vector<32x256xf32>
    %104 = tpu.matmul %86, %103, %cst_60 {dimension_numbers = #tpu.dot_dimension_numbers<[1], [0], [0], [1], [0, 0, 1, 1], [], []>} : vector<32x256xbf16>, vector<256x256xbf16>, vector<32x256xf32> -> vector<32x256xf32>
    %105 = arith.addf %101, %104 : vector<32x256xf32>
    %c8_61 = arith.constant 8 : index
    %c0_62 = arith.constant 0 : index
    %c0_63 = arith.constant 0 : index
    %106 = vector.load %arg2[%c8_61, %c0_62, %c0_63] : memref<15x256x256xbf16, #tpu.memory_space<vmem>>, vector<1x256x256xbf16>
    %107 = vector.shape_cast %106 : vector<1x256x256xbf16> to vector<256x256xbf16>
    %cst_64 = arith.constant dense<0.000000e+00> : vector<32x256xf32>
    %108 = tpu.matmul %98, %107, %cst_64 {dimension_numbers = #tpu.dot_dimension_numbers<[1], [0], [0], [1], [0, 0, 1, 1], [], []>} : vector<32x256xbf16>, vector<256x256xbf16>, vector<32x256xf32> -> vector<32x256xf32>
    %109 = arith.addf %105, %108 : vector<32x256xf32>
    %c2_65 = arith.constant 2 : index
    %c0_66 = arith.constant 0 : index
    %c0_67 = arith.constant 0 : index
    %110 = vector.load %arg3[%c2_65, %c0_66, %c0_67] : memref<5x1x256xf32, #tpu.memory_space<vmem>>, vector<1x1x256xf32>
    %111 = vector.shape_cast %110 : vector<1x1x256xf32> to vector<1x256xf32>
    %112 = vector.broadcast %111 : vector<1x256xf32> to vector<32x256xf32>
    %113 = arith.addf %109, %112 : vector<32x256xf32>
    %c0_68 = arith.constant 0 : index
    %c0_69 = arith.constant 0 : index
    %114 = vector.load %arg6[%c0_68, %c0_69] : memref<32x256xf32, #tpu.memory_space<vmem>>, vector<32x256xf32>
    %115 = arith.addf %113, %114 : vector<32x256xf32>
    %cst_70 = arith.constant 0.000000e+00 : f32
    %116 = vector.broadcast %cst_70 : f32 to vector<32x256xf32>
    %117 = arith.maximumf %115, %116 : vector<32x256xf32>
    %c0_71 = arith.constant 0 : index
    %c0_72 = arith.constant 0 : index
    %118 = vector.load %arg6[%c0_71, %c0_72] : memref<32x256xf32, #tpu.memory_space<vmem>>, vector<32x256xf32>
    tpu.vector_store %arg6[%c0_71, %c0_72], %117 {strides = array<i32>} : memref<32x256xf32, #tpu.memory_space<vmem>>, vector<32x256xf32>,
    %c8_73 = arith.constant 8 : index
    %c0_74 = arith.constant 0 : index
    %119 = vector.load %arg5[%c8_73, %c0_74] : memref<48x256xf32, #tpu.memory_space<vmem>>, vector<32x256xf32>
    tpu.vector_store %arg5[%c8_73, %c0_74], %117 {strides = array<i32>} : memref<48x256xf32, #tpu.memory_space<vmem>>, vector<32x256xf32>,
    %120 = arith.truncf %117 : vector<32x256xf32> to vector<32x256xbf16>
    %c7_75 = arith.constant 7 : index
    %c0_76 = arith.constant 0 : index
    %121 = vector.load %arg5[%c7_75, %c0_76] : memref<48x256xf32, #tpu.memory_space<vmem>>, vector<32x256xf32>
    %cst_77 = arith.constant 0.000000e+00 : f32
    %122 = vector.shape_cast %18 : vector<32x1xi1> to vector<32x1xi1>
    %123 = vector.broadcast %122 : vector<32x1xi1> to vector<32x256xi1>
    %124 = vector.broadcast %cst_77 : f32 to vector<32x256xf32>
    %125 = arith.select %123, %121, %124 : vector<32x256xi1>, vector<32x256xf32>
    %126 = arith.truncf %125 : vector<32x256xf32> to vector<32x256xbf16>
    %c9_78 = arith.constant 9 : index
    %c0_79 = arith.constant 0 : index
    %127 = vector.load %arg5[%c9_78, %c0_79] : memref<48x256xf32, #tpu.memory_space<vmem>>, vector<32x256xf32>
    %cst_80 = arith.constant 0.000000e+00 : f32
    %128 = vector.shape_cast %20 : vector<32x1xi1> to vector<32x1xi1>
    %129 = vector.broadcast %128 : vector<32x1xi1> to vector<32x256xi1>
    %130 = vector.broadcast %cst_80 : f32 to vector<32x256xf32>
    %131 = arith.select %129, %127, %130 : vector<32x256xi1>, vector<32x256xf32>
    %132 = arith.truncf %131 : vector<32x256xf32> to vector<32x256xbf16>
    %c9_81 = arith.constant 9 : index
    %c0_82 = arith.constant 0 : index
    %c0_83 = arith.constant 0 : index
    %133 = vector.load %arg2[%c9_81, %c0_82, %c0_83] : memref<15x256x256xbf16, #tpu.memory_space<vmem>>, vector<1x256x256xbf16>
    %134 = vector.shape_cast %133 : vector<1x256x256xbf16> to vector<256x256xbf16>
    %cst_84 = arith.constant dense<0.000000e+00> : vector<32x256xf32>
    %135 = tpu.matmul %126, %134, %cst_84 {dimension_numbers = #tpu.dot_dimension_numbers<[1], [0], [0], [1], [0, 0, 1, 1], [], []>} : vector<32x256xbf16>, vector<256x256xbf16>, vector<32x256xf32> -> vector<32x256xf32>
    %c10 = arith.constant 10 : index
    %c0_85 = arith.constant 0 : index
    %c0_86 = arith.constant 0 : index
    %136 = vector.load %arg2[%c10, %c0_85, %c0_86] : memref<15x256x256xbf16, #tpu.memory_space<vmem>>, vector<1x256x256xbf16>
    %137 = vector.shape_cast %136 : vector<1x256x256xbf16> to vector<256x256xbf16>
    %cst_87 = arith.constant dense<0.000000e+00> : vector<32x256xf32>
    %138 = tpu.matmul %120, %137, %cst_87 {dimension_numbers = #tpu.dot_dimension_numbers<[1], [0], [0], [1], [0, 0, 1, 1], [], []>} : vector<32x256xbf16>, vector<256x256xbf16>, vector<32x256xf32> -> vector<32x256xf32>
    %139 = arith.addf %135, %138 : vector<32x256xf32>
    %c11 = arith.constant 11 : index
    %c0_88 = arith.constant 0 : index
    %c0_89 = arith.constant 0 : index
    %140 = vector.load %arg2[%c11, %c0_88, %c0_89] : memref<15x256x256xbf16, #tpu.memory_space<vmem>>, vector<1x256x256xbf16>
    %141 = vector.shape_cast %140 : vector<1x256x256xbf16> to vector<256x256xbf16>
    %cst_90 = arith.constant dense<0.000000e+00> : vector<32x256xf32>
    %142 = tpu.matmul %132, %141, %cst_90 {dimension_numbers = #tpu.dot_dimension_numbers<[1], [0], [0], [1], [0, 0, 1, 1], [], []>} : vector<32x256xbf16>, vector<256x256xbf16>, vector<32x256xf32> -> vector<32x256xf32>
    %143 = arith.addf %139, %142 : vector<32x256xf32>
    %c3_91 = arith.constant 3 : index
    %c0_92 = arith.constant 0 : index
    %c0_93 = arith.constant 0 : index
    %144 = vector.load %arg3[%c3_91, %c0_92, %c0_93] : memref<5x1x256xf32, #tpu.memory_space<vmem>>, vector<1x1x256xf32>
    %145 = vector.shape_cast %144 : vector<1x1x256xf32> to vector<1x256xf32>
    %146 = vector.broadcast %145 : vector<1x256xf32> to vector<32x256xf32>
    %147 = arith.addf %143, %146 : vector<32x256xf32>
    %cst_94 = arith.constant 0.000000e+00 : f32
    %148 = vector.broadcast %cst_94 : f32 to vector<32x256xf32>
    %149 = arith.maximumf %147, %148 : vector<32x256xf32>
    %c8_95 = arith.constant 8 : index
    %c0_96 = arith.constant 0 : index
    %150 = vector.load %arg5[%c8_95, %c0_96] : memref<48x256xf32, #tpu.memory_space<vmem>>, vector<32x256xf32>
    tpu.vector_store %arg5[%c8_95, %c0_96], %149 {strides = array<i32>} : memref<48x256xf32, #tpu.memory_space<vmem>>, vector<32x256xf32>,
    %151 = arith.truncf %149 : vector<32x256xf32> to vector<32x256xbf16>
    %c7_97 = arith.constant 7 : index
    %c0_98 = arith.constant 0 : index
    %152 = vector.load %arg5[%c7_97, %c0_98] : memref<48x256xf32, #tpu.memory_space<vmem>>, vector<32x256xf32>
    %cst_99 = arith.constant 0.000000e+00 : f32
    %153 = vector.shape_cast %18 : vector<32x1xi1> to vector<32x1xi1>
    %154 = vector.broadcast %153 : vector<32x1xi1> to vector<32x256xi1>
    %155 = vector.broadcast %cst_99 : f32 to vector<32x256xf32>
    %156 = arith.select %154, %152, %155 : vector<32x256xi1>, vector<32x256xf32>
    %157 = arith.truncf %156 : vector<32x256xf32> to vector<32x256xbf16>
    %c9_100 = arith.constant 9 : index
    %c0_101 = arith.constant 0 : index
    %158 = vector.load %arg5[%c9_100, %c0_101] : memref<48x256xf32, #tpu.memory_space<vmem>>, vector<32x256xf32>
    %cst_102 = arith.constant 0.000000e+00 : f32
    %159 = vector.shape_cast %20 : vector<32x1xi1> to vector<32x1xi1>
    %160 = vector.broadcast %159 : vector<32x1xi1> to vector<32x256xi1>
    %161 = vector.broadcast %cst_102 : f32 to vector<32x256xf32>
    %162 = arith.select %160, %158, %161 : vector<32x256xi1>, vector<32x256xf32>
    %163 = arith.truncf %162 : vector<32x256xf32> to vector<32x256xbf16>
    %c12 = arith.constant 12 : index
    %c0_103 = arith.constant 0 : index
    %c0_104 = arith.constant 0 : index
    %164 = vector.load %arg2[%c12, %c0_103, %c0_104] : memref<15x256x256xbf16, #tpu.memory_space<vmem>>, vector<1x256x256xbf16>
    %165 = vector.shape_cast %164 : vector<1x256x256xbf16> to vector<256x256xbf16>
    %cst_105 = arith.constant dense<0.000000e+00> : vector<32x256xf32>
    %166 = tpu.matmul %157, %165, %cst_105 {dimension_numbers = #tpu.dot_dimension_numbers<[1], [0], [0], [1], [0, 0, 1, 1], [], []>} : vector<32x256xbf16>, vector<256x256xbf16>, vector<32x256xf32> -> vector<32x256xf32>
    %c13 = arith.constant 13 : index
    %c0_106 = arith.constant 0 : index
    %c0_107 = arith.constant 0 : index
    %167 = vector.load %arg2[%c13, %c0_106, %c0_107] : memref<15x256x256xbf16, #tpu.memory_space<vmem>>, vector<1x256x256xbf16>
    %168 = vector.shape_cast %167 : vector<1x256x256xbf16> to vector<256x256xbf16>
    %cst_108 = arith.constant dense<0.000000e+00> : vector<32x256xf32>
    %169 = tpu.matmul %151, %168, %cst_108 {dimension_numbers = #tpu.dot_dimension_numbers<[1], [0], [0], [1], [0, 0, 1, 1], [], []>} : vector<32x256xbf16>, vector<256x256xbf16>, vector<32x256xf32> -> vector<32x256xf32>
    %170 = arith.addf %166, %169 : vector<32x256xf32>
    %c14 = arith.constant 14 : index
    %c0_109 = arith.constant 0 : index
    %c0_110 = arith.constant 0 : index
    %171 = vector.load %arg2[%c14, %c0_109, %c0_110] : memref<15x256x256xbf16, #tpu.memory_space<vmem>>, vector<1x256x256xbf16>
    %172 = vector.shape_cast %171 : vector<1x256x256xbf16> to vector<256x256xbf16>
    %cst_111 = arith.constant dense<0.000000e+00> : vector<32x256xf32>
    %173 = tpu.matmul %163, %172, %cst_111 {dimension_numbers = #tpu.dot_dimension_numbers<[1], [0], [0], [1], [0, 0, 1, 1], [], []>} : vector<32x256xbf16>, vector<256x256xbf16>, vector<32x256xf32> -> vector<32x256xf32>
    %174 = arith.addf %170, %173 : vector<32x256xf32>
    %c4_112 = arith.constant 4 : index
    %c0_113 = arith.constant 0 : index
    %c0_114 = arith.constant 0 : index
    %175 = vector.load %arg3[%c4_112, %c0_113, %c0_114] : memref<5x1x256xf32, #tpu.memory_space<vmem>>, vector<1x1x256xf32>
    %176 = vector.shape_cast %175 : vector<1x1x256xf32> to vector<1x256xf32>
    %177 = vector.broadcast %176 : vector<1x256xf32> to vector<32x256xf32>
    %178 = arith.addf %174, %177 : vector<32x256xf32>
    %c0_115 = arith.constant 0 : index
    %c0_116 = arith.constant 0 : index
    %179 = vector.load %arg6[%c0_115, %c0_116] : memref<32x256xf32, #tpu.memory_space<vmem>>, vector<32x256xf32>
    %180 = arith.addf %178, %179 : vector<32x256xf32>
    %cst_117 = arith.constant 0.000000e+00 : f32
    %181 = vector.broadcast %cst_117 : f32 to vector<32x256xf32>
    %182 = arith.maximumf %180, %181 : vector<32x256xf32>
    %c0_118 = arith.constant 0 : index
    %c0_119 = arith.constant 0 : index
    %183 = vector.load %arg4[%c0_118, %c0_119] : memref<32x256xf32, #tpu.memory_space<vmem>>, vector<32x256xf32>
    tpu.vector_store %arg4[%c0_118, %c0_119], %182 {strides = array<i32>} : memref<32x256xf32, #tpu.memory_space<vmem>>, vector<32x256xf32>,
    return
  }
  func.func @transform_0(%arg0: i32) -> (i32, i32) {
    %c0_i32 = arith.constant 0 : i32
    %c0_i32_0 = arith.constant 0 : i32
    return %arg0, %c0_i32 : i32, i32
  }
  func.func @transform_1(%arg0: i32) -> (i32, i32, i32) {
    %c0_i32 = arith.constant 0 : i32
    %c0_i32_0 = arith.constant 0 : i32
    %c0_i32_1 = arith.constant 0 : i32
    %c0_i32_2 = arith.constant 0 : i32
    return %c0_i32, %c0_i32_0, %c0_i32_1 : i32, i32, i32
  }
  func.func @transform_2(%arg0: i32) -> (i32, i32, i32) {
    %c0_i32 = arith.constant 0 : i32
    %c0_i32_0 = arith.constant 0 : i32
    %c0_i32_1 = arith.constant 0 : i32
    %c0_i32_2 = arith.constant 0 : i32
    return %c0_i32, %c0_i32_0, %c0_i32_1 : i32, i32, i32
  }
  func.func @transform_3(%arg0: i32) -> (i32, i32) {
    %c0_i32 = arith.constant 0 : i32
    %c0_i32_0 = arith.constant 0 : i32
    return %arg0, %c0_i32 : i32, i32
  }
}

</mosaic_0001>

<llo_original>
// kernel: resnet1layer_forward.1
$region0: #{resnet1layer_forward.1}
  #allocation0 [shape = 'u32[]', space=smem, size = 0x4, offset = 0x4, fixed_abs, tag = 'smem constant byte address 0x4 - core index']
  #allocation1 [shape = 'u32[72,128]{1,0:T(1,128)}', space=vmem, size = 0x9000, scoped, tag = 'internal scratch']
  #allocation2 [shape = 'f32[48,256]{1,0:T(8,128)}', space=vmem, size = 0xc000, scoped, tag = 'scratch operand']
  #allocation3 [shape = 'f32[32,256]{1,0:T(8,128)}', space=vmem, size = 0x8000, scoped, tag = 'scratch operand']
  %s0 = inlined_call_operand.vmem [shape: f32[32,256], index: 0, kind: input, shape index: {}]
  %s1 = inlined_call_operand.hbm [shape: bf16[15,256,256], index: 1, kind: input, shape index: {}]
  %s2 = inlined_call_operand.hbm [shape: f32[5,1,256], index: 2, kind: input, shape index: {}]
  %s3 = inlined_call_operand.vmem [shape: f32[32,256], index: 3, kind: output, shape index: {}]
  %s4 = sld [smem:[#allocation0]]
  $region30: #{resnet1layer_forward.1} parent=0
    _
  %s6 = ssub.s32 1, %s4
  %s7 = scalar_select 0, %s6, %s4
  $region1: #{resnet1layer_forward.1} parent=0
    #allocation4 [shape = 'u8[1966080]{0}', space=vmem, size = 0x1e0000, scoped, tag = 'input window, operand 1, single buffered']
    #allocation5 [shape = 's32[1]{0}', space=sflag, size = 0x4, scoped, tag = 'scoped memory for resnet1layer_forward.1']
    #allocation6 [shape = 'u8[5120]{0}', space=vmem, size = 0x1400, scoped, tag = 'input window, operand 2, single buffered']
    #allocation7 [shape = 's32[1]{0}', space=sflag, size = 0x4, scoped, tag = 'scoped memory for resnet1layer_forward.1']
    %8 = vsyncpa [#allocation5], 0
    %9 = vsyncpa [#allocation7], 0
    // Predicated region
    $region2: #{resnet1layer_forward.1} parent=1 // pred_check
      _
    $region3: #{resnet1layer_forward.1} parent=1 // pred_check_branch
      %11 = sbr.rel (0) target = $region5
    $region4: #{resnet1layer_forward.1} parent=1 // pred_region
      _
    $region5: #{resnet1layer_forward.1} parent=1 // pred_fallthru
      _
    // Predicated region
    $region6: #{resnet1layer_forward.1} parent=1 // pred_check
      _
    $region7: #{resnet1layer_forward.1} parent=1 // pred_check_branch
      %13 = sbr.rel (0) target = $region9
    $region8: #{resnet1layer_forward.1} parent=1 // pred_region
      %15 = vsyncadd [#allocation5], 0
      %s16 = sshll.u32 %s1, 4
      %s17 = int_to_ptr.hbm [resolvable:$true] %s16
      %s18 = sshll.u32 [#allocation4], 4
      %s19 = int_to_ptr.vmem [resolvable:$true] %s18
      %24 = dma.hbm_to_vmem [thread:$0]  %s17, 61440, %s19, [#allocation5], 128, 128, 8
    $region9: #{resnet1layer_forward.1} parent=1 // pred_fallthru
      _
    // Predicated region
    $region10: #{resnet1layer_forward.1} parent=1 // pred_check
      _
    $region11: #{resnet1layer_forward.1} parent=1 // pred_check_branch
      %26 = sbr.rel (0) target = $region13
    $region12: #{resnet1layer_forward.1} parent=1 // pred_region
      %28 = vsyncadd [#allocation7], 0
      %s29 = sshll.u32 %s2, 4
      %s30 = int_to_ptr.hbm [resolvable:$true] %s29
      %s31 = sshll.u32 [#allocation6], 4
      %s32 = int_to_ptr.vmem [resolvable:$true] %s31
      %37 = dma.hbm_to_vmem [thread:$0]  %s30, 160, %s32, [#allocation7], 32, 32, 2
    $region13: #{resnet1layer_forward.1} parent=1 // pred_fallthru
      _
    // Predicated region
    $region14: #{resnet1layer_forward.1} parent=1 // pred_check
      _
    $region15: #{resnet1layer_forward.1} parent=1 // pred_check_branch
      %39 = sbr.rel (0) target = $region17
    $region16: #{resnet1layer_forward.1} parent=1 // pred_region
      %41 = dma.done [#allocation5], 61440
    $region17: #{resnet1layer_forward.1} parent=1 // pred_fallthru
      _
    // Predicated region
    $region18: #{resnet1layer_forward.1} parent=1 // pred_check
      _
    $region19: #{resnet1layer_forward.1} parent=1 // pred_check_branch
      %43 = sbr.rel (0) target = $region21
    $region20: #{resnet1layer_forward.1} parent=1 // pred_region
      %45 = dma.done [#allocation7], 160
    $region21: #{resnet1layer_forward.1} parent=1 // pred_fallthru
      _
    %v46 = vlaneseq
    %v47 = vshrl.u32 %v46, 7
    %v48 = vadd.s32 %v47, 8
    %v49 = vadd.s32 %v47, 16
    %v50 = vadd.s32 %v47, 24
    %vm51 = vcmp.lt.s32.totalorder %v47, 0
    %v52 = vsub.s32 0, %v47
    %v53 = vsel %vm51, %v52, %v47
    %v54 = vshrl.u32 %v53, 4
    %v55 = vand.u32 %v53, 15
    %v56 = vsub.s32 0, %v55
    %v57 = vsel %vm51, %v56, %v55
    %vm58 = vcmp.lt.s32.totalorder %v48, 0
    %v59 = vsub.s32 0, %v48
    %v60 = vsel %vm58, %v59, %v48
    %v61 = vshrl.u32 %v60, 4
    %v62 = vand.u32 %v60, 15
    %v63 = vsub.s32 0, %v62
    %v64 = vsel %vm58, %v63, %v62
    %vm65 = vcmp.lt.s32.totalorder %v49, 0
    %v66 = vsub.s32 0, %v49
    %v67 = vsel %vm65, %v66, %v49
    %v68 = vshrl.u32 %v67, 4
    %v69 = vand.u32 %v67, 15
    %v70 = vsub.s32 0, %v69
    %v71 = vsel %vm65, %v70, %v69
    %vm72 = vcmp.lt.s32.totalorder %v50, 0
    %v73 = vsub.s32 0, %v50
    %v74 = vsel %vm72, %v73, %v50
    %v75 = vshrl.u32 %v74, 4
    %v76 = vand.u32 %v74, 15
    %v77 = vsub.s32 0, %v76
    %v78 = vsel %vm72, %v77, %v76
    %vm79 = vcmp.ne.s32.totalorder %v57, 0
    %vm80 = vcmp.ne.s32.totalorder %v64, 0
    %vm81 = vcmp.ne.s32.totalorder %v71, 0
    %vm82 = vcmp.ne.s32.totalorder %v78, 0
    %vm83 = vcmp.lt.s32.totalorder %v57, 0
    %vm84 = vcmp.lt.s32.totalorder %v64, 0
    %vm85 = vcmp.lt.s32.totalorder %v71, 0
    %vm86 = vcmp.lt.s32.totalorder %v78, 0
    %vm87 = vmand %vm83, %vm79
    %vm88 = vmand %vm84, %vm80
    %vm89 = vmand %vm85, %vm81
    %vm90 = vmand %vm86, %vm82
    %v91 = vadd.s32 %v57, 16
    %v92 = vadd.s32 %v64, 16
    %v93 = vadd.s32 %v71, 16
    %v94 = vadd.s32 %v78, 16
    %v95 = vsel %vm87, %v91, %v57
    %v96 = vsel %vm88, %v92, %v64
    %v97 = vsel %vm89, %v93, %v71
    %v98 = vsel %vm90, %v94, %v78
    %vm99 = vcmp.ne.s32.totalorder %v95, 0
    %vm100 = vcmp.ne.s32.totalorder %v96, 0
    %vm101 = vcmp.ne.s32.totalorder %v97, 0
    %vm102 = vcmp.ne.s32.totalorder %v98, 0
    %vm103 = vcmp.ne.s32.totalorder %v95, 15
    %vm104 = vcmp.ne.s32.totalorder %v96, 15
    %vm105 = vcmp.ne.s32.totalorder %v97, 15
    %vm106 = vcmp.ne.s32.totalorder %v98, 15
    %v107 = vld [vmem:[%s0] sm:$0xff]
    %v108 = vld [vmem:[%s0 + $0x8] sm:$0xff]
    %v109 = vld [vmem:[%s0 + $0x10] sm:$0xff]
    %v110 = vld [vmem:[%s0 + $0x18] sm:$0xff]
    %v111 = vld [vmem:[%s0 + $0x20] sm:$0xff]
    %v112 = vld [vmem:[%s0 + $0x28] sm:$0xff]
    %v113 = vld [vmem:[%s0 + $0x30] sm:$0xff]
    %v114 = vld [vmem:[%s0 + $0x38] sm:$0xff]
    %115 = vst [vmem:[#allocation2 + $0x10] sm:$0xff] %v107
    %116 = vst [vmem:[#allocation2 + $0x18] sm:$0xff] %v108
    %117 = vst [vmem:[#allocation2 + $0x20] sm:$0xff] %v109
    %118 = vst [vmem:[#allocation2 + $0x28] sm:$0xff] %v110
    %119 = vst [vmem:[#allocation2 + $0x30] sm:$0xff] %v111
    %120 = vst [vmem:[#allocation2 + $0x38] sm:$0xff] %v112
    %121 = vst [vmem:[#allocation2 + $0x40] sm:$0xff] %v113
    %122 = vst [vmem:[#allocation2 + $0x48] sm:$0xff] %v114
    %v123 = vpack.c.bf16 %v109, %v107
    %v124 = vpack.c.bf16 %v110, %v108
    %v125 = vpack.c.bf16 %v113, %v111
    %v126 = vpack.c.bf16 %v114, %v112
    %v127 = vld [vmem:[#allocation2] sm:$0x80]
    %v128 = vld [vmem:[#allocation2 + $0x8] sm:$0x80]
    %v129 = vld [vmem:[#allocation2 + $0x10] sm:$0xff]
    %v130 = vld [vmem:[#allocation2 + $0x18] sm:$0xff]
    %v131 = vld [vmem:[#allocation2 + $0x20] sm:$0xff]
    %v132 = vld [vmem:[#allocation2 + $0x28] sm:$0xff]
    %v133 = vld [vmem:[#allocation2 + $0x30] sm:$0xff]
    %v134 = vld [vmem:[#allocation2 + $0x38] sm:$0xff]
    %v135 = vld [vmem:[#allocation2 + $0x40] sm:$0x7f]
    %v136 = vld [vmem:[#allocation2 + $0x48] sm:$0x7f]
    %v137 = vsel %vm99, 1, 0
    %v138 = vsel %vm100, 1, 0
    %v139 = vsel %vm101, 1, 0
    %v140 = vsel %vm102, 1, 0
    %vm141 = vcmp.eq.s32.totalorder %v137, 1
    %vm142 = vcmp.eq.s32.totalorder %v138, 1
    %vm143 = vcmp.eq.s32.totalorder %v139, 1
    %vm144 = vcmp.eq.s32.totalorder %v140, 1
    %vm155 = vcmask 1040384
    %v156 = vrot.slane %v127, 7
    %v157 = vrot.slane %v129, 7
    %v158 = vsel %vm155, %v156, %v157
    %v159 = vrot.slane %v128, 7
    %v160 = vrot.slane %v130, 7
    %v161 = vsel %vm155, %v159, %v160
    %v162 = vrot.slane %v131, 7
    %v163 = vsel %vm155, %v157, %v162
    %v164 = vrot.slane %v132, 7
    %v165 = vsel %vm155, %v160, %v164
    %v166 = vrot.slane %v133, 7
    %v167 = vsel %vm155, %v162, %v166
    %v168 = vrot.slane %v134, 7
    %v169 = vsel %vm155, %v164, %v168
    %v170 = vrot.slane %v135, 7
    %v171 = vsel %vm155, %v166, %v170
    %v172 = vrot.slane %v136, 7
    %v173 = vsel %vm155, %v168, %v172
    %v182 = vsel %vm141, %v158, 0.0
    %v183 = vsel %vm141, %v161, 0.0
    %v184 = vsel %vm142, %v163, 0.0
    %v185 = vsel %vm142, %v165, 0.0
    %v186 = vsel %vm143, %v167, 0.0
    %v187 = vsel %vm143, %v169, 0.0
    %v188 = vsel %vm144, %v171, 0.0
    %v189 = vsel %vm144, %v173, 0.0
    %v190 = vpack.c.bf16 %v184, %v182
    %v191 = vpack.c.bf16 %v185, %v183
    %v192 = vpack.c.bf16 %v188, %v186
    %v193 = vpack.c.bf16 %v189, %v187
    %v194 = vld [vmem:[#allocation2 + $0x10] sm:$0xfe]
    %v195 = vld [vmem:[#allocation2 + $0x18] sm:$0xfe]
    %v196 = vld [vmem:[#allocation2 + $0x20] sm:$0xff]
    %v197 = vld [vmem:[#allocation2 + $0x28] sm:$0xff]
    %v198 = vld [vmem:[#allocation2 + $0x30] sm:$0xff]
    %v199 = vld [vmem:[#allocation2 + $0x38] sm:$0xff]
    %v200 = vld [vmem:[#allocation2 + $0x40] sm:$0xff]
    %v201 = vld [vmem:[#allocation2 + $0x48] sm:$0xff]
    %v202 = vld [vmem:[#allocation2 + $0x50] sm:$0x1]
    %v203 = vld [vmem:[#allocation2 + $0x58] sm:$0x1]
    %v204 = vsel %vm103, 1, 0
    %v205 = vsel %vm104, 1, 0
    %v206 = vsel %vm105, 1, 0
    %v207 = vsel %vm106, 1, 0
    %vm208 = vcmp.eq.s32.totalorder %v204, 1
    %vm209 = vcmp.eq.s32.totalorder %v205, 1
    %vm210 = vcmp.eq.s32.totalorder %v206, 1
    %vm211 = vcmp.eq.s32.totalorder %v207, 1
    %vm222 = vcmask 1046528
    %v223 = vrot.slane %v194, 1
    %v224 = vrot.slane %v196, 1
    %v225 = vsel %vm222, %v223, %v224
    %v226 = vrot.slane %v195, 1
    %v227 = vrot.slane %v197, 1
    %v228 = vsel %vm222, %v226, %v227
    %v229 = vrot.slane %v198, 1
    %v230 = vsel %vm222, %v224, %v229
    %v231 = vrot.slane %v199, 1
    %v232 = vsel %vm222, %v227, %v231
    %v233 = vrot.slane %v200, 1
    %v234 = vsel %vm222, %v229, %v233
    %v235 = vrot.slane %v201, 1
    %v236 = vsel %vm222, %v231, %v235
    %v237 = vrot.slane %v202, 1
    %v238 = vsel %vm222, %v233, %v237
    %v239 = vrot.slane %v203, 1
    %v240 = vsel %vm222, %v235, %v239
    %v249 = vsel %vm208, %v225, 0.0
    %v250 = vsel %vm208, %v228, 0.0
    %v251 = vsel %vm209, %v230, 0.0
    %v252 = vsel %vm209, %v232, 0.0
    %v253 = vsel %vm210, %v234, 0.0
    %v254 = vsel %vm210, %v236, 0.0
    %v255 = vsel %vm211, %v238, 0.0
    %v256 = vsel %vm211, %v240, 0.0
    %v257 = vpack.c.bf16 %v251, %v249
    %v258 = vpack.c.bf16 %v252, %v250
    %v259 = vpack.c.bf16 %v255, %v253
    %v260 = vpack.c.bf16 %v256, %v254
    %v261 = vld [vmem:[#allocation4] sm:$0xff]
    %v262 = vld [vmem:[#allocation4 + $0x8] sm:$0xff]
    %v263 = vld [vmem:[#allocation4 + $0x10] sm:$0xff]
    %v264 = vld [vmem:[#allocation4 + $0x18] sm:$0xff]
    %v265 = vld [vmem:[#allocation4 + $0x20] sm:$0xff]
    %v266 = vld [vmem:[#allocation4 + $0x28] sm:$0xff]
    %v267 = vld [vmem:[#allocation4 + $0x30] sm:$0xff]
    %v268 = vld [vmem:[#allocation4 + $0x38] sm:$0xff]
    %v269 = vld [vmem:[#allocation4 + $0x40] sm:$0xff]
    %v270 = vld [vmem:[#allocation4 + $0x48] sm:$0xff]
    %v271 = vld [vmem:[#allocation4 + $0x50] sm:$0xff]
    %v272 = vld [vmem:[#allocation4 + $0x58] sm:$0xff]
    %v273 = vld [vmem:[#allocation4 + $0x60] sm:$0xff]
    %v274 = vld [vmem:[#allocation4 + $0x68] sm:$0xff]
    %v275 = vld [vmem:[#allocation4 + $0x70] sm:$0xff]
    %v276 = vld [vmem:[#allocation4 + $0x78] sm:$0xff]
    %v277 = vld [vmem:[#allocation4 + $0x80] sm:$0xff]
    %v278 = vld [vmem:[#allocation4 + $0x88] sm:$0xff]
    %v279 = vld [vmem:[#allocation4 + $0x90] sm:$0xff]
    %v280 = vld [vmem:[#allocation4 + $0x98] sm:$0xff]
    %v281 = vld [vmem:[#allocation4 + $0xa0] sm:$0xff]
    %v282 = vld [vmem:[#allocation4 + $0xa8] sm:$0xff]
    %v283 = vld [vmem:[#allocation4 + $0xb0] sm:$0xff]
    %v284 = vld [vmem:[#allocation4 + $0xb8] sm:$0xff]
    %v285 = vld [vmem:[#allocation4 + $0xc0] sm:$0xff]
    %v286 = vld [vmem:[#allocation4 + $0xc8] sm:$0xff]
    %v287 = vld [vmem:[#allocation4 + $0xd0] sm:$0xff]
    %v288 = vld [vmem:[#allocation4 + $0xd8] sm:$0xff]
    %v289 = vld [vmem:[#allocation4 + $0xe0] sm:$0xff]
    %v290 = vld [vmem:[#allocation4 + $0xe8] sm:$0xff]
    %v291 = vld [vmem:[#allocation4 + $0xf0] sm:$0xff]
    %v292 = vld [vmem:[#allocation4 + $0xf8] sm:$0xff]
    %s293 = scalar_lea.vmem [#allocation4], 256
    %v294 = vld [vmem:[%s293] sm:$0xff]
    %v295 = vld [vmem:[%s293 + $0x8] sm:$0xff]
    %v296 = vld [vmem:[%s293 + $0x10] sm:$0xff]
    %v297 = vld [vmem:[%s293 + $0x18] sm:$0xff]
    %v298 = vld [vmem:[%s293 + $0x20] sm:$0xff]
    %v299 = vld [vmem:[%s293 + $0x28] sm:$0xff]
    %v300 = vld [vmem:[%s293 + $0x30] sm:$0xff]
    %v301 = vld [vmem:[%s293 + $0x38] sm:$0xff]
    %v302 = vld [vmem:[%s293 + $0x40] sm:$0xff]
    %v303 = vld [vmem:[%s293 + $0x48] sm:$0xff]
    %v304 = vld [vmem:[%s293 + $0x50] sm:$0xff]
    %v305 = vld [vmem:[%s293 + $0x58] sm:$0xff]
    %v306 = vld [vmem:[%s293 + $0x60] sm:$0xff]
    %v307 = vld [vmem:[%s293 + $0x68] sm:$0xff]
    %v308 = vld [vmem:[%s293 + $0x70] sm:$0xff]
    %v309 = vld [vmem:[%s293 + $0x78] sm:$0xff]
    %v310 = vld [vmem:[%s293 + $0x80] sm:$0xff]
    %v311 = vld [vmem:[%s293 + $0x88] sm:$0xff]
    %v312 = vld [vmem:[%s293 + $0x90] sm:$0xff]
    %v313 = vld [vmem:[%s293 + $0x98] sm:$0xff]
    %v314 = vld [vmem:[%s293 + $0xa0] sm:$0xff]
    %v315 = vld [vmem:[%s293 + $0xa8] sm:$0xff]
    %v316 = vld [vmem:[%s293 + $0xb0] sm:$0xff]
    %v317 = vld [vmem:[%s293 + $0xb8] sm:$0xff]
    %v318 = vld [vmem:[%s293 + $0xc0] sm:$0xff]
    %v319 = vld [vmem:[%s293 + $0xc8] sm:$0xff]
    %v320 = vld [vmem:[%s293 + $0xd0] sm:$0xff]
    %v321 = vld [vmem:[%s293 + $0xd8] sm:$0xff]
    %v322 = vld [vmem:[%s293 + $0xe0] sm:$0xff]
    %v323 = vld [vmem:[%s293 + $0xe8] sm:$0xff]
    %v324 = vld [vmem:[%s293 + $0xf0] sm:$0xff]
    %v325 = vld [vmem:[%s293 + $0xf8] sm:$0xff]
    %v358 = vunpack.c.l.b16 %v294
    %v359 = vunpack.c.h.b16 %v294
    %v360 = vunpack.c.l.b16 %v295
    %v361 = vunpack.c.h.b16 %v295
    %v362 = vunpack.c.l.b16 %v296
    %v363 = vunpack.c.h.b16 %v296
    %v364 = vunpack.c.l.b16 %v297
    %v365 = vunpack.c.h.b16 %v297
    %v366 = vunpack.c.l.b16 %v298
    %v367 = vunpack.c.h.b16 %v298
    %v368 = vunpack.c.l.b16 %v299
    %v369 = vunpack.c.h.b16 %v299
    %v370 = vunpack.c.l.b16 %v300
    %v371 = vunpack.c.h.b16 %v300
    %v372 = vunpack.c.l.b16 %v301
    %v373 = vunpack.c.h.b16 %v301
    %v374 = vunpack.c.l.b16 %v302
    %v375 = vunpack.c.h.b16 %v302
    %v376 = vunpack.c.l.b16 %v303
    %v377 = vunpack.c.h.b16 %v303
    %v378 = vunpack.c.l.b16 %v304
    %v379 = vunpack.c.h.b16 %v304
    %v380 = vunpack.c.l.b16 %v305
    %v381 = vunpack.c.h.b16 %v305
    %v382 = vunpack.c.l.b16 %v306
    %v383 = vunpack.c.h.b16 %v306
    %v384 = vunpack.c.l.b16 %v307
    %v385 = vunpack.c.h.b16 %v307
    %v386 = vunpack.c.l.b16 %v308
    %v387 = vunpack.c.h.b16 %v308
    %v388 = vunpack.c.l.b16 %v309
    %v389 = vunpack.c.h.b16 %v309
    %v390 = vunpack.c.l.b16 %v310
    %v391 = vunpack.c.h.b16 %v310
    %v392 = vunpack.c.l.b16 %v311
    %v393 = vunpack.c.h.b16 %v311
    %v394 = vunpack.c.l.b16 %v312
    %v395 = vunpack.c.h.b16 %v312
    %v396 = vunpack.c.l.b16 %v313
    %v397 = vunpack.c.h.b16 %v313
    %v398 = vunpack.c.l.b16 %v314
    %v399 = vunpack.c.h.b16 %v314
    %v400 = vunpack.c.l.b16 %v315
    %v401 = vunpack.c.h.b16 %v315
    %v402 = vunpack.c.l.b16 %v316
    %v403 = vunpack.c.h.b16 %v316
    %v404 = vunpack.c.l.b16 %v317
    %v405 = vunpack.c.h.b16 %v317
    %v406 = vunpack.c.l.b16 %v318
    %v407 = vunpack.c.h.b16 %v318
    %v408 = vunpack.c.l.b16 %v319
    %v409 = vunpack.c.h.b16 %v319
    %v410 = vunpack.c.l.b16 %v320
    %v411 = vunpack.c.h.b16 %v320
    %v412 = vunpack.c.l.b16 %v321
    %v413 = vunpack.c.h.b16 %v321
    %v414 = vunpack.c.l.b16 %v322
    %v415 = vunpack.c.h.b16 %v322
    %v416 = vunpack.c.l.b16 %v323
    %v417 = vunpack.c.h.b16 %v323
    %v418 = vunpack.c.l.b16 %v324
    %v419 = vunpack.c.h.b16 %v324
    %v420 = vunpack.c.l.b16 %v325
    %v421 = vunpack.c.h.b16 %v325
    %v422 = vpack.c.b16 %v360, %v358
    %v423 = vpack.c.b16 %v361, %v359
    %v424 = vpack.c.b16 %v364, %v362
    %v425 = vpack.c.b16 %v365, %v363
    %v426 = vpack.c.b16 %v368, %v366
    %v427 = vpack.c.b16 %v369, %v367
    %v428 = vpack.c.b16 %v372, %v370
    %v429 = vpack.c.b16 %v373, %v371
    %v430 = vpack.c.b16 %v376, %v374
    %v431 = vpack.c.b16 %v377, %v375
    %v432 = vpack.c.b16 %v380, %v378
    %v433 = vpack.c.b16 %v381, %v379
    %v434 = vpack.c.b16 %v384, %v382
    %v435 = vpack.c.b16 %v385, %v383
    %v436 = vpack.c.b16 %v388, %v386
    %v437 = vpack.c.b16 %v389, %v387
    %v438 = vpack.c.b16 %v392, %v390
    %v439 = vpack.c.b16 %v393, %v391
    %v440 = vpack.c.b16 %v396, %v394
    %v441 = vpack.c.b16 %v397, %v395
    %v442 = vpack.c.b16 %v400, %v398
    %v443 = vpack.c.b16 %v401, %v399
    %v444 = vpack.c.b16 %v404, %v402
    %v445 = vpack.c.b16 %v405, %v403
    %v446 = vpack.c.b16 %v408, %v406
    %v447 = vpack.c.b16 %v409, %v407
    %v448 = vpack.c.b16 %v412, %v410
    %v449 = vpack.c.b16 %v413, %v411
    %v450 = vpack.c.b16 %v416, %v414
    %v451 = vpack.c.b16 %v417, %v415
    %v452 = vpack.c.b16 %v420, %v418
    %v453 = vpack.c.b16 %v421, %v419
    %486 = vmatpush.bf16.msra.mxu0 %v436
    %487 = vmatpush.bf16.msra.mxu0 %v434
    %488 = vmatpush.bf16.msra.mxu0 %v432
    %489 = vmatpush.bf16.msra.mxu0 %v430
    %490 = vmatpush.bf16.msra.mxu0 %v428
    %491 = vmatpush.bf16.msra.mxu0 %v426
    %492 = vmatpush.bf16.msra.mxu0 %v424
    %493 = vmatpush.bf16.msra.mxu0 %v422
    %494 = vmatmul.bf16.gmra.mxu0 %v123
    %v495 = vpop.f32.mrf.mxu0
    %v496 = vadd.f32 0.0, %v495
    %v497 = vpop.f32.mrf.mxu0
    %v498 = vadd.f32 0.0, %v497
    %499 = vmatmul.bf16.gmra.mxu0 %v125
    %v500 = vpop.f32.mrf.mxu0
    %v501 = vadd.f32 0.0, %v500
    %v502 = vpop.f32.mrf.mxu0
    %v503 = vadd.f32 0.0, %v502
    %504 = vdwg.mxu0
    %505 = vmatpush.bf16.msra.mxu0 %v452
    %506 = vmatpush.bf16.msra.mxu0 %v450
    %507 = vmatpush.bf16.msra.mxu0 %v448
    %508 = vmatpush.bf16.msra.mxu0 %v446
    %509 = vmatpush.bf16.msra.mxu0 %v444
    %510 = vmatpush.bf16.msra.mxu0 %v442
    %511 = vmatpush.bf16.msra.mxu0 %v440
    %512 = vmatpush.bf16.msra.mxu0 %v438
    %513 = vmatmul.bf16.gmra.mxu0 %v124
    %v514 = vpop.f32.mrf.mxu0
    %v515 = vadd.f32 %v496, %v514
    %v516 = vpop.f32.mrf.mxu0
    %v517 = vadd.f32 %v498, %v516
    %518 = vmatmul.bf16.gmra.mxu0 %v126
    %v519 = vpop.f32.mrf.mxu0
    %v520 = vadd.f32 %v501, %v519
    %v521 = vpop.f32.mrf.mxu0
    %v522 = vadd.f32 %v503, %v521
    %523 = vdwg.mxu0
    %524 = vmatpush.bf16.msra.mxu0 %v437
    %525 = vmatpush.bf16.msra.mxu0 %v435
    %526 = vmatpush.bf16.msra.mxu0 %v433
    %527 = vmatpush.bf16.msra.mxu0 %v431
    %528 = vmatpush.bf16.msra.mxu0 %v429
    %529 = vmatpush.bf16.msra.mxu0 %v427
    %530 = vmatpush.bf16.msra.mxu0 %v425
    %531 = vmatpush.bf16.msra.mxu0 %v423
    %532 = vmatmul.bf16.gmra.mxu0 %v123
    %v533 = vpop.f32.mrf.mxu0
    %v534 = vadd.f32 0.0, %v533
    %v535 = vpop.f32.mrf.mxu0
    %v536 = vadd.f32 0.0, %v535
    %537 = vmatmul.bf16.gmra.mxu0 %v125
    %v538 = vpop.f32.mrf.mxu0
    %v539 = vadd.f32 0.0, %v538
    %v540 = vpop.f32.mrf.mxu0
    %v541 = vadd.f32 0.0, %v540
    %542 = vdwg.mxu0
    %543 = vmatpush.bf16.msra.mxu0 %v453
    %544 = vmatpush.bf16.msra.mxu0 %v451
    %545 = vmatpush.bf16.msra.mxu0 %v449
    %546 = vmatpush.bf16.msra.mxu0 %v447
    %547 = vmatpush.bf16.msra.mxu0 %v445
    %548 = vmatpush.bf16.msra.mxu0 %v443
    %549 = vmatpush.bf16.msra.mxu0 %v441
    %550 = vmatpush.bf16.msra.mxu0 %v439
    %551 = vmatmul.bf16.gmra.mxu0 %v124
    %v552 = vpop.f32.mrf.mxu0
    %v553 = vadd.f32 %v534, %v552
    %v554 = vpop.f32.mrf.mxu0
    %v555 = vadd.f32 %v536, %v554
    %556 = vmatmul.bf16.gmra.mxu0 %v126
    %v557 = vpop.f32.mrf.mxu0
    %v558 = vadd.f32 %v539, %v557
    %v559 = vpop.f32.mrf.mxu0
    %v560 = vadd.f32 %v541, %v559
    %561 = vdwg.mxu0
    %v594 = vunpack.c.l.b16 %v261
    %v595 = vunpack.c.h.b16 %v261
    %v596 = vunpack.c.l.b16 %v262
    %v597 = vunpack.c.h.b16 %v262
    %v598 = vunpack.c.l.b16 %v263
    %v599 = vunpack.c.h.b16 %v263
    %v600 = vunpack.c.l.b16 %v264
    %v601 = vunpack.c.h.b16 %v264
    %v602 = vunpack.c.l.b16 %v265
    %v603 = vunpack.c.h.b16 %v265
    %v604 = vunpack.c.l.b16 %v266
    %v605 = vunpack.c.h.b16 %v266
    %v606 = vunpack.c.l.b16 %v267
    %v607 = vunpack.c.h.b16 %v267
    %v608 = vunpack.c.l.b16 %v268
    %v609 = vunpack.c.h.b16 %v268
    %v610 = vunpack.c.l.b16 %v269
    %v611 = vunpack.c.h.b16 %v269
    %v612 = vunpack.c.l.b16 %v270
    %v613 = vunpack.c.h.b16 %v270
    %v614 = vunpack.c.l.b16 %v271
    %v615 = vunpack.c.h.b16 %v271
    %v616 = vunpack.c.l.b16 %v272
    %v617 = vunpack.c.h.b16 %v272
    %v618 = vunpack.c.l.b16 %v273
    %v619 = vunpack.c.h.b16 %v273
    %v620 = vunpack.c.l.b16 %v274
    %v621 = vunpack.c.h.b16 %v274
    %v622 = vunpack.c.l.b16 %v275
    %v623 = vunpack.c.h.b16 %v275
    %v624 = vunpack.c.l.b16 %v276
    %v625 = vunpack.c.h.b16 %v276
    %v626 = vunpack.c.l.b16 %v277
    %v627 = vunpack.c.h.b16 %v277
    %v628 = vunpack.c.l.b16 %v278
    %v629 = vunpack.c.h.b16 %v278
    %v630 = vunpack.c.l.b16 %v279
    %v631 = vunpack.c.h.b16 %v279
    %v632 = vunpack.c.l.b16 %v280
    %v633 = vunpack.c.h.b16 %v280
    %v634 = vunpack.c.l.b16 %v281
    %v635 = vunpack.c.h.b16 %v281
    %v636 = vunpack.c.l.b16 %v282
    %v637 = vunpack.c.h.b16 %v282
    %v638 = vunpack.c.l.b16 %v283
    %v639 = vunpack.c.h.b16 %v283
    %v640 = vunpack.c.l.b16 %v284
    %v641 = vunpack.c.h.b16 %v284
    %v642 = vunpack.c.l.b16 %v285
    %v643 = vunpack.c.h.b16 %v285
    %v644 = vunpack.c.l.b16 %v286
    %v645 = vunpack.c.h.b16 %v286
    %v646 = vunpack.c.l.b16 %v287
    %v647 = vunpack.c.h.b16 %v287
    %v648 = vunpack.c.l.b16 %v288
    %v649 = vunpack.c.h.b16 %v288
    %v650 = vunpack.c.l.b16 %v289
    %v651 = vunpack.c.h.b16 %v289
    %v652 = vunpack.c.l.b16 %v290
    %v653 = vunpack.c.h.b16 %v290
    %v654 = vunpack.c.l.b16 %v291
    %v655 = vunpack.c.h.b16 %v291
    %v656 = vunpack.c.l.b16 %v292
    %v657 = vunpack.c.h.b16 %v292
    %v658 = vpack.c.b16 %v596, %v594
    %v659 = vpack.c.b16 %v597, %v595
    %v660 = vpack.c.b16 %v600, %v598
    %v661 = vpack.c.b16 %v601, %v599
    %v662 = vpack.c.b16 %v604, %v602
    %v663 = vpack.c.b16 %v605, %v603
    %v664 = vpack.c.b16 %v608, %v606
    %v665 = vpack.c.b16 %v609, %v607
    %v666 = vpack.c.b16 %v612, %v610
    %v667 = vpack.c.b16 %v613, %v611
    %v668 = vpack.c.b16 %v616, %v614
    %v669 = vpack.c.b16 %v617, %v615
    %v670 = vpack.c.b16 %v620, %v618
    %v671 = vpack.c.b16 %v621, %v619
    %v672 = vpack.c.b16 %v624, %v622
    %v673 = vpack.c.b16 %v625, %v623
    %v674 = vpack.c.b16 %v628, %v626
    %v675 = vpack.c.b16 %v629, %v627
    %v676 = vpack.c.b16 %v632, %v630
    %v677 = vpack.c.b16 %v633, %v631
    %v678 = vpack.c.b16 %v636, %v634
    %v679 = vpack.c.b16 %v637, %v635
    %v680 = vpack.c.b16 %v640, %v638
    %v681 = vpack.c.b16 %v641, %v639
    %v682 = vpack.c.b16 %v644, %v642
    %v683 = vpack.c.b16 %v645, %v643
    %v684 = vpack.c.b16 %v648, %v646
    %v685 = vpack.c.b16 %v649, %v647
    %v686 = vpack.c.b16 %v652, %v650
    %v687 = vpack.c.b16 %v653, %v651
    %v688 = vpack.c.b16 %v656, %v654
    %v689 = vpack.c.b16 %v657, %v655
    %722 = vmatpush.bf16.msra.mxu0 %v672
    %723 = vmatpush.bf16.msra.mxu0 %v670
    %724 = vmatpush.bf16.msra.mxu0 %v668
    %725 = vmatpush.bf16.msra.mxu0 %v666
    %726 = vmatpush.bf16.msra.mxu0 %v664
    %727 = vmatpush.bf16.msra.mxu0 %v662
    %728 = vmatpush.bf16.msra.mxu0 %v660
    %729 = vmatpush.bf16.msra.mxu0 %v658
    %730 = vmatmul.bf16.gmra.mxu0 %v190
    %v731 = vpop.f32.mrf.mxu0
    %v732 = vadd.f32 %v515, %v731
    %v733 = vpop.f32.mrf.mxu0
    %v734 = vadd.f32 %v517, %v733
    %735 = vmatmul.bf16.gmra.mxu0 %v192
    %v736 = vpop.f32.mrf.mxu0
    %v737 = vadd.f32 %v520, %v736
    %v738 = vpop.f32.mrf.mxu0
    %v739 = vadd.f32 %v522, %v738
    %740 = vdwg.mxu0
    %741 = vmatpush.bf16.msra.mxu0 %v688
    %742 = vmatpush.bf16.msra.mxu0 %v686
    %743 = vmatpush.bf16.msra.mxu0 %v684
    %744 = vmatpush.bf16.msra.mxu0 %v682
    %745 = vmatpush.bf16.msra.mxu0 %v680
    %746 = vmatpush.bf16.msra.mxu0 %v678
    %747 = vmatpush.bf16.msra.mxu0 %v676
    %748 = vmatpush.bf16.msra.mxu0 %v674
    %749 = vmatmul.bf16.gmra.mxu0 %v191
    %v750 = vpop.f32.mrf.mxu0
    %v751 = vadd.f32 %v732, %v750
    %v752 = vpop.f32.mrf.mxu0
    %v753 = vadd.f32 %v734, %v752
    %754 = vmatmul.bf16.gmra.mxu0 %v193
    %v755 = vpop.f32.mrf.mxu0
    %v756 = vadd.f32 %v737, %v755
    %v757 = vpop.f32.mrf.mxu0
    %v758 = vadd.f32 %v739, %v757
    %759 = vdwg.mxu0
    %760 = vmatpush.bf16.msra.mxu0 %v673
    %761 = vmatpush.bf16.msra.mxu0 %v671
    %762 = vmatpush.bf16.msra.mxu0 %v669
    %763 = vmatpush.bf16.msra.mxu0 %v667
    %764 = vmatpush.bf16.msra.mxu0 %v665
    %765 = vmatpush.bf16.msra.mxu0 %v663
    %766 = vmatpush.bf16.msra.mxu0 %v661
    %767 = vmatpush.bf16.msra.mxu0 %v659
    %768 = vmatmul.bf16.gmra.mxu0 %v190
    %v769 = vpop.f32.mrf.mxu0
    %v770 = vadd.f32 %v553, %v769
    %v771 = vpop.f32.mrf.mxu0
    %v772 = vadd.f32 %v555, %v771
    %773 = vmatmul.bf16.gmra.mxu0 %v192
    %v774 = vpop.f32.mrf.mxu0
    %v775 = vadd.f32 %v558, %v774
    %v776 = vpop.f32.mrf.mxu0
    %v777 = vadd.f32 %v560, %v776
    %778 = vdwg.mxu0
    %779 = vmatpush.bf16.msra.mxu0 %v689
    %780 = vmatpush.bf16.msra.mxu0 %v687
    %781 = vmatpush.bf16.msra.mxu0 %v685
    %782 = vmatpush.bf16.msra.mxu0 %v683
    %783 = vmatpush.bf16.msra.mxu0 %v681
    %784 = vmatpush.bf16.msra.mxu0 %v679
    %785 = vmatpush.bf16.msra.mxu0 %v677
    %786 = vmatpush.bf16.msra.mxu0 %v675
    %787 = vmatmul.bf16.gmra.mxu0 %v191
    %v788 = vpop.f32.mrf.mxu0
    %v789 = vadd.f32 %v770, %v788
    %v790 = vpop.f32.mrf.mxu0
    %v791 = vadd.f32 %v772, %v790
    %792 = vmatmul.bf16.gmra.mxu0 %v193
    %v793 = vpop.f32.mrf.mxu0
    %v794 = vadd.f32 %v775, %v793
    %v795 = vpop.f32.mrf.mxu0
    %v796 = vadd.f32 %v777, %v795
    %797 = vdwg.mxu0
    %s798 = scalar_lea.vmem [#allocation4], 512
    %v799 = vld [vmem:[%s798] sm:$0xff]
    %v800 = vld [vmem:[%s798 + $0x8] sm:$0xff]
    %v801 = vld [vmem:[%s798 + $0x10] sm:$0xff]
    %v802 = vld [vmem:[%s798 + $0x18] sm:$0xff]
    %v803 = vld [vmem:[%s798 + $0x20] sm:$0xff]
    %v804 = vld [vmem:[%s798 + $0x28] sm:$0xff]
    %v805 = vld [vmem:[%s798 + $0x30] sm:$0xff]
    %v806 = vld [vmem:[%s798 + $0x38] sm:$0xff]
    %v807 = vld [vmem:[%s798 + $0x40] sm:$0xff]
    %v808 = vld [vmem:[%s798 + $0x48] sm:$0xff]
    %v809 = vld [vmem:[%s798 + $0x50] sm:$0xff]
    %v810 = vld [vmem:[%s798 + $0x58] sm:$0xff]
    %v811 = vld [vmem:[%s798 + $0x60] sm:$0xff]
    %v812 = vld [vmem:[%s798 + $0x68] sm:$0xff]
    %v813 = vld [vmem:[%s798 + $0x70] sm:$0xff]
    %v814 = vld [vmem:[%s798 + $0x78] sm:$0xff]
    %v815 = vld [vmem:[%s798 + $0x80] sm:$0xff]
    %v816 = vld [vmem:[%s798 + $0x88] sm:$0xff]
    %v817 = vld [vmem:[%s798 + $0x90] sm:$0xff]
    %v818 = vld [vmem:[%s798 + $0x98] sm:$0xff]
    %v819 = vld [vmem:[%s798 + $0xa0] sm:$0xff]
    %v820 = vld [vmem:[%s798 + $0xa8] sm:$0xff]
    %v821 = vld [vmem:[%s798 + $0xb0] sm:$0xff]
    %v822 = vld [vmem:[%s798 + $0xb8] sm:$0xff]
    %v823 = vld [vmem:[%s798 + $0xc0] sm:$0xff]
    %v824 = vld [vmem:[%s798 + $0xc8] sm:$0xff]
    %v825 = vld [vmem:[%s798 + $0xd0] sm:$0xff]
    %v826 = vld [vmem:[%s798 + $0xd8] sm:$0xff]
    %v827 = vld [vmem:[%s798 + $0xe0] sm:$0xff]
    %v828 = vld [vmem:[%s798 + $0xe8] sm:$0xff]
    %v829 = vld [vmem:[%s798 + $0xf0] sm:$0xff]
    %v830 = vld [vmem:[%s798 + $0xf8] sm:$0xff]
    %v863 = vunpack.c.l.b16 %v799
    %v864 = vunpack.c.h.b16 %v799
    %v865 = vunpack.c.l.b16 %v800
    %v866 = vunpack.c.h.b16 %v800
    %v867 = vunpack.c.l.b16 %v801
    %v868 = vunpack.c.h.b16 %v801
    %v869 = vunpack.c.l.b16 %v802
    %v870 = vunpack.c.h.b16 %v802
    %v871 = vunpack.c.l.b16 %v803
    %v872 = vunpack.c.h.b16 %v803
    %v873 = vunpack.c.l.b16 %v804
    %v874 = vunpack.c.h.b16 %v804
    %v875 = vunpack.c.l.b16 %v805
    %v876 = vunpack.c.h.b16 %v805
    %v877 = vunpack.c.l.b16 %v806
    %v878 = vunpack.c.h.b16 %v806
    %v879 = vunpack.c.l.b16 %v807
    %v880 = vunpack.c.h.b16 %v807
    %v881 = vunpack.c.l.b16 %v808
    %v882 = vunpack.c.h.b16 %v808
    %v883 = vunpack.c.l.b16 %v809
    %v884 = vunpack.c.h.b16 %v809
    %v885 = vunpack.c.l.b16 %v810
    %v886 = vunpack.c.h.b16 %v810
    %v887 = vunpack.c.l.b16 %v811
    %v888 = vunpack.c.h.b16 %v811
    %v889 = vunpack.c.l.b16 %v812
    %v890 = vunpack.c.h.b16 %v812
    %v891 = vunpack.c.l.b16 %v813
    %v892 = vunpack.c.h.b16 %v813
    %v893 = vunpack.c.l.b16 %v814
    %v894 = vunpack.c.h.b16 %v814
    %v895 = vunpack.c.l.b16 %v815
    %v896 = vunpack.c.h.b16 %v815
    %v897 = vunpack.c.l.b16 %v816
    %v898 = vunpack.c.h.b16 %v816
    %v899 = vunpack.c.l.b16 %v817
    %v900 = vunpack.c.h.b16 %v817
    %v901 = vunpack.c.l.b16 %v818
    %v902 = vunpack.c.h.b16 %v818
    %v903 = vunpack.c.l.b16 %v819
    %v904 = vunpack.c.h.b16 %v819
    %v905 = vunpack.c.l.b16 %v820
    %v906 = vunpack.c.h.b16 %v820
    %v907 = vunpack.c.l.b16 %v821
    %v908 = vunpack.c.h.b16 %v821
    %v909 = vunpack.c.l.b16 %v822
    %v910 = vunpack.c.h.b16 %v822
    %v911 = vunpack.c.l.b16 %v823
    %v912 = vunpack.c.h.b16 %v823
    %v913 = vunpack.c.l.b16 %v824
    %v914 = vunpack.c.h.b16 %v824
    %v915 = vunpack.c.l.b16 %v825
    %v916 = vunpack.c.h.b16 %v825
    %v917 = vunpack.c.l.b16 %v826
    %v918 = vunpack.c.h.b16 %v826
    %v919 = vunpack.c.l.b16 %v827
    %v920 = vunpack.c.h.b16 %v827
    %v921 = vunpack.c.l.b16 %v828
    %v922 = vunpack.c.h.b16 %v828
    %v923 = vunpack.c.l.b16 %v829
    %v924 = vunpack.c.h.b16 %v829
    %v925 = vunpack.c.l.b16 %v830
    %v926 = vunpack.c.h.b16 %v830
    %v927 = vpack.c.b16 %v865, %v863
    %v928 = vpack.c.b16 %v866, %v864
    %v929 = vpack.c.b16 %v869, %v867
    %v930 = vpack.c.b16 %v870, %v868
    %v931 = vpack.c.b16 %v873, %v871
    %v932 = vpack.c.b16 %v874, %v872
    %v933 = vpack.c.b16 %v877, %v875
    %v934 = vpack.c.b16 %v878, %v876
    %v935 = vpack.c.b16 %v881, %v879
    %v936 = vpack.c.b16 %v882, %v880
    %v937 = vpack.c.b16 %v885, %v883
    %v938 = vpack.c.b16 %v886, %v884
    %v939 = vpack.c.b16 %v889, %v887
    %v940 = vpack.c.b16 %v890, %v888
    %v941 = vpack.c.b16 %v893, %v891
    %v942 = vpack.c.b16 %v894, %v892
    %v943 = vpack.c.b16 %v897, %v895
    %v944 = vpack.c.b16 %v898, %v896
    %v945 = vpack.c.b16 %v901, %v899
    %v946 = vpack.c.b16 %v902, %v900
    %v947 = vpack.c.b16 %v905, %v903
    %v948 = vpack.c.b16 %v906, %v904
    %v949 = vpack.c.b16 %v909, %v907
    %v950 = vpack.c.b16 %v910, %v908
    %v951 = vpack.c.b16 %v913, %v911
    %v952 = vpack.c.b16 %v914, %v912
    %v953 = vpack.c.b16 %v917, %v915
    %v954 = vpack.c.b16 %v918, %v916
    %v955 = vpack.c.b16 %v921, %v919
    %v956 = vpack.c.b16 %v922, %v920
    %v957 = vpack.c.b16 %v925, %v923
    %v958 = vpack.c.b16 %v926, %v924
    %991 = vmatpush.bf16.msra.mxu0 %v941
    %992 = vmatpush.bf16.msra.mxu0 %v939
    %993 = vmatpush.bf16.msra.mxu0 %v937
    %994 = vmatpush.bf16.msra.mxu0 %v935
    %995 = vmatpush.bf16.msra.mxu0 %v933
    %996 = vmatpush.bf16.msra.mxu0 %v931
    %997 = vmatpush.bf16.msra.mxu0 %v929
    %998 = vmatpush.bf16.msra.mxu0 %v927
    %999 = vmatmul.bf16.gmra.mxu0 %v257
    %v1000 = vpop.f32.mrf.mxu0
    %v1001 = vadd.f32 0.0, %v1000
    %v1002 = vpop.f32.mrf.mxu0
    %v1003 = vadd.f32 0.0, %v1002
    %1004 = vmatmul.bf16.gmra.mxu0 %v259
    %v1005 = vpop.f32.mrf.mxu0
    %v1006 = vadd.f32 0.0, %v1005
    %v1007 = vpop.f32.mrf.mxu0
    %v1008 = vadd.f32 0.0, %v1007
    %1009 = vdwg.mxu0
    %1010 = vmatpush.bf16.msra.mxu0 %v957
    %1011 = vmatpush.bf16.msra.mxu0 %v955
    %1012 = vmatpush.bf16.msra.mxu0 %v953
    %1013 = vmatpush.bf16.msra.mxu0 %v951
    %1014 = vmatpush.bf16.msra.mxu0 %v949
    %1015 = vmatpush.bf16.msra.mxu0 %v947
    %1016 = vmatpush.bf16.msra.mxu0 %v945
    %1017 = vmatpush.bf16.msra.mxu0 %v943
    %1018 = vmatmul.bf16.gmra.mxu0 %v258
    %v1019 = vpop.f32.mrf.mxu0
    %v1020 = vadd.f32 %v1001, %v1019
    %v1021 = vpop.f32.mrf.mxu0
    %v1022 = vadd.f32 %v1003, %v1021
    %1023 = vmatmul.bf16.gmra.mxu0 %v260
    %v1024 = vpop.f32.mrf.mxu0
    %v1025 = vadd.f32 %v1006, %v1024
    %v1026 = vpop.f32.mrf.mxu0
    %v1027 = vadd.f32 %v1008, %v1026
    %1028 = vdwg.mxu0
    %1029 = vmatpush.bf16.msra.mxu0 %v942
    %1030 = vmatpush.bf16.msra.mxu0 %v940
    %1031 = vmatpush.bf16.msra.mxu0 %v938
    %1032 = vmatpush.bf16.msra.mxu0 %v936
    %1033 = vmatpush.bf16.msra.mxu0 %v934
    %1034 = vmatpush.bf16.msra.mxu0 %v932
    %1035 = vmatpush.bf16.msra.mxu0 %v930
    %1036 = vmatpush.bf16.msra.mxu0 %v928
    %1037 = vmatmul.bf16.gmra.mxu0 %v257
    %v1038 = vpop.f32.mrf.mxu0
    %v1039 = vadd.f32 0.0, %v1038
    %v1040 = vpop.f32.mrf.mxu0
    %v1041 = vadd.f32 0.0, %v1040
    %1042 = vmatmul.bf16.gmra.mxu0 %v259
    %v1043 = vpop.f32.mrf.mxu0
    %v1044 = vadd.f32 0.0, %v1043
    %v1045 = vpop.f32.mrf.mxu0
    %v1046 = vadd.f32 0.0, %v1045
    %1047 = vdwg.mxu0
    %1048 = vmatpush.bf16.msra.mxu0 %v958
    %1049 = vmatpush.bf16.msra.mxu0 %v956
    %1050 = vmatpush.bf16.msra.mxu0 %v954
    %1051 = vmatpush.bf16.msra.mxu0 %v952
    %1052 = vmatpush.bf16.msra.mxu0 %v950
    %1053 = vmatpush.bf16.msra.mxu0 %v948
    %1054 = vmatpush.bf16.msra.mxu0 %v946
    %1055 = vmatpush.bf16.msra.mxu0 %v944
    %1056 = vmatmul.bf16.gmra.mxu0 %v258
    %v1057 = vpop.f32.mrf.mxu0
    %v1058 = vadd.f32 %v1039, %v1057
    %v1059 = vpop.f32.mrf.mxu0
    %v1060 = vadd.f32 %v1041, %v1059
    %1061 = vmatmul.bf16.gmra.mxu0 %v260
    %v1062 = vpop.f32.mrf.mxu0
    %v1063 = vadd.f32 %v1044, %v1062
    %v1064 = vpop.f32.mrf.mxu0
    %v1065 = vadd.f32 %v1046, %v1064
    %1066 = vdwg.mxu0
    %v1067 = vadd.f32 %v751, %v1020
    %v1068 = vadd.f32 %v789, %v1058
    %v1069 = vadd.f32 %v753, %v1022
    %v1070 = vadd.f32 %v791, %v1060
    %v1071 = vadd.f32 %v756, %v1025
    %v1072 = vadd.f32 %v794, %v1063
    %v1073 = vadd.f32 %v758, %v1027
    %v1074 = vadd.f32 %v796, %v1065
    %v1075 = vld [vmem:[#allocation6] sm:$0x3]
    %v1077 = vperm.slane %v1075, 0
    %v1078 = vperm.slane %v1075, 1
    %v1081 = vadd.f32 %v1067, %v1077
    %v1082 = vadd.f32 %v1068, %v1078
    %v1083 = vadd.f32 %v1069, %v1077
    %v1084 = vadd.f32 %v1070, %v1078
    %v1085 = vadd.f32 %v1071, %v1077
    %v1086 = vadd.f32 %v1072, %v1078
    %v1087 = vadd.f32 %v1073, %v1077
    %v1088 = vadd.f32 %v1074, %v1078
    %v1089 = vmax.f32 %v1081, 0.0
    %v1090 = vmax.f32 %v1082, 0.0
    %v1091 = vmax.f32 %v1083, 0.0
    %v1092 = vmax.f32 %v1084, 0.0
    %v1093 = vmax.f32 %v1085, 0.0
    %v1094 = vmax.f32 %v1086, 0.0
    %v1095 = vmax.f32 %v1087, 0.0
    %v1096 = vmax.f32 %v1088, 0.0
    %1097 = vst [vmem:[#allocation3] sm:$0xff] %v1089
    %1098 = vst [vmem:[#allocation3 + $0x8] sm:$0xff] %v1090
    %1099 = vst [vmem:[#allocation3 + $0x10] sm:$0xff] %v1091
    %1100 = vst [vmem:[#allocation3 + $0x18] sm:$0xff] %v1092
    %1101 = vst [vmem:[#allocation3 + $0x20] sm:$0xff] %v1093
    %1102 = vst [vmem:[#allocation3 + $0x28] sm:$0xff] %v1094
    %1103 = vst [vmem:[#allocation3 + $0x30] sm:$0xff] %v1095
    %1104 = vst [vmem:[#allocation3 + $0x38] sm:$0xff] %v1096
    %1105 = vst [vmem:[#allocation2 + $0x10] sm:$0xff] %v1089
    %1106 = vst [vmem:[#allocation2 + $0x18] sm:$0xff] %v1090
    %1107 = vst [vmem:[#allocation2 + $0x20] sm:$0xff] %v1091
    %1108 = vst [vmem:[#allocation2 + $0x28] sm:$0xff] %v1092
    %1109 = vst [vmem:[#allocation2 + $0x30] sm:$0xff] %v1093
    %1110 = vst [vmem:[#allocation2 + $0x38] sm:$0xff] %v1094
    %1111 = vst [vmem:[#allocation2 + $0x40] sm:$0xff] %v1095
    %1112 = vst [vmem:[#allocation2 + $0x48] sm:$0xff] %v1096
    %v1113 = vpack.c.bf16 %v1091, %v1089
    %v1114 = vpack.c.bf16 %v1092, %v1090
    %v1115 = vpack.c.bf16 %v1095, %v1093
    %v1116 = vpack.c.bf16 %v1096, %v1094
    %v1117 = vld [vmem:[#allocation2] sm:$0x80]
    %v1118 = vld [vmem:[#allocation2 + $0x8] sm:$0x80]
    %v1119 = vld [vmem:[#allocation2 + $0x10] sm:$0xff]
    %v1120 = vld [vmem:[#allocation2 + $0x18] sm:$0xff]
    %v1121 = vld [vmem:[#allocation2 + $0x20] sm:$0xff]
    %v1122 = vld [vmem:[#allocation2 + $0x28] sm:$0xff]
    %v1123 = vld [vmem:[#allocation2 + $0x30] sm:$0xff]
    %v1124 = vld [vmem:[#allocation2 + $0x38] sm:$0xff]
    %v1125 = vld [vmem:[#allocation2 + $0x40] sm:$0x7f]
    %v1126 = vld [vmem:[#allocation2 + $0x48] sm:$0x7f]
    %v1137 = vrot.slane %v1117, 7
    %v1138 = vrot.slane %v1119, 7
    %v1139 = vsel %vm155, %v1137, %v1138
    %v1140 = vrot.slane %v1118, 7
    %v1141 = vrot.slane %v1120, 7
    %v1142 = vsel %vm155, %v1140, %v1141
    %v1143 = vrot.slane %v1121, 7
    %v1144 = vsel %vm155, %v1138, %v1143
    %v1145 = vrot.slane %v1122, 7
    %v1146 = vsel %vm155, %v1141, %v1145
    %v1147 = vrot.slane %v1123, 7
    %v1148 = vsel %vm155, %v1143, %v1147
    %v1149 = vrot.slane %v1124, 7
    %v1150 = vsel %vm155, %v1145, %v1149
    %v1151 = vrot.slane %v1125, 7
    %v1152 = vsel %vm155, %v1147, %v1151
    %v1153 = vrot.slane %v1126, 7
    %v1154 = vsel %vm155, %v1149, %v1153
    %v1163 = vsel %vm141, %v1139, 0.0
    %v1164 = vsel %vm141, %v1142, 0.0
    %v1165 = vsel %vm142, %v1144, 0.0
    %v1166 = vsel %vm142, %v1146, 0.0
    %v1167 = vsel %vm143, %v1148, 0.0
    %v1168 = vsel %vm143, %v1150, 0.0
    %v1169 = vsel %vm144, %v1152, 0.0
    %v1170 = vsel %vm144, %v1154, 0.0
    %v1171 = vpack.c.bf16 %v1165, %v1163
    %v1172 = vpack.c.bf16 %v1166, %v1164
    %v1173 = vpack.c.bf16 %v1169, %v1167
    %v1174 = vpack.c.bf16 %v1170, %v1168
    %v1175 = vld [vmem:[#allocation2 + $0x10] sm:$0xfe]
    %v1176 = vld [vmem:[#allocation2 + $0x18] sm:$0xfe]
    %v1177 = vld [vmem:[#allocation2 + $0x20] sm:$0xff]
    %v1178 = vld [vmem:[#allocation2 + $0x28] sm:$0xff]
    %v1179 = vld [vmem:[#allocation2 + $0x30] sm:$0xff]
    %v1180 = vld [vmem:[#allocation2 + $0x38] sm:$0xff]
    %v1181 = vld [vmem:[#allocation2 + $0x40] sm:$0xff]
    %v1182 = vld [vmem:[#allocation2 + $0x48] sm:$0xff]
    %v1183 = vld [vmem:[#allocation2 + $0x50] sm:$0x1]
    %v1184 = vld [vmem:[#allocation2 + $0x58] sm:$0x1]
    %v1195 = vrot.slane %v1175, 1
    %v1196 = vrot.slane %v1177, 1
    %v1197 = vsel %vm222, %v1195, %v1196
    %v1198 = vrot.slane %v1176, 1
    %v1199 = vrot.slane %v1178, 1
    %v1200 = vsel %vm222, %v1198, %v1199
    %v1201 = vrot.slane %v1179, 1
    %v1202 = vsel %vm222, %v1196, %v1201
    %v1203 = vrot.slane %v1180, 1
    %v1204 = vsel %vm222, %v1199, %v1203
    %v1205 = vrot.slane %v1181, 1
    %v1206 = vsel %vm222, %v1201, %v1205
    %v1207 = vrot.slane %v1182, 1
    %v1208 = vsel %vm222, %v1203, %v1207
    %v1209 = vrot.slane %v1183, 1
    %v1210 = vsel %vm222, %v1205, %v1209
    %v1211 = vrot.slane %v1184, 1
    %v1212 = vsel %vm222, %v1207, %v1211
    %v1221 = vsel %vm208, %v1197, 0.0
    %v1222 = vsel %vm208, %v1200, 0.0
    %v1223 = vsel %vm209, %v1202, 0.0
    %v1224 = vsel %vm209, %v1204, 0.0
    %v1225 = vsel %vm210, %v1206, 0.0
    %v1226 = vsel %vm210, %v1208, 0.0
    %v1227 = vsel %vm211, %v1210, 0.0
    %v1228 = vsel %vm211, %v1212, 0.0
    %v1229 = vpack.c.bf16 %v1223, %v1221
    %v1230 = vpack.c.bf16 %v1224, %v1222
    %v1231 = vpack.c.bf16 %v1227, %v1225
    %v1232 = vpack.c.bf16 %v1228, %v1226
    %s1233 = scalar_lea.vmem [#allocation4], 768
    %v1234 = vld [vmem:[%s1233] sm:$0xff]
    %v1235 = vld [vmem:[%s1233 + $0x8] sm:$0xff]
    %v1236 = vld [vmem:[%s1233 + $0x10] sm:$0xff]
    %v1237 = vld [vmem:[%s1233 + $0x18] sm:$0xff]
    %v1238 = vld [vmem:[%s1233 + $0x20] sm:$0xff]
    %v1239 = vld [vmem:[%s1233 + $0x28] sm:$0xff]
    %v1240 = vld [vmem:[%s1233 + $0x30] sm:$0xff]
    %v1241 = vld [vmem:[%s1233 + $0x38] sm:$0xff]
    %v1242 = vld [vmem:[%s1233 + $0x40] sm:$0xff]
    %v1243 = vld [vmem:[%s1233 + $0x48] sm:$0xff]
    %v1244 = vld [vmem:[%s1233 + $0x50] sm:$0xff]
    %v1245 = vld [vmem:[%s1233 + $0x58] sm:$0xff]
    %v1246 = vld [vmem:[%s1233 + $0x60] sm:$0xff]
    %v1247 = vld [vmem:[%s1233 + $0x68] sm:$0xff]
    %v1248 = vld [vmem:[%s1233 + $0x70] sm:$0xff]
    %v1249 = vld [vmem:[%s1233 + $0x78] sm:$0xff]
    %v1250 = vld [vmem:[%s1233 + $0x80] sm:$0xff]
    %v1251 = vld [vmem:[%s1233 + $0x88] sm:$0xff]
    %v1252 = vld [vmem:[%s1233 + $0x90] sm:$0xff]
    %v1253 = vld [vmem:[%s1233 + $0x98] sm:$0xff]
    %v1254 = vld [vmem:[%s1233 + $0xa0] sm:$0xff]
    %v1255 = vld [vmem:[%s1233 + $0xa8] sm:$0xff]
    %v1256 = vld [vmem:[%s1233 + $0xb0] sm:$0xff]
    %v1257 = vld [vmem:[%s1233 + $0xb8] sm:$0xff]
    %v1258 = vld [vmem:[%s1233 + $0xc0] sm:$0xff]
    %v1259 = vld [vmem:[%s1233 + $0xc8] sm:$0xff]
    %v1260 = vld [vmem:[%s1233 + $0xd0] sm:$0xff]
    %v1261 = vld [vmem:[%s1233 + $0xd8] sm:$0xff]
    %v1262 = vld [vmem:[%s1233 + $0xe0] sm:$0xff]
    %v1263 = vld [vmem:[%s1233 + $0xe8] sm:$0xff]
    %v1264 = vld [vmem:[%s1233 + $0xf0] sm:$0xff]
    %v1265 = vld [vmem:[%s1233 + $0xf8] sm:$0xff]
    %s1266 = scalar_lea.vmem [#allocation4], 1024
    %v1267 = vld [vmem:[%s1266] sm:$0xff]
    %v1268 = vld [vmem:[%s1266 + $0x8] sm:$0xff]
    %v1269 = vld [vmem:[%s1266 + $0x10] sm:$0xff]
    %v1270 = vld [vmem:[%s1266 + $0x18] sm:$0xff]
    %v1271 = vld [vmem:[%s1266 + $0x20] sm:$0xff]
    %v1272 = vld [vmem:[%s1266 + $0x28] sm:$0xff]
    %v1273 = vld [vmem:[%s1266 + $0x30] sm:$0xff]
    %v1274 = vld [vmem:[%s1266 + $0x38] sm:$0xff]
    %v1275 = vld [vmem:[%s1266 + $0x40] sm:$0xff]
    %v1276 = vld [vmem:[%s1266 + $0x48] sm:$0xff]
    %v1277 = vld [vmem:[%s1266 + $0x50] sm:$0xff]
    %v1278 = vld [vmem:[%s1266 + $0x58] sm:$0xff]
    %v1279 = vld [vmem:[%s1266 + $0x60] sm:$0xff]
    %v1280 = vld [vmem:[%s1266 + $0x68] sm:$0xff]
    %v1281 = vld [vmem:[%s1266 + $0x70] sm:$0xff]
    %v1282 = vld [vmem:[%s1266 + $0x78] sm:$0xff]
    %v1283 = vld [vmem:[%s1266 + $0x80] sm:$0xff]
    %v1284 = vld [vmem:[%s1266 + $0x88] sm:$0xff]
    %v1285 = vld [vmem:[%s1266 + $0x90] sm:$0xff]
    %v1286 = vld [vmem:[%s1266 + $0x98] sm:$0xff]
    %v1287 = vld [vmem:[%s1266 + $0xa0] sm:$0xff]
    %v1288 = vld [vmem:[%s1266 + $0xa8] sm:$0xff]
    %v1289 = vld [vmem:[%s1266 + $0xb0] sm:$0xff]
    %v1290 = vld [vmem:[%s1266 + $0xb8] sm:$0xff]
    %v1291 = vld [vmem:[%s1266 + $0xc0] sm:$0xff]
    %v1292 = vld [vmem:[%s1266 + $0xc8] sm:$0xff]
    %v1293 = vld [vmem:[%s1266 + $0xd0] sm:$0xff]
    %v1294 = vld [vmem:[%s1266 + $0xd8] sm:$0xff]
    %v1295 = vld [vmem:[%s1266 + $0xe0] sm:$0xff]
    %v1296 = vld [vmem:[%s1266 + $0xe8] sm:$0xff]
    %v1297 = vld [vmem:[%s1266 + $0xf0] sm:$0xff]
    %v1298 = vld [vmem:[%s1266 + $0xf8] sm:$0xff]
    %v1331 = vunpack.c.l.b16 %v1267
    %v1332 = vunpack.c.h.b16 %v1267
    %v1333 = vunpack.c.l.b16 %v1268
    %v1334 = vunpack.c.h.b16 %v1268
    %v1335 = vunpack.c.l.b16 %v1269
    %v1336 = vunpack.c.h.b16 %v1269
    %v1337 = vunpack.c.l.b16 %v1270
    %v1338 = vunpack.c.h.b16 %v1270
    %v1339 = vunpack.c.l.b16 %v1271
    %v1340 = vunpack.c.h.b16 %v1271
    %v1341 = vunpack.c.l.b16 %v1272
    %v1342 = vunpack.c.h.b16 %v1272
    %v1343 = vunpack.c.l.b16 %v1273
    %v1344 = vunpack.c.h.b16 %v1273
    %v1345 = vunpack.c.l.b16 %v1274
    %v1346 = vunpack.c.h.b16 %v1274
    %v1347 = vunpack.c.l.b16 %v1275
    %v1348 = vunpack.c.h.b16 %v1275
    %v1349 = vunpack.c.l.b16 %v1276
    %v1350 = vunpack.c.h.b16 %v1276
    %v1351 = vunpack.c.l.b16 %v1277
    %v1352 = vunpack.c.h.b16 %v1277
    %v1353 = vunpack.c.l.b16 %v1278
    %v1354 = vunpack.c.h.b16 %v1278
    %v1355 = vunpack.c.l.b16 %v1279
    %v1356 = vunpack.c.h.b16 %v1279
    %v1357 = vunpack.c.l.b16 %v1280
    %v1358 = vunpack.c.h.b16 %v1280
    %v1359 = vunpack.c.l.b16 %v1281
    %v1360 = vunpack.c.h.b16 %v1281
    %v1361 = vunpack.c.l.b16 %v1282
    %v1362 = vunpack.c.h.b16 %v1282
    %v1363 = vunpack.c.l.b16 %v1283
    %v1364 = vunpack.c.h.b16 %v1283
    %v1365 = vunpack.c.l.b16 %v1284
    %v1366 = vunpack.c.h.b16 %v1284
    %v1367 = vunpack.c.l.b16 %v1285
    %v1368 = vunpack.c.h.b16 %v1285
    %v1369 = vunpack.c.l.b16 %v1286
    %v1370 = vunpack.c.h.b16 %v1286
    %v1371 = vunpack.c.l.b16 %v1287
    %v1372 = vunpack.c.h.b16 %v1287
    %v1373 = vunpack.c.l.b16 %v1288
    %v1374 = vunpack.c.h.b16 %v1288
    %v1375 = vunpack.c.l.b16 %v1289
    %v1376 = vunpack.c.h.b16 %v1289
    %v1377 = vunpack.c.l.b16 %v1290
    %v1378 = vunpack.c.h.b16 %v1290
    %v1379 = vunpack.c.l.b16 %v1291
    %v1380 = vunpack.c.h.b16 %v1291
    %v1381 = vunpack.c.l.b16 %v1292
    %v1382 = vunpack.c.h.b16 %v1292
    %v1383 = vunpack.c.l.b16 %v1293
    %v1384 = vunpack.c.h.b16 %v1293
    %v1385 = vunpack.c.l.b16 %v1294
    %v1386 = vunpack.c.h.b16 %v1294
    %v1387 = vunpack.c.l.b16 %v1295
    %v1388 = vunpack.c.h.b16 %v1295
    %v1389 = vunpack.c.l.b16 %v1296
    %v1390 = vunpack.c.h.b16 %v1296
    %v1391 = vunpack.c.l.b16 %v1297
    %v1392 = vunpack.c.h.b16 %v1297
    %v1393 = vunpack.c.l.b16 %v1298
    %v1394 = vunpack.c.h.b16 %v1298
    %v1395 = vpack.c.b16 %v1333, %v1331
    %v1396 = vpack.c.b16 %v1334, %v1332
    %v1397 = vpack.c.b16 %v1337, %v1335
    %v1398 = vpack.c.b16 %v1338, %v1336
    %v1399 = vpack.c.b16 %v1341, %v1339
    %v1400 = vpack.c.b16 %v1342, %v1340
    %v1401 = vpack.c.b16 %v1345, %v1343
    %v1402 = vpack.c.b16 %v1346, %v1344
    %v1403 = vpack.c.b16 %v1349, %v1347
    %v1404 = vpack.c.b16 %v1350, %v1348
    %v1405 = vpack.c.b16 %v1353, %v1351
    %v1406 = vpack.c.b16 %v1354, %v1352
    %v1407 = vpack.c.b16 %v1357, %v1355
    %v1408 = vpack.c.b16 %v1358, %v1356
    %v1409 = vpack.c.b16 %v1361, %v1359
    %v1410 = vpack.c.b16 %v1362, %v1360
    %v1411 = vpack.c.b16 %v1365, %v1363
    %v1412 = vpack.c.b16 %v1366, %v1364
    %v1413 = vpack.c.b16 %v1369, %v1367
    %v1414 = vpack.c.b16 %v1370, %v1368
    %v1415 = vpack.c.b16 %v1373, %v1371
    %v1416 = vpack.c.b16 %v1374, %v1372
    %v1417 = vpack.c.b16 %v1377, %v1375
    %v1418 = vpack.c.b16 %v1378, %v1376
    %v1419 = vpack.c.b16 %v1381, %v1379
    %v1420 = vpack.c.b16 %v1382, %v1380
    %v1421 = vpack.c.b16 %v1385, %v1383
    %v1422 = vpack.c.b16 %v1386, %v1384
    %v1423 = vpack.c.b16 %v1389, %v1387
    %v1424 = vpack.c.b16 %v1390, %v1388
    %v1425 = vpack.c.b16 %v1393, %v1391
    %v1426 = vpack.c.b16 %v1394, %v1392
    %1459 = vmatpush.bf16.msra.mxu0 %v1409
    %1460 = vmatpush.bf16.msra.mxu0 %v1407
    %1461 = vmatpush.bf16.msra.mxu0 %v1405
    %1462 = vmatpush.bf16.msra.mxu0 %v1403
    %1463 = vmatpush.bf16.msra.mxu0 %v1401
    %1464 = vmatpush.bf16.msra.mxu0 %v1399
    %1465 = vmatpush.bf16.msra.mxu0 %v1397
    %1466 = vmatpush.bf16.msra.mxu0 %v1395
    %1467 = vmatmul.bf16.gmra.mxu0 %v1113
    %v1468 = vpop.f32.mrf.mxu0
    %v1469 = vadd.f32 0.0, %v1468
    %v1470 = vpop.f32.mrf.mxu0
    %v1471 = vadd.f32 0.0, %v1470
    %1472 = vmatmul.bf16.gmra.mxu0 %v1115
    %v1473 = vpop.f32.mrf.mxu0
    %v1474 = vadd.f32 0.0, %v1473
    %v1475 = vpop.f32.mrf.mxu0
    %v1476 = vadd.f32 0.0, %v1475
    %1477 = vdwg.mxu0
    %1478 = vmatpush.bf16.msra.mxu0 %v1425
    %1479 = vmatpush.bf16.msra.mxu0 %v1423
    %1480 = vmatpush.bf16.msra.mxu0 %v1421
    %1481 = vmatpush.bf16.msra.mxu0 %v1419
    %1482 = vmatpush.bf16.msra.mxu0 %v1417
    %1483 = vmatpush.bf16.msra.mxu0 %v1415
    %1484 = vmatpush.bf16.msra.mxu0 %v1413
    %1485 = vmatpush.bf16.msra.mxu0 %v1411
    %1486 = vmatmul.bf16.gmra.mxu0 %v1114
    %v1487 = vpop.f32.mrf.mxu0
    %v1488 = vadd.f32 %v1469, %v1487
    %v1489 = vpop.f32.mrf.mxu0
    %v1490 = vadd.f32 %v1471, %v1489
    %1491 = vmatmul.bf16.gmra.mxu0 %v1116
    %v1492 = vpop.f32.mrf.mxu0
    %v1493 = vadd.f32 %v1474, %v1492
    %v1494 = vpop.f32.mrf.mxu0
    %v1495 = vadd.f32 %v1476, %v1494
    %1496 = vdwg.mxu0
    %1497 = vmatpush.bf16.msra.mxu0 %v1410
    %1498 = vmatpush.bf16.msra.mxu0 %v1408
    %1499 = vmatpush.bf16.msra.mxu0 %v1406
    %1500 = vmatpush.bf16.msra.mxu0 %v1404
    %1501 = vmatpush.bf16.msra.mxu0 %v1402
    %1502 = vmatpush.bf16.msra.mxu0 %v1400
    %1503 = vmatpush.bf16.msra.mxu0 %v1398
    %1504 = vmatpush.bf16.msra.mxu0 %v1396
    %1505 = vmatmul.bf16.gmra.mxu0 %v1113
    %v1506 = vpop.f32.mrf.mxu0
    %v1507 = vadd.f32 0.0, %v1506
    %v1508 = vpop.f32.mrf.mxu0
    %v1509 = vadd.f32 0.0, %v1508
    %1510 = vmatmul.bf16.gmra.mxu0 %v1115
    %v1511 = vpop.f32.mrf.mxu0
    %v1512 = vadd.f32 0.0, %v1511
    %v1513 = vpop.f32.mrf.mxu0
    %v1514 = vadd.f32 0.0, %v1513
    %1515 = vdwg.mxu0
    %1516 = vmatpush.bf16.msra.mxu0 %v1426
    %1517 = vmatpush.bf16.msra.mxu0 %v1424
    %1518 = vmatpush.bf16.msra.mxu0 %v1422
    %1519 = vmatpush.bf16.msra.mxu0 %v1420
    %1520 = vmatpush.bf16.msra.mxu0 %v1418
    %1521 = vmatpush.bf16.msra.mxu0 %v1416
    %1522 = vmatpush.bf16.msra.mxu0 %v1414
    %1523 = vmatpush.bf16.msra.mxu0 %v1412
    %1524 = vmatmul.bf16.gmra.mxu0 %v1114
    %v1525 = vpop.f32.mrf.mxu0
    %v1526 = vadd.f32 %v1507, %v1525
    %v1527 = vpop.f32.mrf.mxu0
    %v1528 = vadd.f32 %v1509, %v1527
    %1529 = vmatmul.bf16.gmra.mxu0 %v1116
    %v1530 = vpop.f32.mrf.mxu0
    %v1531 = vadd.f32 %v1512, %v1530
    %v1532 = vpop.f32.mrf.mxu0
    %v1533 = vadd.f32 %v1514, %v1532
    %1534 = vdwg.mxu0
    %v1567 = vunpack.c.l.b16 %v1234
    %v1568 = vunpack.c.h.b16 %v1234
    %v1569 = vunpack.c.l.b16 %v1235
    %v1570 = vunpack.c.h.b16 %v1235
    %v1571 = vunpack.c.l.b16 %v1236
    %v1572 = vunpack.c.h.b16 %v1236
    %v1573 = vunpack.c.l.b16 %v1237
    %v1574 = vunpack.c.h.b16 %v1237
    %v1575 = vunpack.c.l.b16 %v1238
    %v1576 = vunpack.c.h.b16 %v1238
    %v1577 = vunpack.c.l.b16 %v1239
    %v1578 = vunpack.c.h.b16 %v1239
    %v1579 = vunpack.c.l.b16 %v1240
    %v1580 = vunpack.c.h.b16 %v1240
    %v1581 = vunpack.c.l.b16 %v1241
    %v1582 = vunpack.c.h.b16 %v1241
    %v1583 = vunpack.c.l.b16 %v1242
    %v1584 = vunpack.c.h.b16 %v1242
    %v1585 = vunpack.c.l.b16 %v1243
    %v1586 = vunpack.c.h.b16 %v1243
    %v1587 = vunpack.c.l.b16 %v1244
    %v1588 = vunpack.c.h.b16 %v1244
    %v1589 = vunpack.c.l.b16 %v1245
    %v1590 = vunpack.c.h.b16 %v1245
    %v1591 = vunpack.c.l.b16 %v1246
    %v1592 = vunpack.c.h.b16 %v1246
    %v1593 = vunpack.c.l.b16 %v1247
    %v1594 = vunpack.c.h.b16 %v1247
    %v1595 = vunpack.c.l.b16 %v1248
    %v1596 = vunpack.c.h.b16 %v1248
    %v1597 = vunpack.c.l.b16 %v1249
    %v1598 = vunpack.c.h.b16 %v1249
    %v1599 = vunpack.c.l.b16 %v1250
    %v1600 = vunpack.c.h.b16 %v1250
    %v1601 = vunpack.c.l.b16 %v1251
    %v1602 = vunpack.c.h.b16 %v1251
    %v1603 = vunpack.c.l.b16 %v1252
    %v1604 = vunpack.c.h.b16 %v1252
    %v1605 = vunpack.c.l.b16 %v1253
    %v1606 = vunpack.c.h.b16 %v1253
    %v1607 = vunpack.c.l.b16 %v1254
    %v1608 = vunpack.c.h.b16 %v1254
    %v1609 = vunpack.c.l.b16 %v1255
    %v1610 = vunpack.c.h.b16 %v1255
    %v1611 = vunpack.c.l.b16 %v1256
    %v1612 = vunpack.c.h.b16 %v1256
    %v1613 = vunpack.c.l.b16 %v1257
    %v1614 = vunpack.c.h.b16 %v1257
    %v1615 = vunpack.c.l.b16 %v1258
    %v1616 = vunpack.c.h.b16 %v1258
    %v1617 = vunpack.c.l.b16 %v1259
    %v1618 = vunpack.c.h.b16 %v1259
    %v1619 = vunpack.c.l.b16 %v1260
    %v1620 = vunpack.c.h.b16 %v1260
    %v1621 = vunpack.c.l.b16 %v1261
    %v1622 = vunpack.c.h.b16 %v1261
    %v1623 = vunpack.c.l.b16 %v1262
    %v1624 = vunpack.c.h.b16 %v1262
    %v1625 = vunpack.c.l.b16 %v1263
    %v1626 = vunpack.c.h.b16 %v1263
    %v1627 = vunpack.c.l.b16 %v1264
    %v1628 = vunpack.c.h.b16 %v1264
    %v1629 = vunpack.c.l.b16 %v1265
    %v1630 = vunpack.c.h.b16 %v1265
    %v1631 = vpack.c.b16 %v1569, %v1567
    %v1632 = vpack.c.b16 %v1570, %v1568
    %v1633 = vpack.c.b16 %v1573, %v1571
    %v1634 = vpack.c.b16 %v1574, %v1572
    %v1635 = vpack.c.b16 %v1577, %v1575
    %v1636 = vpack.c.b16 %v1578, %v1576
    %v1637 = vpack.c.b16 %v1581, %v1579
    %v1638 = vpack.c.b16 %v1582, %v1580
    %v1639 = vpack.c.b16 %v1585, %v1583
    %v1640 = vpack.c.b16 %v1586, %v1584
    %v1641 = vpack.c.b16 %v1589, %v1587
    %v1642 = vpack.c.b16 %v1590, %v1588
    %v1643 = vpack.c.b16 %v1593, %v1591
    %v1644 = vpack.c.b16 %v1594, %v1592
    %v1645 = vpack.c.b16 %v1597, %v1595
    %v1646 = vpack.c.b16 %v1598, %v1596
    %v1647 = vpack.c.b16 %v1601, %v1599
    %v1648 = vpack.c.b16 %v1602, %v1600
    %v1649 = vpack.c.b16 %v1605, %v1603
    %v1650 = vpack.c.b16 %v1606, %v1604
    %v1651 = vpack.c.b16 %v1609, %v1607
    %v1652 = vpack.c.b16 %v1610, %v1608
    %v1653 = vpack.c.b16 %v1613, %v1611
    %v1654 = vpack.c.b16 %v1614, %v1612
    %v1655 = vpack.c.b16 %v1617, %v1615
    %v1656 = vpack.c.b16 %v1618, %v1616
    %v1657 = vpack.c.b16 %v1621, %v1619
    %v1658 = vpack.c.b16 %v1622, %v1620
    %v1659 = vpack.c.b16 %v1625, %v1623
    %v1660 = vpack.c.b16 %v1626, %v1624
    %v1661 = vpack.c.b16 %v1629, %v1627
    %v1662 = vpack.c.b16 %v1630, %v1628
    %1695 = vmatpush.bf16.msra.mxu0 %v1645
    %1696 = vmatpush.bf16.msra.mxu0 %v1643
    %1697 = vmatpush.bf16.msra.mxu0 %v1641
    %1698 = vmatpush.bf16.msra.mxu0 %v1639
    %1699 = vmatpush.bf16.msra.mxu0 %v1637
    %1700 = vmatpush.bf16.msra.mxu0 %v1635
    %1701 = vmatpush.bf16.msra.mxu0 %v1633
    %1702 = vmatpush.bf16.msra.mxu0 %v1631
    %1703 = vmatmul.bf16.gmra.mxu0 %v1171
    %v1704 = vpop.f32.mrf.mxu0
    %v1705 = vadd.f32 %v1488, %v1704
    %v1706 = vpop.f32.mrf.mxu0
    %v1707 = vadd.f32 %v1490, %v1706
    %1708 = vmatmul.bf16.gmra.mxu0 %v1173
    %v1709 = vpop.f32.mrf.mxu0
    %v1710 = vadd.f32 %v1493, %v1709
    %v1711 = vpop.f32.mrf.mxu0
    %v1712 = vadd.f32 %v1495, %v1711
    %1713 = vdwg.mxu0
    %1714 = vmatpush.bf16.msra.mxu0 %v1661
    %1715 = vmatpush.bf16.msra.mxu0 %v1659
    %1716 = vmatpush.bf16.msra.mxu0 %v1657
    %1717 = vmatpush.bf16.msra.mxu0 %v1655
    %1718 = vmatpush.bf16.msra.mxu0 %v1653
    %1719 = vmatpush.bf16.msra.mxu0 %v1651
    %1720 = vmatpush.bf16.msra.mxu0 %v1649
    %1721 = vmatpush.bf16.msra.mxu0 %v1647
    %1722 = vmatmul.bf16.gmra.mxu0 %v1172
    %v1723 = vpop.f32.mrf.mxu0
    %v1724 = vadd.f32 %v1705, %v1723
    %v1725 = vpop.f32.mrf.mxu0
    %v1726 = vadd.f32 %v1707, %v1725
    %1727 = vmatmul.bf16.gmra.mxu0 %v1174
    %v1728 = vpop.f32.mrf.mxu0
    %v1729 = vadd.f32 %v1710, %v1728
    %v1730 = vpop.f32.mrf.mxu0
    %v1731 = vadd.f32 %v1712, %v1730
    %1732 = vdwg.mxu0
    %1733 = vmatpush.bf16.msra.mxu0 %v1646
    %1734 = vmatpush.bf16.msra.mxu0 %v1644
    %1735 = vmatpush.bf16.msra.mxu0 %v1642
    %1736 = vmatpush.bf16.msra.mxu0 %v1640
    %1737 = vmatpush.bf16.msra.mxu0 %v1638
    %1738 = vmatpush.bf16.msra.mxu0 %v1636
    %1739 = vmatpush.bf16.msra.mxu0 %v1634
    %1740 = vmatpush.bf16.msra.mxu0 %v1632
    %1741 = vmatmul.bf16.gmra.mxu0 %v1171
    %v1742 = vpop.f32.mrf.mxu0
    %v1743 = vadd.f32 %v1526, %v1742
    %v1744 = vpop.f32.mrf.mxu0
    %v1745 = vadd.f32 %v1528, %v1744
    %1746 = vmatmul.bf16.gmra.mxu0 %v1173
    %v1747 = vpop.f32.mrf.mxu0
    %v1748 = vadd.f32 %v1531, %v1747
    %v1749 = vpop.f32.mrf.mxu0
    %v1750 = vadd.f32 %v1533, %v1749
    %1751 = vdwg.mxu0
    %1752 = vmatpush.bf16.msra.mxu0 %v1662
    %1753 = vmatpush.bf16.msra.mxu0 %v1660
    %1754 = vmatpush.bf16.msra.mxu0 %v1658
    %1755 = vmatpush.bf16.msra.mxu0 %v1656
    %1756 = vmatpush.bf16.msra.mxu0 %v1654
    %1757 = vmatpush.bf16.msra.mxu0 %v1652
    %1758 = vmatpush.bf16.msra.mxu0 %v1650
    %1759 = vmatpush.bf16.msra.mxu0 %v1648
    %1760 = vmatmul.bf16.gmra.mxu0 %v1172
    %v1761 = vpop.f32.mrf.mxu0
    %v1762 = vadd.f32 %v1743, %v1761
    %v1763 = vpop.f32.mrf.mxu0
    %v1764 = vadd.f32 %v1745, %v1763
    %1765 = vmatmul.bf16.gmra.mxu0 %v1174
    %v1766 = vpop.f32.mrf.mxu0
    %v1767 = vadd.f32 %v1748, %v1766
    %v1768 = vpop.f32.mrf.mxu0
    %v1769 = vadd.f32 %v1750, %v1768
    %1770 = vdwg.mxu0
    %s1771 = scalar_lea.vmem [#allocation4], 1280
    %v1772 = vld [vmem:[%s1771] sm:$0xff]
    %v1773 = vld [vmem:[%s1771 + $0x8] sm:$0xff]
    %v1774 = vld [vmem:[%s1771 + $0x10] sm:$0xff]
    %v1775 = vld [vmem:[%s1771 + $0x18] sm:$0xff]
    %v1776 = vld [vmem:[%s1771 + $0x20] sm:$0xff]
    %v1777 = vld [vmem:[%s1771 + $0x28] sm:$0xff]
    %v1778 = vld [vmem:[%s1771 + $0x30] sm:$0xff]
    %v1779 = vld [vmem:[%s1771 + $0x38] sm:$0xff]
    %v1780 = vld [vmem:[%s1771 + $0x40] sm:$0xff]
    %v1781 = vld [vmem:[%s1771 + $0x48] sm:$0xff]
    %v1782 = vld [vmem:[%s1771 + $0x50] sm:$0xff]
    %v1783 = vld [vmem:[%s1771 + $0x58] sm:$0xff]
    %v1784 = vld [vmem:[%s1771 + $0x60] sm:$0xff]
    %v1785 = vld [vmem:[%s1771 + $0x68] sm:$0xff]
    %v1786 = vld [vmem:[%s1771 + $0x70] sm:$0xff]
    %v1787 = vld [vmem:[%s1771 + $0x78] sm:$0xff]
    %v1788 = vld [vmem:[%s1771 + $0x80] sm:$0xff]
    %v1789 = vld [vmem:[%s1771 + $0x88] sm:$0xff]
    %v1790 = vld [vmem:[%s1771 + $0x90] sm:$0xff]
    %v1791 = vld [vmem:[%s1771 + $0x98] sm:$0xff]
    %v1792 = vld [vmem:[%s1771 + $0xa0] sm:$0xff]
    %v1793 = vld [vmem:[%s1771 + $0xa8] sm:$0xff]
    %v1794 = vld [vmem:[%s1771 + $0xb0] sm:$0xff]
    %v1795 = vld [vmem:[%s1771 + $0xb8] sm:$0xff]
    %v1796 = vld [vmem:[%s1771 + $0xc0] sm:$0xff]
    %v1797 = vld [vmem:[%s1771 + $0xc8] sm:$0xff]
    %v1798 = vld [vmem:[%s1771 + $0xd0] sm:$0xff]
    %v1799 = vld [vmem:[%s1771 + $0xd8] sm:$0xff]
    %v1800 = vld [vmem:[%s1771 + $0xe0] sm:$0xff]
    %v1801 = vld [vmem:[%s1771 + $0xe8] sm:$0xff]
    %v1802 = vld [vmem:[%s1771 + $0xf0] sm:$0xff]
    %v1803 = vld [vmem:[%s1771 + $0xf8] sm:$0xff]
    %v1836 = vunpack.c.l.b16 %v1772
    %v1837 = vunpack.c.h.b16 %v1772
    %v1838 = vunpack.c.l.b16 %v1773
    %v1839 = vunpack.c.h.b16 %v1773
    %v1840 = vunpack.c.l.b16 %v1774
    %v1841 = vunpack.c.h.b16 %v1774
    %v1842 = vunpack.c.l.b16 %v1775
    %v1843 = vunpack.c.h.b16 %v1775
    %v1844 = vunpack.c.l.b16 %v1776
    %v1845 = vunpack.c.h.b16 %v1776
    %v1846 = vunpack.c.l.b16 %v1777
    %v1847 = vunpack.c.h.b16 %v1777
    %v1848 = vunpack.c.l.b16 %v1778
    %v1849 = vunpack.c.h.b16 %v1778
    %v1850 = vunpack.c.l.b16 %v1779
    %v1851 = vunpack.c.h.b16 %v1779
    %v1852 = vunpack.c.l.b16 %v1780
    %v1853 = vunpack.c.h.b16 %v1780
    %v1854 = vunpack.c.l.b16 %v1781
    %v1855 = vunpack.c.h.b16 %v1781
    %v1856 = vunpack.c.l.b16 %v1782
    %v1857 = vunpack.c.h.b16 %v1782
    %v1858 = vunpack.c.l.b16 %v1783
    %v1859 = vunpack.c.h.b16 %v1783
    %v1860 = vunpack.c.l.b16 %v1784
    %v1861 = vunpack.c.h.b16 %v1784
    %v1862 = vunpack.c.l.b16 %v1785
    %v1863 = vunpack.c.h.b16 %v1785
    %v1864 = vunpack.c.l.b16 %v1786
    %v1865 = vunpack.c.h.b16 %v1786
    %v1866 = vunpack.c.l.b16 %v1787
    %v1867 = vunpack.c.h.b16 %v1787
    %v1868 = vunpack.c.l.b16 %v1788
    %v1869 = vunpack.c.h.b16 %v1788
    %v1870 = vunpack.c.l.b16 %v1789
    %v1871 = vunpack.c.h.b16 %v1789
    %v1872 = vunpack.c.l.b16 %v1790
    %v1873 = vunpack.c.h.b16 %v1790
    %v1874 = vunpack.c.l.b16 %v1791
    %v1875 = vunpack.c.h.b16 %v1791
    %v1876 = vunpack.c.l.b16 %v1792
    %v1877 = vunpack.c.h.b16 %v1792
    %v1878 = vunpack.c.l.b16 %v1793
    %v1879 = vunpack.c.h.b16 %v1793
    %v1880 = vunpack.c.l.b16 %v1794
    %v1881 = vunpack.c.h.b16 %v1794
    %v1882 = vunpack.c.l.b16 %v1795
    %v1883 = vunpack.c.h.b16 %v1795
    %v1884 = vunpack.c.l.b16 %v1796
    %v1885 = vunpack.c.h.b16 %v1796
    %v1886 = vunpack.c.l.b16 %v1797
    %v1887 = vunpack.c.h.b16 %v1797
    %v1888 = vunpack.c.l.b16 %v1798
    %v1889 = vunpack.c.h.b16 %v1798
    %v1890 = vunpack.c.l.b16 %v1799
    %v1891 = vunpack.c.h.b16 %v1799
    %v1892 = vunpack.c.l.b16 %v1800
    %v1893 = vunpack.c.h.b16 %v1800
    %v1894 = vunpack.c.l.b16 %v1801
    %v1895 = vunpack.c.h.b16 %v1801
    %v1896 = vunpack.c.l.b16 %v1802
    %v1897 = vunpack.c.h.b16 %v1802
    %v1898 = vunpack.c.l.b16 %v1803
    %v1899 = vunpack.c.h.b16 %v1803
    %v1900 = vpack.c.b16 %v1838, %v1836
    %v1901 = vpack.c.b16 %v1839, %v1837
    %v1902 = vpack.c.b16 %v1842, %v1840
    %v1903 = vpack.c.b16 %v1843, %v1841
    %v1904 = vpack.c.b16 %v1846, %v1844
    %v1905 = vpack.c.b16 %v1847, %v1845
    %v1906 = vpack.c.b16 %v1850, %v1848
    %v1907 = vpack.c.b16 %v1851, %v1849
    %v1908 = vpack.c.b16 %v1854, %v1852
    %v1909 = vpack.c.b16 %v1855, %v1853
    %v1910 = vpack.c.b16 %v1858, %v1856
    %v1911 = vpack.c.b16 %v1859, %v1857
    %v1912 = vpack.c.b16 %v1862, %v1860
    %v1913 = vpack.c.b16 %v1863, %v1861
    %v1914 = vpack.c.b16 %v1866, %v1864
    %v1915 = vpack.c.b16 %v1867, %v1865
    %v1916 = vpack.c.b16 %v1870, %v1868
    %v1917 = vpack.c.b16 %v1871, %v1869
    %v1918 = vpack.c.b16 %v1874, %v1872
    %v1919 = vpack.c.b16 %v1875, %v1873
    %v1920 = vpack.c.b16 %v1878, %v1876
    %v1921 = vpack.c.b16 %v1879, %v1877
    %v1922 = vpack.c.b16 %v1882, %v1880
    %v1923 = vpack.c.b16 %v1883, %v1881
    %v1924 = vpack.c.b16 %v1886, %v1884
    %v1925 = vpack.c.b16 %v1887, %v1885
    %v1926 = vpack.c.b16 %v1890, %v1888
    %v1927 = vpack.c.b16 %v1891, %v1889
    %v1928 = vpack.c.b16 %v1894, %v1892
    %v1929 = vpack.c.b16 %v1895, %v1893
    %v1930 = vpack.c.b16 %v1898, %v1896
    %v1931 = vpack.c.b16 %v1899, %v1897
    %1964 = vmatpush.bf16.msra.mxu0 %v1914
    %1965 = vmatpush.bf16.msra.mxu0 %v1912
    %1966 = vmatpush.bf16.msra.mxu0 %v1910
    %1967 = vmatpush.bf16.msra.mxu0 %v1908
    %1968 = vmatpush.bf16.msra.mxu0 %v1906
    %1969 = vmatpush.bf16.msra.mxu0 %v1904
    %1970 = vmatpush.bf16.msra.mxu0 %v1902
    %1971 = vmatpush.bf16.msra.mxu0 %v1900
    %1972 = vmatmul.bf16.gmra.mxu0 %v1229
    %v1973 = vpop.f32.mrf.mxu0
    %v1974 = vadd.f32 0.0, %v1973
    %v1975 = vpop.f32.mrf.mxu0
    %v1976 = vadd.f32 0.0, %v1975
    %1977 = vmatmul.bf16.gmra.mxu0 %v1231
    %v1978 = vpop.f32.mrf.mxu0
    %v1979 = vadd.f32 0.0, %v1978
    %v1980 = vpop.f32.mrf.mxu0
    %v1981 = vadd.f32 0.0, %v1980
    %1982 = vdwg.mxu0
    %1983 = vmatpush.bf16.msra.mxu0 %v1930
    %1984 = vmatpush.bf16.msra.mxu0 %v1928
    %1985 = vmatpush.bf16.msra.mxu0 %v1926
    %1986 = vmatpush.bf16.msra.mxu0 %v1924
    %1987 = vmatpush.bf16.msra.mxu0 %v1922
    %1988 = vmatpush.bf16.msra.mxu0 %v1920
    %1989 = vmatpush.bf16.msra.mxu0 %v1918
    %1990 = vmatpush.bf16.msra.mxu0 %v1916
    %1991 = vmatmul.bf16.gmra.mxu0 %v1230
    %v1992 = vpop.f32.mrf.mxu0
    %v1993 = vadd.f32 %v1974, %v1992
    %v1994 = vpop.f32.mrf.mxu0
    %v1995 = vadd.f32 %v1976, %v1994
    %1996 = vmatmul.bf16.gmra.mxu0 %v1232
    %v1997 = vpop.f32.mrf.mxu0
    %v1998 = vadd.f32 %v1979, %v1997
    %v1999 = vpop.f32.mrf.mxu0
    %v2000 = vadd.f32 %v1981, %v1999
    %2001 = vdwg.mxu0
    %2002 = vmatpush.bf16.msra.mxu0 %v1915
    %2003 = vmatpush.bf16.msra.mxu0 %v1913
    %2004 = vmatpush.bf16.msra.mxu0 %v1911
    %2005 = vmatpush.bf16.msra.mxu0 %v1909
    %2006 = vmatpush.bf16.msra.mxu0 %v1907
    %2007 = vmatpush.bf16.msra.mxu0 %v1905
    %2008 = vmatpush.bf16.msra.mxu0 %v1903
    %2009 = vmatpush.bf16.msra.mxu0 %v1901
    %2010 = vmatmul.bf16.gmra.mxu0 %v1229
    %v2011 = vpop.f32.mrf.mxu0
    %v2012 = vadd.f32 0.0, %v2011
    %v2013 = vpop.f32.mrf.mxu0
    %v2014 = vadd.f32 0.0, %v2013
    %2015 = vmatmul.bf16.gmra.mxu0 %v1231
    %v2016 = vpop.f32.mrf.mxu0
    %v2017 = vadd.f32 0.0, %v2016
    %v2018 = vpop.f32.mrf.mxu0
    %v2019 = vadd.f32 0.0, %v2018
    %2020 = vdwg.mxu0
    %2021 = vmatpush.bf16.msra.mxu0 %v1931
    %2022 = vmatpush.bf16.msra.mxu0 %v1929
    %2023 = vmatpush.bf16.msra.mxu0 %v1927
    %2024 = vmatpush.bf16.msra.mxu0 %v1925
    %2025 = vmatpush.bf16.msra.mxu0 %v1923
    %2026 = vmatpush.bf16.msra.mxu0 %v1921
    %2027 = vmatpush.bf16.msra.mxu0 %v1919
    %2028 = vmatpush.bf16.msra.mxu0 %v1917
    %2029 = vmatmul.bf16.gmra.mxu0 %v1230
    %v2030 = vpop.f32.mrf.mxu0
    %v2031 = vadd.f32 %v2012, %v2030
    %v2032 = vpop.f32.mrf.mxu0
    %v2033 = vadd.f32 %v2014, %v2032
    %2034 = vmatmul.bf16.gmra.mxu0 %v1232
    %v2035 = vpop.f32.mrf.mxu0
    %v2036 = vadd.f32 %v2017, %v2035
    %v2037 = vpop.f32.mrf.mxu0
    %v2038 = vadd.f32 %v2019, %v2037
    %2039 = vdwg.mxu0
    %v2040 = vadd.f32 %v1724, %v1993
    %v2041 = vadd.f32 %v1762, %v2031
    %v2042 = vadd.f32 %v1726, %v1995
    %v2043 = vadd.f32 %v1764, %v2033
    %v2044 = vadd.f32 %v1729, %v1998
    %v2045 = vadd.f32 %v1767, %v2036
    %v2046 = vadd.f32 %v1731, %v2000
    %v2047 = vadd.f32 %v1769, %v2038
    %s2048 = scalar_lea.vmem [#allocation6], 2
    %v2049 = vld [vmem:[%s2048] sm:$0x3]
    %v2051 = vperm.slane %v2049, 0
    %v2052 = vperm.slane %v2049, 1
    %v2055 = vadd.f32 %v2040, %v2051
    %v2056 = vadd.f32 %v2041, %v2052
    %v2057 = vadd.f32 %v2042, %v2051
    %v2058 = vadd.f32 %v2043, %v2052
    %v2059 = vadd.f32 %v2044, %v2051
    %v2060 = vadd.f32 %v2045, %v2052
    %v2061 = vadd.f32 %v2046, %v2051
    %v2062 = vadd.f32 %v2047, %v2052
    %v2063 = vmax.f32 %v2055, 0.0
    %v2064 = vmax.f32 %v2056, 0.0
    %v2065 = vmax.f32 %v2057, 0.0
    %v2066 = vmax.f32 %v2058, 0.0
    %v2067 = vmax.f32 %v2059, 0.0
    %v2068 = vmax.f32 %v2060, 0.0
    %v2069 = vmax.f32 %v2061, 0.0
    %v2070 = vmax.f32 %v2062, 0.0
    %2071 = vst [vmem:[#allocation2 + $0x10] sm:$0xff] %v2063
    %2072 = vst [vmem:[#allocation2 + $0x18] sm:$0xff] %v2064
    %2073 = vst [vmem:[#allocation2 + $0x20] sm:$0xff] %v2065
    %2074 = vst [vmem:[#allocation2 + $0x28] sm:$0xff] %v2066
    %2075 = vst [vmem:[#allocation2 + $0x30] sm:$0xff] %v2067
    %2076 = vst [vmem:[#allocation2 + $0x38] sm:$0xff] %v2068
    %2077 = vst [vmem:[#allocation2 + $0x40] sm:$0xff] %v2069
    %2078 = vst [vmem:[#allocation2 + $0x48] sm:$0xff] %v2070
    %v2079 = vpack.c.bf16 %v2065, %v2063
    %v2080 = vpack.c.bf16 %v2066, %v2064
    %v2081 = vpack.c.bf16 %v2069, %v2067
    %v2082 = vpack.c.bf16 %v2070, %v2068
    %v2083 = vld [vmem:[#allocation2] sm:$0x80]
    %v2084 = vld [vmem:[#allocation2 + $0x8] sm:$0x80]
    %v2085 = vld [vmem:[#allocation2 + $0x10] sm:$0xff]
    %v2086 = vld [vmem:[#allocation2 + $0x18] sm:$0xff]
    %v2087 = vld [vmem:[#allocation2 + $0x20] sm:$0xff]
    %v2088 = vld [vmem:[#allocation2 + $0x28] sm:$0xff]
    %v2089 = vld [vmem:[#allocation2 + $0x30] sm:$0xff]
    %v2090 = vld [vmem:[#allocation2 + $0x38] sm:$0xff]
    %v2091 = vld [vmem:[#allocation2 + $0x40] sm:$0x7f]
    %v2092 = vld [vmem:[#allocation2 + $0x48] sm:$0x7f]
    %v2103 = vrot.slane %v2083, 7
    %v2104 = vrot.slane %v2085, 7
    %v2105 = vsel %vm155, %v2103, %v2104
    %v2106 = vrot.slane %v2084, 7
    %v2107 = vrot.slane %v2086, 7
    %v2108 = vsel %vm155, %v2106, %v2107
    %v2109 = vrot.slane %v2087, 7
    %v2110 = vsel %vm155, %v2104, %v2109
    %v2111 = vrot.slane %v2088, 7
    %v2112 = vsel %vm155, %v2107, %v2111
    %v2113 = vrot.slane %v2089, 7
    %v2114 = vsel %vm155, %v2109, %v2113
    %v2115 = vrot.slane %v2090, 7
    %v2116 = vsel %vm155, %v2111, %v2115
    %v2117 = vrot.slane %v2091, 7
    %v2118 = vsel %vm155, %v2113, %v2117
    %v2119 = vrot.slane %v2092, 7
    %v2120 = vsel %vm155, %v2115, %v2119
    %v2129 = vsel %vm141, %v2105, 0.0
    %v2130 = vsel %vm141, %v2108, 0.0
    %v2131 = vsel %vm142, %v2110, 0.0
    %v2132 = vsel %vm142, %v2112, 0.0
    %v2133 = vsel %vm143, %v2114, 0.0
    %v2134 = vsel %vm143, %v2116, 0.0
    %v2135 = vsel %vm144, %v2118, 0.0
    %v2136 = vsel %vm144, %v2120, 0.0
    %v2137 = vpack.c.bf16 %v2131, %v2129
    %v2138 = vpack.c.bf16 %v2132, %v2130
    %v2139 = vpack.c.bf16 %v2135, %v2133
    %v2140 = vpack.c.bf16 %v2136, %v2134
    %v2141 = vld [vmem:[#allocation2 + $0x10] sm:$0xfe]
    %v2142 = vld [vmem:[#allocation2 + $0x18] sm:$0xfe]
    %v2143 = vld [vmem:[#allocation2 + $0x20] sm:$0xff]
    %v2144 = vld [vmem:[#allocation2 + $0x28] sm:$0xff]
    %v2145 = vld [vmem:[#allocation2 + $0x30] sm:$0xff]
    %v2146 = vld [vmem:[#allocation2 + $0x38] sm:$0xff]
    %v2147 = vld [vmem:[#allocation2 + $0x40] sm:$0xff]
    %v2148 = vld [vmem:[#allocation2 + $0x48] sm:$0xff]
    %v2149 = vld [vmem:[#allocation2 + $0x50] sm:$0x1]
    %v2150 = vld [vmem:[#allocation2 + $0x58] sm:$0x1]
    %v2161 = vrot.slane %v2141, 1
    %v2162 = vrot.slane %v2143, 1
    %v2163 = vsel %vm222, %v2161, %v2162
    %v2164 = vrot.slane %v2142, 1
    %v2165 = vrot.slane %v2144, 1
    %v2166 = vsel %vm222, %v2164, %v2165
    %v2167 = vrot.slane %v2145, 1
    %v2168 = vsel %vm222, %v2162, %v2167
    %v2169 = vrot.slane %v2146, 1
    %v2170 = vsel %vm222, %v2165, %v2169
    %v2171 = vrot.slane %v2147, 1
    %v2172 = vsel %vm222, %v2167, %v2171
    %v2173 = vrot.slane %v2148, 1
    %v2174 = vsel %vm222, %v2169, %v2173
    %v2175 = vrot.slane %v2149, 1
    %v2176 = vsel %vm222, %v2171, %v2175
    %v2177 = vrot.slane %v2150, 1
    %v2178 = vsel %vm222, %v2173, %v2177
    %v2187 = vsel %vm208, %v2163, 0.0
    %v2188 = vsel %vm208, %v2166, 0.0
    %v2189 = vsel %vm209, %v2168, 0.0
    %v2190 = vsel %vm209, %v2170, 0.0
    %v2191 = vsel %vm210, %v2172, 0.0
    %v2192 = vsel %vm210, %v2174, 0.0
    %v2193 = vsel %vm211, %v2176, 0.0
    %v2194 = vsel %vm211, %v2178, 0.0
    %v2195 = vpack.c.bf16 %v2189, %v2187
    %v2196 = vpack.c.bf16 %v2190, %v2188
    %v2197 = vpack.c.bf16 %v2193, %v2191
    %v2198 = vpack.c.bf16 %v2194, %v2192
    %s2199 = scalar_lea.vmem [#allocation4], 1536
    %v2200 = vld [vmem:[%s2199] sm:$0xff]
    %v2201 = vld [vmem:[%s2199 + $0x8] sm:$0xff]
    %v2202 = vld [vmem:[%s2199 + $0x10] sm:$0xff]
    %v2203 = vld [vmem:[%s2199 + $0x18] sm:$0xff]
    %v2204 = vld [vmem:[%s2199 + $0x20] sm:$0xff]
    %v2205 = vld [vmem:[%s2199 + $0x28] sm:$0xff]
    %v2206 = vld [vmem:[%s2199 + $0x30] sm:$0xff]
    %v2207 = vld [vmem:[%s2199 + $0x38] sm:$0xff]
    %v2208 = vld [vmem:[%s2199 + $0x40] sm:$0xff]
    %v2209 = vld [vmem:[%s2199 + $0x48] sm:$0xff]
    %v2210 = vld [vmem:[%s2199 + $0x50] sm:$0xff]
    %v2211 = vld [vmem:[%s2199 + $0x58] sm:$0xff]
    %v2212 = vld [vmem:[%s2199 + $0x60] sm:$0xff]
    %v2213 = vld [vmem:[%s2199 + $0x68] sm:$0xff]
    %v2214 = vld [vmem:[%s2199 + $0x70] sm:$0xff]
    %v2215 = vld [vmem:[%s2199 + $0x78] sm:$0xff]
    %v2216 = vld [vmem:[%s2199 + $0x80] sm:$0xff]
    %v2217 = vld [vmem:[%s2199 + $0x88] sm:$0xff]
    %v2218 = vld [vmem:[%s2199 + $0x90] sm:$0xff]
    %v2219 = vld [vmem:[%s2199 + $0x98] sm:$0xff]
    %v2220 = vld [vmem:[%s2199 + $0xa0] sm:$0xff]
    %v2221 = vld [vmem:[%s2199 + $0xa8] sm:$0xff]
    %v2222 = vld [vmem:[%s2199 + $0xb0] sm:$0xff]
    %v2223 = vld [vmem:[%s2199 + $0xb8] sm:$0xff]
    %v2224 = vld [vmem:[%s2199 + $0xc0] sm:$0xff]
    %v2225 = vld [vmem:[%s2199 + $0xc8] sm:$0xff]
    %v2226 = vld [vmem:[%s2199 + $0xd0] sm:$0xff]
    %v2227 = vld [vmem:[%s2199 + $0xd8] sm:$0xff]
    %v2228 = vld [vmem:[%s2199 + $0xe0] sm:$0xff]
    %v2229 = vld [vmem:[%s2199 + $0xe8] sm:$0xff]
    %v2230 = vld [vmem:[%s2199 + $0xf0] sm:$0xff]
    %v2231 = vld [vmem:[%s2199 + $0xf8] sm:$0xff]
    %s2232 = scalar_lea.vmem [#allocation4], 1792
    %v2233 = vld [vmem:[%s2232] sm:$0xff]
    %v2234 = vld [vmem:[%s2232 + $0x8] sm:$0xff]
    %v2235 = vld [vmem:[%s2232 + $0x10] sm:$0xff]
    %v2236 = vld [vmem:[%s2232 + $0x18] sm:$0xff]
    %v2237 = vld [vmem:[%s2232 + $0x20] sm:$0xff]
    %v2238 = vld [vmem:[%s2232 + $0x28] sm:$0xff]
    %v2239 = vld [vmem:[%s2232 + $0x30] sm:$0xff]
    %v2240 = vld [vmem:[%s2232 + $0x38] sm:$0xff]
    %v2241 = vld [vmem:[%s2232 + $0x40] sm:$0xff]
    %v2242 = vld [vmem:[%s2232 + $0x48] sm:$0xff]
    %v2243 = vld [vmem:[%s2232 + $0x50] sm:$0xff]
    %v2244 = vld [vmem:[%s2232 + $0x58] sm:$0xff]
    %v2245 = vld [vmem:[%s2232 + $0x60] sm:$0xff]
    %v2246 = vld [vmem:[%s2232 + $0x68] sm:$0xff]
    %v2247 = vld [vmem:[%s2232 + $0x70] sm:$0xff]
    %v2248 = vld [vmem:[%s2232 + $0x78] sm:$0xff]
    %v2249 = vld [vmem:[%s2232 + $0x80] sm:$0xff]
    %v2250 = vld [vmem:[%s2232 + $0x88] sm:$0xff]
    %v2251 = vld [vmem:[%s2232 + $0x90] sm:$0xff]
    %v2252 = vld [vmem:[%s2232 + $0x98] sm:$0xff]
    %v2253 = vld [vmem:[%s2232 + $0xa0] sm:$0xff]
    %v2254 = vld [vmem:[%s2232 + $0xa8] sm:$0xff]
    %v2255 = vld [vmem:[%s2232 + $0xb0] sm:$0xff]
    %v2256 = vld [vmem:[%s2232 + $0xb8] sm:$0xff]
    %v2257 = vld [vmem:[%s2232 + $0xc0] sm:$0xff]
    %v2258 = vld [vmem:[%s2232 + $0xc8] sm:$0xff]
    %v2259 = vld [vmem:[%s2232 + $0xd0] sm:$0xff]
    %v2260 = vld [vmem:[%s2232 + $0xd8] sm:$0xff]
    %v2261 = vld [vmem:[%s2232 + $0xe0] sm:$0xff]
    %v2262 = vld [vmem:[%s2232 + $0xe8] sm:$0xff]
    %v2263 = vld [vmem:[%s2232 + $0xf0] sm:$0xff]
    %v2264 = vld [vmem:[%s2232 + $0xf8] sm:$0xff]
    %v2297 = vunpack.c.l.b16 %v2233
    %v2298 = vunpack.c.h.b16 %v2233
    %v2299 = vunpack.c.l.b16 %v2234
    %v2300 = vunpack.c.h.b16 %v2234
    %v2301 = vunpack.c.l.b16 %v2235
    %v2302 = vunpack.c.h.b16 %v2235
    %v2303 = vunpack.c.l.b16 %v2236
    %v2304 = vunpack.c.h.b16 %v2236
    %v2305 = vunpack.c.l.b16 %v2237
    %v2306 = vunpack.c.h.b16 %v2237
    %v2307 = vunpack.c.l.b16 %v2238
    %v2308 = vunpack.c.h.b16 %v2238
    %v2309 = vunpack.c.l.b16 %v2239
    %v2310 = vunpack.c.h.b16 %v2239
    %v2311 = vunpack.c.l.b16 %v2240
    %v2312 = vunpack.c.h.b16 %v2240
    %v2313 = vunpack.c.l.b16 %v2241
    %v2314 = vunpack.c.h.b16 %v2241
    %v2315 = vunpack.c.l.b16 %v2242
    %v2316 = vunpack.c.h.b16 %v2242
    %v2317 = vunpack.c.l.b16 %v2243
    %v2318 = vunpack.c.h.b16 %v2243
    %v2319 = vunpack.c.l.b16 %v2244
    %v2320 = vunpack.c.h.b16 %v2244
    %v2321 = vunpack.c.l.b16 %v2245
    %v2322 = vunpack.c.h.b16 %v2245
    %v2323 = vunpack.c.l.b16 %v2246
    %v2324 = vunpack.c.h.b16 %v2246
    %v2325 = vunpack.c.l.b16 %v2247
    %v2326 = vunpack.c.h.b16 %v2247
    %v2327 = vunpack.c.l.b16 %v2248
    %v2328 = vunpack.c.h.b16 %v2248
    %v2329 = vunpack.c.l.b16 %v2249
    %v2330 = vunpack.c.h.b16 %v2249
    %v2331 = vunpack.c.l.b16 %v2250
    %v2332 = vunpack.c.h.b16 %v2250
    %v2333 = vunpack.c.l.b16 %v2251
    %v2334 = vunpack.c.h.b16 %v2251
    %v2335 = vunpack.c.l.b16 %v2252
    %v2336 = vunpack.c.h.b16 %v2252
    %v2337 = vunpack.c.l.b16 %v2253
    %v2338 = vunpack.c.h.b16 %v2253
    %v2339 = vunpack.c.l.b16 %v2254
    %v2340 = vunpack.c.h.b16 %v2254
    %v2341 = vunpack.c.l.b16 %v2255
    %v2342 = vunpack.c.h.b16 %v2255
    %v2343 = vunpack.c.l.b16 %v2256
    %v2344 = vunpack.c.h.b16 %v2256
    %v2345 = vunpack.c.l.b16 %v2257
    %v2346 = vunpack.c.h.b16 %v2257
    %v2347 = vunpack.c.l.b16 %v2258
    %v2348 = vunpack.c.h.b16 %v2258
    %v2349 = vunpack.c.l.b16 %v2259
    %v2350 = vunpack.c.h.b16 %v2259
    %v2351 = vunpack.c.l.b16 %v2260
    %v2352 = vunpack.c.h.b16 %v2260
    %v2353 = vunpack.c.l.b16 %v2261
    %v2354 = vunpack.c.h.b16 %v2261
    %v2355 = vunpack.c.l.b16 %v2262
    %v2356 = vunpack.c.h.b16 %v2262
    %v2357 = vunpack.c.l.b16 %v2263
    %v2358 = vunpack.c.h.b16 %v2263
    %v2359 = vunpack.c.l.b16 %v2264
    %v2360 = vunpack.c.h.b16 %v2264
    %v2361 = vpack.c.b16 %v2299, %v2297
    %v2362 = vpack.c.b16 %v2300, %v2298
    %v2363 = vpack.c.b16 %v2303, %v2301
    %v2364 = vpack.c.b16 %v2304, %v2302
    %v2365 = vpack.c.b16 %v2307, %v2305
    %v2366 = vpack.c.b16 %v2308, %v2306
    %v2367 = vpack.c.b16 %v2311, %v2309
    %v2368 = vpack.c.b16 %v2312, %v2310
    %v2369 = vpack.c.b16 %v2315, %v2313
    %v2370 = vpack.c.b16 %v2316, %v2314
    %v2371 = vpack.c.b16 %v2319, %v2317
    %v2372 = vpack.c.b16 %v2320, %v2318
    %v2373 = vpack.c.b16 %v2323, %v2321
    %v2374 = vpack.c.b16 %v2324, %v2322
    %v2375 = vpack.c.b16 %v2327, %v2325
    %v2376 = vpack.c.b16 %v2328, %v2326
    %v2377 = vpack.c.b16 %v2331, %v2329
    %v2378 = vpack.c.b16 %v2332, %v2330
    %v2379 = vpack.c.b16 %v2335, %v2333
    %v2380 = vpack.c.b16 %v2336, %v2334
    %v2381 = vpack.c.b16 %v2339, %v2337
    %v2382 = vpack.c.b16 %v2340, %v2338
    %v2383 = vpack.c.b16 %v2343, %v2341
    %v2384 = vpack.c.b16 %v2344, %v2342
    %v2385 = vpack.c.b16 %v2347, %v2345
    %v2386 = vpack.c.b16 %v2348, %v2346
    %v2387 = vpack.c.b16 %v2351, %v2349
    %v2388 = vpack.c.b16 %v2352, %v2350
    %v2389 = vpack.c.b16 %v2355, %v2353
    %v2390 = vpack.c.b16 %v2356, %v2354
    %v2391 = vpack.c.b16 %v2359, %v2357
    %v2392 = vpack.c.b16 %v2360, %v2358
    %2425 = vmatpush.bf16.msra.mxu0 %v2375
    %2426 = vmatpush.bf16.msra.mxu0 %v2373
    %2427 = vmatpush.bf16.msra.mxu0 %v2371
    %2428 = vmatpush.bf16.msra.mxu0 %v2369
    %2429 = vmatpush.bf16.msra.mxu0 %v2367
    %2430 = vmatpush.bf16.msra.mxu0 %v2365
    %2431 = vmatpush.bf16.msra.mxu0 %v2363
    %2432 = vmatpush.bf16.msra.mxu0 %v2361
    %2433 = vmatmul.bf16.gmra.mxu0 %v2079
    %v2434 = vpop.f32.mrf.mxu0
    %v2435 = vadd.f32 0.0, %v2434
    %v2436 = vpop.f32.mrf.mxu0
    %v2437 = vadd.f32 0.0, %v2436
    %2438 = vmatmul.bf16.gmra.mxu0 %v2081
    %v2439 = vpop.f32.mrf.mxu0
    %v2440 = vadd.f32 0.0, %v2439
    %v2441 = vpop.f32.mrf.mxu0
    %v2442 = vadd.f32 0.0, %v2441
    %2443 = vdwg.mxu0
    %2444 = vmatpush.bf16.msra.mxu0 %v2391
    %2445 = vmatpush.bf16.msra.mxu0 %v2389
    %2446 = vmatpush.bf16.msra.mxu0 %v2387
    %2447 = vmatpush.bf16.msra.mxu0 %v2385
    %2448 = vmatpush.bf16.msra.mxu0 %v2383
    %2449 = vmatpush.bf16.msra.mxu0 %v2381
    %2450 = vmatpush.bf16.msra.mxu0 %v2379
    %2451 = vmatpush.bf16.msra.mxu0 %v2377
    %2452 = vmatmul.bf16.gmra.mxu0 %v2080
    %v2453 = vpop.f32.mrf.mxu0
    %v2454 = vadd.f32 %v2435, %v2453
    %v2455 = vpop.f32.mrf.mxu0
    %v2456 = vadd.f32 %v2437, %v2455
    %2457 = vmatmul.bf16.gmra.mxu0 %v2082
    %v2458 = vpop.f32.mrf.mxu0
    %v2459 = vadd.f32 %v2440, %v2458
    %v2460 = vpop.f32.mrf.mxu0
    %v2461 = vadd.f32 %v2442, %v2460
    %2462 = vdwg.mxu0
    %2463 = vmatpush.bf16.msra.mxu0 %v2376
    %2464 = vmatpush.bf16.msra.mxu0 %v2374
    %2465 = vmatpush.bf16.msra.mxu0 %v2372
    %2466 = vmatpush.bf16.msra.mxu0 %v2370
    %2467 = vmatpush.bf16.msra.mxu0 %v2368
    %2468 = vmatpush.bf16.msra.mxu0 %v2366
    %2469 = vmatpush.bf16.msra.mxu0 %v2364
    %2470 = vmatpush.bf16.msra.mxu0 %v2362
    %2471 = vmatmul.bf16.gmra.mxu0 %v2079
    %v2472 = vpop.f32.mrf.mxu0
    %v2473 = vadd.f32 0.0, %v2472
    %v2474 = vpop.f32.mrf.mxu0
    %v2475 = vadd.f32 0.0, %v2474
    %2476 = vmatmul.bf16.gmra.mxu0 %v2081
    %v2477 = vpop.f32.mrf.mxu0
    %v2478 = vadd.f32 0.0, %v2477
    %v2479 = vpop.f32.mrf.mxu0
    %v2480 = vadd.f32 0.0, %v2479
    %2481 = vdwg.mxu0
    %2482 = vmatpush.bf16.msra.mxu0 %v2392
    %2483 = vmatpush.bf16.msra.mxu0 %v2390
    %2484 = vmatpush.bf16.msra.mxu0 %v2388
    %2485 = vmatpush.bf16.msra.mxu0 %v2386
    %2486 = vmatpush.bf16.msra.mxu0 %v2384
    %2487 = vmatpush.bf16.msra.mxu0 %v2382
    %2488 = vmatpush.bf16.msra.mxu0 %v2380
    %2489 = vmatpush.bf16.msra.mxu0 %v2378
    %2490 = vmatmul.bf16.gmra.mxu0 %v2080
    %v2491 = vpop.f32.mrf.mxu0
    %v2492 = vadd.f32 %v2473, %v2491
    %v2493 = vpop.f32.mrf.mxu0
    %v2494 = vadd.f32 %v2475, %v2493
    %2495 = vmatmul.bf16.gmra.mxu0 %v2082
    %v2496 = vpop.f32.mrf.mxu0
    %v2497 = vadd.f32 %v2478, %v2496
    %v2498 = vpop.f32.mrf.mxu0
    %v2499 = vadd.f32 %v2480, %v2498
    %2500 = vdwg.mxu0
    %v2533 = vunpack.c.l.b16 %v2200
    %v2534 = vunpack.c.h.b16 %v2200
    %v2535 = vunpack.c.l.b16 %v2201
    %v2536 = vunpack.c.h.b16 %v2201
    %v2537 = vunpack.c.l.b16 %v2202
    %v2538 = vunpack.c.h.b16 %v2202
    %v2539 = vunpack.c.l.b16 %v2203
    %v2540 = vunpack.c.h.b16 %v2203
    %v2541 = vunpack.c.l.b16 %v2204
    %v2542 = vunpack.c.h.b16 %v2204
    %v2543 = vunpack.c.l.b16 %v2205
    %v2544 = vunpack.c.h.b16 %v2205
    %v2545 = vunpack.c.l.b16 %v2206
    %v2546 = vunpack.c.h.b16 %v2206
    %v2547 = vunpack.c.l.b16 %v2207
    %v2548 = vunpack.c.h.b16 %v2207
    %v2549 = vunpack.c.l.b16 %v2208
    %v2550 = vunpack.c.h.b16 %v2208
    %v2551 = vunpack.c.l.b16 %v2209
    %v2552 = vunpack.c.h.b16 %v2209
    %v2553 = vunpack.c.l.b16 %v2210
    %v2554 = vunpack.c.h.b16 %v2210
    %v2555 = vunpack.c.l.b16 %v2211
    %v2556 = vunpack.c.h.b16 %v2211
    %v2557 = vunpack.c.l.b16 %v2212
    %v2558 = vunpack.c.h.b16 %v2212
    %v2559 = vunpack.c.l.b16 %v2213
    %v2560 = vunpack.c.h.b16 %v2213
    %v2561 = vunpack.c.l.b16 %v2214
    %v2562 = vunpack.c.h.b16 %v2214
    %v2563 = vunpack.c.l.b16 %v2215
    %v2564 = vunpack.c.h.b16 %v2215
    %v2565 = vunpack.c.l.b16 %v2216
    %v2566 = vunpack.c.h.b16 %v2216
    %v2567 = vunpack.c.l.b16 %v2217
    %v2568 = vunpack.c.h.b16 %v2217
    %v2569 = vunpack.c.l.b16 %v2218
    %v2570 = vunpack.c.h.b16 %v2218
    %v2571 = vunpack.c.l.b16 %v2219
    %v2572 = vunpack.c.h.b16 %v2219
    %v2573 = vunpack.c.l.b16 %v2220
    %v2574 = vunpack.c.h.b16 %v2220
    %v2575 = vunpack.c.l.b16 %v2221
    %v2576 = vunpack.c.h.b16 %v2221
    %v2577 = vunpack.c.l.b16 %v2222
    %v2578 = vunpack.c.h.b16 %v2222
    %v2579 = vunpack.c.l.b16 %v2223
    %v2580 = vunpack.c.h.b16 %v2223
    %v2581 = vunpack.c.l.b16 %v2224
    %v2582 = vunpack.c.h.b16 %v2224
    %v2583 = vunpack.c.l.b16 %v2225
    %v2584 = vunpack.c.h.b16 %v2225
    %v2585 = vunpack.c.l.b16 %v2226
    %v2586 = vunpack.c.h.b16 %v2226
    %v2587 = vunpack.c.l.b16 %v2227
    %v2588 = vunpack.c.h.b16 %v2227
    %v2589 = vunpack.c.l.b16 %v2228
    %v2590 = vunpack.c.h.b16 %v2228
    %v2591 = vunpack.c.l.b16 %v2229
    %v2592 = vunpack.c.h.b16 %v2229
    %v2593 = vunpack.c.l.b16 %v2230
    %v2594 = vunpack.c.h.b16 %v2230
    %v2595 = vunpack.c.l.b16 %v2231
    %v2596 = vunpack.c.h.b16 %v2231
    %v2597 = vpack.c.b16 %v2535, %v2533
    %v2598 = vpack.c.b16 %v2536, %v2534
    %v2599 = vpack.c.b16 %v2539, %v2537
    %v2600 = vpack.c.b16 %v2540, %v2538
    %v2601 = vpack.c.b16 %v2543, %v2541
    %v2602 = vpack.c.b16 %v2544, %v2542
    %v2603 = vpack.c.b16 %v2547, %v2545
    %v2604 = vpack.c.b16 %v2548, %v2546
    %v2605 = vpack.c.b16 %v2551, %v2549
    %v2606 = vpack.c.b16 %v2552, %v2550
    %v2607 = vpack.c.b16 %v2555, %v2553
    %v2608 = vpack.c.b16 %v2556, %v2554
    %v2609 = vpack.c.b16 %v2559, %v2557
    %v2610 = vpack.c.b16 %v2560, %v2558
    %v2611 = vpack.c.b16 %v2563, %v2561
    %v2612 = vpack.c.b16 %v2564, %v2562
    %v2613 = vpack.c.b16 %v2567, %v2565
    %v2614 = vpack.c.b16 %v2568, %v2566
    %v2615 = vpack.c.b16 %v2571, %v2569
    %v2616 = vpack.c.b16 %v2572, %v2570
    %v2617 = vpack.c.b16 %v2575, %v2573
    %v2618 = vpack.c.b16 %v2576, %v2574
    %v2619 = vpack.c.b16 %v2579, %v2577
    %v2620 = vpack.c.b16 %v2580, %v2578
    %v2621 = vpack.c.b16 %v2583, %v2581
    %v2622 = vpack.c.b16 %v2584, %v2582
    %v2623 = vpack.c.b16 %v2587, %v2585
    %v2624 = vpack.c.b16 %v2588, %v2586
    %v2625 = vpack.c.b16 %v2591, %v2589
    %v2626 = vpack.c.b16 %v2592, %v2590
    %v2627 = vpack.c.b16 %v2595, %v2593
    %v2628 = vpack.c.b16 %v2596, %v2594
    %2661 = vmatpush.bf16.msra.mxu0 %v2611
    %2662 = vmatpush.bf16.msra.mxu0 %v2609
    %2663 = vmatpush.bf16.msra.mxu0 %v2607
    %2664 = vmatpush.bf16.msra.mxu0 %v2605
    %2665 = vmatpush.bf16.msra.mxu0 %v2603
    %2666 = vmatpush.bf16.msra.mxu0 %v2601
    %2667 = vmatpush.bf16.msra.mxu0 %v2599
    %2668 = vmatpush.bf16.msra.mxu0 %v2597
    %2669 = vmatmul.bf16.gmra.mxu0 %v2137
    %v2670 = vpop.f32.mrf.mxu0
    %v2671 = vadd.f32 %v2454, %v2670
    %v2672 = vpop.f32.mrf.mxu0
    %v2673 = vadd.f32 %v2456, %v2672
    %2674 = vmatmul.bf16.gmra.mxu0 %v2139
    %v2675 = vpop.f32.mrf.mxu0
    %v2676 = vadd.f32 %v2459, %v2675
    %v2677 = vpop.f32.mrf.mxu0
    %v2678 = vadd.f32 %v2461, %v2677
    %2679 = vdwg.mxu0
    %2680 = vmatpush.bf16.msra.mxu0 %v2627
    %2681 = vmatpush.bf16.msra.mxu0 %v2625
    %2682 = vmatpush.bf16.msra.mxu0 %v2623
    %2683 = vmatpush.bf16.msra.mxu0 %v2621
    %2684 = vmatpush.bf16.msra.mxu0 %v2619
    %2685 = vmatpush.bf16.msra.mxu0 %v2617
    %2686 = vmatpush.bf16.msra.mxu0 %v2615
    %2687 = vmatpush.bf16.msra.mxu0 %v2613
    %2688 = vmatmul.bf16.gmra.mxu0 %v2138
    %v2689 = vpop.f32.mrf.mxu0
    %v2690 = vadd.f32 %v2671, %v2689
    %v2691 = vpop.f32.mrf.mxu0
    %v2692 = vadd.f32 %v2673, %v2691
    %2693 = vmatmul.bf16.gmra.mxu0 %v2140
    %v2694 = vpop.f32.mrf.mxu0
    %v2695 = vadd.f32 %v2676, %v2694
    %v2696 = vpop.f32.mrf.mxu0
    %v2697 = vadd.f32 %v2678, %v2696
    %2698 = vdwg.mxu0
    %2699 = vmatpush.bf16.msra.mxu0 %v2612
    %2700 = vmatpush.bf16.msra.mxu0 %v2610
    %2701 = vmatpush.bf16.msra.mxu0 %v2608
    %2702 = vmatpush.bf16.msra.mxu0 %v2606
    %2703 = vmatpush.bf16.msra.mxu0 %v2604
    %2704 = vmatpush.bf16.msra.mxu0 %v2602
    %2705 = vmatpush.bf16.msra.mxu0 %v2600
    %2706 = vmatpush.bf16.msra.mxu0 %v2598
    %2707 = vmatmul.bf16.gmra.mxu0 %v2137
    %v2708 = vpop.f32.mrf.mxu0
    %v2709 = vadd.f32 %v2492, %v2708
    %v2710 = vpop.f32.mrf.mxu0
    %v2711 = vadd.f32 %v2494, %v2710
    %2712 = vmatmul.bf16.gmra.mxu0 %v2139
    %v2713 = vpop.f32.mrf.mxu0
    %v2714 = vadd.f32 %v2497, %v2713
    %v2715 = vpop.f32.mrf.mxu0
    %v2716 = vadd.f32 %v2499, %v2715
    %2717 = vdwg.mxu0
    %2718 = vmatpush.bf16.msra.mxu0 %v2628
    %2719 = vmatpush.bf16.msra.mxu0 %v2626
    %2720 = vmatpush.bf16.msra.mxu0 %v2624
    %2721 = vmatpush.bf16.msra.mxu0 %v2622
    %2722 = vmatpush.bf16.msra.mxu0 %v2620
    %2723 = vmatpush.bf16.msra.mxu0 %v2618
    %2724 = vmatpush.bf16.msra.mxu0 %v2616
    %2725 = vmatpush.bf16.msra.mxu0 %v2614
    %2726 = vmatmul.bf16.gmra.mxu0 %v2138
    %v2727 = vpop.f32.mrf.mxu0
    %v2728 = vadd.f32 %v2709, %v2727
    %v2729 = vpop.f32.mrf.mxu0
    %v2730 = vadd.f32 %v2711, %v2729
    %2731 = vmatmul.bf16.gmra.mxu0 %v2140
    %v2732 = vpop.f32.mrf.mxu0
    %v2733 = vadd.f32 %v2714, %v2732
    %v2734 = vpop.f32.mrf.mxu0
    %v2735 = vadd.f32 %v2716, %v2734
    %2736 = vdwg.mxu0
    %s2737 = scalar_lea.vmem [#allocation4], 2048
    %v2738 = vld [vmem:[%s2737] sm:$0xff]
    %v2739 = vld [vmem:[%s2737 + $0x8] sm:$0xff]
    %v2740 = vld [vmem:[%s2737 + $0x10] sm:$0xff]
    %v2741 = vld [vmem:[%s2737 + $0x18] sm:$0xff]
    %v2742 = vld [vmem:[%s2737 + $0x20] sm:$0xff]
    %v2743 = vld [vmem:[%s2737 + $0x28] sm:$0xff]
    %v2744 = vld [vmem:[%s2737 + $0x30] sm:$0xff]
    %v2745 = vld [vmem:[%s2737 + $0x38] sm:$0xff]
    %v2746 = vld [vmem:[%s2737 + $0x40] sm:$0xff]
    %v2747 = vld [vmem:[%s2737 + $0x48] sm:$0xff]
    %v2748 = vld [vmem:[%s2737 + $0x50] sm:$0xff]
    %v2749 = vld [vmem:[%s2737 + $0x58] sm:$0xff]
    %v2750 = vld [vmem:[%s2737 + $0x60] sm:$0xff]
    %v2751 = vld [vmem:[%s2737 + $0x68] sm:$0xff]
    %v2752 = vld [vmem:[%s2737 + $0x70] sm:$0xff]
    %v2753 = vld [vmem:[%s2737 + $0x78] sm:$0xff]
    %v2754 = vld [vmem:[%s2737 + $0x80] sm:$0xff]
    %v2755 = vld [vmem:[%s2737 + $0x88] sm:$0xff]
    %v2756 = vld [vmem:[%s2737 + $0x90] sm:$0xff]
    %v2757 = vld [vmem:[%s2737 + $0x98] sm:$0xff]
    %v2758 = vld [vmem:[%s2737 + $0xa0] sm:$0xff]
    %v2759 = vld [vmem:[%s2737 + $0xa8] sm:$0xff]
    %v2760 = vld [vmem:[%s2737 + $0xb0] sm:$0xff]
    %v2761 = vld [vmem:[%s2737 + $0xb8] sm:$0xff]
    %v2762 = vld [vmem:[%s2737 + $0xc0] sm:$0xff]
    %v2763 = vld [vmem:[%s2737 + $0xc8] sm:$0xff]
    %v2764 = vld [vmem:[%s2737 + $0xd0] sm:$0xff]
    %v2765 = vld [vmem:[%s2737 + $0xd8] sm:$0xff]
    %v2766 = vld [vmem:[%s2737 + $0xe0] sm:$0xff]
    %v2767 = vld [vmem:[%s2737 + $0xe8] sm:$0xff]
    %v2768 = vld [vmem:[%s2737 + $0xf0] sm:$0xff]
    %v2769 = vld [vmem:[%s2737 + $0xf8] sm:$0xff]
    %v2802 = vunpack.c.l.b16 %v2738
    %v2803 = vunpack.c.h.b16 %v2738
    %v2804 = vunpack.c.l.b16 %v2739
    %v2805 = vunpack.c.h.b16 %v2739
    %v2806 = vunpack.c.l.b16 %v2740
    %v2807 = vunpack.c.h.b16 %v2740
    %v2808 = vunpack.c.l.b16 %v2741
    %v2809 = vunpack.c.h.b16 %v2741
    %v2810 = vunpack.c.l.b16 %v2742
    %v2811 = vunpack.c.h.b16 %v2742
    %v2812 = vunpack.c.l.b16 %v2743
    %v2813 = vunpack.c.h.b16 %v2743
    %v2814 = vunpack.c.l.b16 %v2744
    %v2815 = vunpack.c.h.b16 %v2744
    %v2816 = vunpack.c.l.b16 %v2745
    %v2817 = vunpack.c.h.b16 %v2745
    %v2818 = vunpack.c.l.b16 %v2746
    %v2819 = vunpack.c.h.b16 %v2746
    %v2820 = vunpack.c.l.b16 %v2747
    %v2821 = vunpack.c.h.b16 %v2747
    %v2822 = vunpack.c.l.b16 %v2748
    %v2823 = vunpack.c.h.b16 %v2748
    %v2824 = vunpack.c.l.b16 %v2749
    %v2825 = vunpack.c.h.b16 %v2749
    %v2826 = vunpack.c.l.b16 %v2750
    %v2827 = vunpack.c.h.b16 %v2750
    %v2828 = vunpack.c.l.b16 %v2751
    %v2829 = vunpack.c.h.b16 %v2751
    %v2830 = vunpack.c.l.b16 %v2752
    %v2831 = vunpack.c.h.b16 %v2752
    %v2832 = vunpack.c.l.b16 %v2753
    %v2833 = vunpack.c.h.b16 %v2753
    %v2834 = vunpack.c.l.b16 %v2754
    %v2835 = vunpack.c.h.b16 %v2754
    %v2836 = vunpack.c.l.b16 %v2755
    %v2837 = vunpack.c.h.b16 %v2755
    %v2838 = vunpack.c.l.b16 %v2756
    %v2839 = vunpack.c.h.b16 %v2756
    %v2840 = vunpack.c.l.b16 %v2757
    %v2841 = vunpack.c.h.b16 %v2757
    %v2842 = vunpack.c.l.b16 %v2758
    %v2843 = vunpack.c.h.b16 %v2758
    %v2844 = vunpack.c.l.b16 %v2759
    %v2845 = vunpack.c.h.b16 %v2759
    %v2846 = vunpack.c.l.b16 %v2760
    %v2847 = vunpack.c.h.b16 %v2760
    %v2848 = vunpack.c.l.b16 %v2761
    %v2849 = vunpack.c.h.b16 %v2761
    %v2850 = vunpack.c.l.b16 %v2762
    %v2851 = vunpack.c.h.b16 %v2762
    %v2852 = vunpack.c.l.b16 %v2763
    %v2853 = vunpack.c.h.b16 %v2763
    %v2854 = vunpack.c.l.b16 %v2764
    %v2855 = vunpack.c.h.b16 %v2764
    %v2856 = vunpack.c.l.b16 %v2765
    %v2857 = vunpack.c.h.b16 %v2765
    %v2858 = vunpack.c.l.b16 %v2766
    %v2859 = vunpack.c.h.b16 %v2766
    %v2860 = vunpack.c.l.b16 %v2767
    %v2861 = vunpack.c.h.b16 %v2767
    %v2862 = vunpack.c.l.b16 %v2768
    %v2863 = vunpack.c.h.b16 %v2768
    %v2864 = vunpack.c.l.b16 %v2769
    %v2865 = vunpack.c.h.b16 %v2769
    %v2866 = vpack.c.b16 %v2804, %v2802
    %v2867 = vpack.c.b16 %v2805, %v2803
    %v2868 = vpack.c.b16 %v2808, %v2806
    %v2869 = vpack.c.b16 %v2809, %v2807
    %v2870 = vpack.c.b16 %v2812, %v2810
    %v2871 = vpack.c.b16 %v2813, %v2811
    %v2872 = vpack.c.b16 %v2816, %v2814
    %v2873 = vpack.c.b16 %v2817, %v2815
    %v2874 = vpack.c.b16 %v2820, %v2818
    %v2875 = vpack.c.b16 %v2821, %v2819
    %v2876 = vpack.c.b16 %v2824, %v2822
    %v2877 = vpack.c.b16 %v2825, %v2823
    %v2878 = vpack.c.b16 %v2828, %v2826
    %v2879 = vpack.c.b16 %v2829, %v2827
    %v2880 = vpack.c.b16 %v2832, %v2830
    %v2881 = vpack.c.b16 %v2833, %v2831
    %v2882 = vpack.c.b16 %v2836, %v2834
    %v2883 = vpack.c.b16 %v2837, %v2835
    %v2884 = vpack.c.b16 %v2840, %v2838
    %v2885 = vpack.c.b16 %v2841, %v2839
    %v2886 = vpack.c.b16 %v2844, %v2842
    %v2887 = vpack.c.b16 %v2845, %v2843
    %v2888 = vpack.c.b16 %v2848, %v2846
    %v2889 = vpack.c.b16 %v2849, %v2847
    %v2890 = vpack.c.b16 %v2852, %v2850
    %v2891 = vpack.c.b16 %v2853, %v2851
    %v2892 = vpack.c.b16 %v2856, %v2854
    %v2893 = vpack.c.b16 %v2857, %v2855
    %v2894 = vpack.c.b16 %v2860, %v2858
    %v2895 = vpack.c.b16 %v2861, %v2859
    %v2896 = vpack.c.b16 %v2864, %v2862
    %v2897 = vpack.c.b16 %v2865, %v2863
    %2930 = vmatpush.bf16.msra.mxu0 %v2880
    %2931 = vmatpush.bf16.msra.mxu0 %v2878
    %2932 = vmatpush.bf16.msra.mxu0 %v2876
    %2933 = vmatpush.bf16.msra.mxu0 %v2874
    %2934 = vmatpush.bf16.msra.mxu0 %v2872
    %2935 = vmatpush.bf16.msra.mxu0 %v2870
    %2936 = vmatpush.bf16.msra.mxu0 %v2868
    %2937 = vmatpush.bf16.msra.mxu0 %v2866
    %2938 = vmatmul.bf16.gmra.mxu0 %v2195
    %v2939 = vpop.f32.mrf.mxu0
    %v2940 = vadd.f32 0.0, %v2939
    %v2941 = vpop.f32.mrf.mxu0
    %v2942 = vadd.f32 0.0, %v2941
    %2943 = vmatmul.bf16.gmra.mxu0 %v2197
    %v2944 = vpop.f32.mrf.mxu0
    %v2945 = vadd.f32 0.0, %v2944
    %v2946 = vpop.f32.mrf.mxu0
    %v2947 = vadd.f32 0.0, %v2946
    %2948 = vdwg.mxu0
    %2949 = vmatpush.bf16.msra.mxu0 %v2896
    %2950 = vmatpush.bf16.msra.mxu0 %v2894
    %2951 = vmatpush.bf16.msra.mxu0 %v2892
    %2952 = vmatpush.bf16.msra.mxu0 %v2890
    %2953 = vmatpush.bf16.msra.mxu0 %v2888
    %2954 = vmatpush.bf16.msra.mxu0 %v2886
    %2955 = vmatpush.bf16.msra.mxu0 %v2884
    %2956 = vmatpush.bf16.msra.mxu0 %v2882
    %2957 = vmatmul.bf16.gmra.mxu0 %v2196
    %v2958 = vpop.f32.mrf.mxu0
    %v2959 = vadd.f32 %v2940, %v2958
    %v2960 = vpop.f32.mrf.mxu0
    %v2961 = vadd.f32 %v2942, %v2960
    %2962 = vmatmul.bf16.gmra.mxu0 %v2198
    %v2963 = vpop.f32.mrf.mxu0
    %v2964 = vadd.f32 %v2945, %v2963
    %v2965 = vpop.f32.mrf.mxu0
    %v2966 = vadd.f32 %v2947, %v2965
    %2967 = vdwg.mxu0
    %2968 = vmatpush.bf16.msra.mxu0 %v2881
    %2969 = vmatpush.bf16.msra.mxu0 %v2879
    %2970 = vmatpush.bf16.msra.mxu0 %v2877
    %2971 = vmatpush.bf16.msra.mxu0 %v2875
    %2972 = vmatpush.bf16.msra.mxu0 %v2873
    %2973 = vmatpush.bf16.msra.mxu0 %v2871
    %2974 = vmatpush.bf16.msra.mxu0 %v2869
    %2975 = vmatpush.bf16.msra.mxu0 %v2867
    %2976 = vmatmul.bf16.gmra.mxu0 %v2195
    %v2977 = vpop.f32.mrf.mxu0
    %v2978 = vadd.f32 0.0, %v2977
    %v2979 = vpop.f32.mrf.mxu0
    %v2980 = vadd.f32 0.0, %v2979
    %2981 = vmatmul.bf16.gmra.mxu0 %v2197
    %v2982 = vpop.f32.mrf.mxu0
    %v2983 = vadd.f32 0.0, %v2982
    %v2984 = vpop.f32.mrf.mxu0
    %v2985 = vadd.f32 0.0, %v2984
    %2986 = vdwg.mxu0
    %2987 = vmatpush.bf16.msra.mxu0 %v2897
    %2988 = vmatpush.bf16.msra.mxu0 %v2895
    %2989 = vmatpush.bf16.msra.mxu0 %v2893
    %2990 = vmatpush.bf16.msra.mxu0 %v2891
    %2991 = vmatpush.bf16.msra.mxu0 %v2889
    %2992 = vmatpush.bf16.msra.mxu0 %v2887
    %2993 = vmatpush.bf16.msra.mxu0 %v2885
    %2994 = vmatpush.bf16.msra.mxu0 %v2883
    %2995 = vmatmul.bf16.gmra.mxu0 %v2196
    %v2996 = vpop.f32.mrf.mxu0
    %v2997 = vadd.f32 %v2978, %v2996
    %v2998 = vpop.f32.mrf.mxu0
    %v2999 = vadd.f32 %v2980, %v2998
    %3000 = vmatmul.bf16.gmra.mxu0 %v2198
    %v3001 = vpop.f32.mrf.mxu0
    %v3002 = vadd.f32 %v2983, %v3001
    %v3003 = vpop.f32.mrf.mxu0
    %v3004 = vadd.f32 %v2985, %v3003
    %3005 = vdwg.mxu0
    %v3006 = vadd.f32 %v2690, %v2959
    %v3007 = vadd.f32 %v2728, %v2997
    %v3008 = vadd.f32 %v2692, %v2961
    %v3009 = vadd.f32 %v2730, %v2999
    %v3010 = vadd.f32 %v2695, %v2964
    %v3011 = vadd.f32 %v2733, %v3002
    %v3012 = vadd.f32 %v2697, %v2966
    %v3013 = vadd.f32 %v2735, %v3004
    %s3014 = scalar_lea.vmem [#allocation6], 4
    %v3015 = vld [vmem:[%s3014] sm:$0x3]
    %v3017 = vperm.slane %v3015, 0
    %v3018 = vperm.slane %v3015, 1
    %v3021 = vadd.f32 %v3006, %v3017
    %v3022 = vadd.f32 %v3007, %v3018
    %v3023 = vadd.f32 %v3008, %v3017
    %v3024 = vadd.f32 %v3009, %v3018
    %v3025 = vadd.f32 %v3010, %v3017
    %v3026 = vadd.f32 %v3011, %v3018
    %v3027 = vadd.f32 %v3012, %v3017
    %v3028 = vadd.f32 %v3013, %v3018
    %v3029 = vld [vmem:[#allocation3] sm:$0xff]
    %v3030 = vld [vmem:[#allocation3 + $0x8] sm:$0xff]
    %v3031 = vld [vmem:[#allocation3 + $0x10] sm:$0xff]
    %v3032 = vld [vmem:[#allocation3 + $0x18] sm:$0xff]
    %v3033 = vld [vmem:[#allocation3 + $0x20] sm:$0xff]
    %v3034 = vld [vmem:[#allocation3 + $0x28] sm:$0xff]
    %v3035 = vld [vmem:[#allocation3 + $0x30] sm:$0xff]
    %v3036 = vld [vmem:[#allocation3 + $0x38] sm:$0xff]
    %v3037 = vadd.f32 %v3021, %v3029
    %v3038 = vadd.f32 %v3022, %v3030
    %v3039 = vadd.f32 %v3023, %v3031
    %v3040 = vadd.f32 %v3024, %v3032
    %v3041 = vadd.f32 %v3025, %v3033
    %v3042 = vadd.f32 %v3026, %v3034
    %v3043 = vadd.f32 %v3027, %v3035
    %v3044 = vadd.f32 %v3028, %v3036
    %v3045 = vmax.f32 %v3037, 0.0
    %v3046 = vmax.f32 %v3038, 0.0
    %v3047 = vmax.f32 %v3039, 0.0
    %v3048 = vmax.f32 %v3040, 0.0
    %v3049 = vmax.f32 %v3041, 0.0
    %v3050 = vmax.f32 %v3042, 0.0
    %v3051 = vmax.f32 %v3043, 0.0
    %v3052 = vmax.f32 %v3044, 0.0
    %3053 = vst [vmem:[#allocation3] sm:$0xff] %v3045
    %3054 = vst [vmem:[#allocation3 + $0x8] sm:$0xff] %v3046
    %3055 = vst [vmem:[#allocation3 + $0x10] sm:$0xff] %v3047
    %3056 = vst [vmem:[#allocation3 + $0x18] sm:$0xff] %v3048
    %3057 = vst [vmem:[#allocation3 + $0x20] sm:$0xff] %v3049
    %3058 = vst [vmem:[#allocation3 + $0x28] sm:$0xff] %v3050
    %3059 = vst [vmem:[#allocation3 + $0x30] sm:$0xff] %v3051
    %3060 = vst [vmem:[#allocation3 + $0x38] sm:$0xff] %v3052
    %3061 = vst [vmem:[#allocation2 + $0x10] sm:$0xff] %v3045
    %3062 = vst [vmem:[#allocation2 + $0x18] sm:$0xff] %v3046
    %3063 = vst [vmem:[#allocation2 + $0x20] sm:$0xff] %v3047
    %3064 = vst [vmem:[#allocation2 + $0x28] sm:$0xff] %v3048
    %3065 = vst [vmem:[#allocation2 + $0x30] sm:$0xff] %v3049
    %3066 = vst [vmem:[#allocation2 + $0x38] sm:$0xff] %v3050
    %3067 = vst [vmem:[#allocation2 + $0x40] sm:$0xff] %v3051
    %3068 = vst [vmem:[#allocation2 + $0x48] sm:$0xff] %v3052
    %v3069 = vpack.c.bf16 %v3047, %v3045
    %v3070 = vpack.c.bf16 %v3048, %v3046
    %v3071 = vpack.c.bf16 %v3051, %v3049
    %v3072 = vpack.c.bf16 %v3052, %v3050
    %v3073 = vld [vmem:[#allocation2] sm:$0x80]
    %v3074 = vld [vmem:[#allocation2 + $0x8] sm:$0x80]
    %v3075 = vld [vmem:[#allocation2 + $0x10] sm:$0xff]
    %v3076 = vld [vmem:[#allocation2 + $0x18] sm:$0xff]
    %v3077 = vld [vmem:[#allocation2 + $0x20] sm:$0xff]
    %v3078 = vld [vmem:[#allocation2 + $0x28] sm:$0xff]
    %v3079 = vld [vmem:[#allocation2 + $0x30] sm:$0xff]
    %v3080 = vld [vmem:[#allocation2 + $0x38] sm:$0xff]
    %v3081 = vld [vmem:[#allocation2 + $0x40] sm:$0x7f]
    %v3082 = vld [vmem:[#allocation2 + $0x48] sm:$0x7f]
    %v3093 = vrot.slane %v3073, 7
    %v3094 = vrot.slane %v3075, 7
    %v3095 = vsel %vm155, %v3093, %v3094
    %v3096 = vrot.slane %v3074, 7
    %v3097 = vrot.slane %v3076, 7
    %v3098 = vsel %vm155, %v3096, %v3097
    %v3099 = vrot.slane %v3077, 7
    %v3100 = vsel %vm155, %v3094, %v3099
    %v3101 = vrot.slane %v3078, 7
    %v3102 = vsel %vm155, %v3097, %v3101
    %v3103 = vrot.slane %v3079, 7
    %v3104 = vsel %vm155, %v3099, %v3103
    %v3105 = vrot.slane %v3080, 7
    %v3106 = vsel %vm155, %v3101, %v3105
    %v3107 = vrot.slane %v3081, 7
    %v3108 = vsel %vm155, %v3103, %v3107
    %v3109 = vrot.slane %v3082, 7
    %v3110 = vsel %vm155, %v3105, %v3109
    %v3119 = vsel %vm141, %v3095, 0.0
    %v3120 = vsel %vm141, %v3098, 0.0
    %v3121 = vsel %vm142, %v3100, 0.0
    %v3122 = vsel %vm142, %v3102, 0.0
    %v3123 = vsel %vm143, %v3104, 0.0
    %v3124 = vsel %vm143, %v3106, 0.0
    %v3125 = vsel %vm144, %v3108, 0.0
    %v3126 = vsel %vm144, %v3110, 0.0
    %v3127 = vpack.c.bf16 %v3121, %v3119
    %v3128 = vpack.c.bf16 %v3122, %v3120
    %v3129 = vpack.c.bf16 %v3125, %v3123
    %v3130 = vpack.c.bf16 %v3126, %v3124
    %v3131 = vld [vmem:[#allocation2 + $0x10] sm:$0xfe]
    %v3132 = vld [vmem:[#allocation2 + $0x18] sm:$0xfe]
    %v3133 = vld [vmem:[#allocation2 + $0x20] sm:$0xff]
    %v3134 = vld [vmem:[#allocation2 + $0x28] sm:$0xff]
    %v3135 = vld [vmem:[#allocation2 + $0x30] sm:$0xff]
    %v3136 = vld [vmem:[#allocation2 + $0x38] sm:$0xff]
    %v3137 = vld [vmem:[#allocation2 + $0x40] sm:$0xff]
    %v3138 = vld [vmem:[#allocation2 + $0x48] sm:$0xff]
    %v3139 = vld [vmem:[#allocation2 + $0x50] sm:$0x1]
    %v3140 = vld [vmem:[#allocation2 + $0x58] sm:$0x1]
    %v3151 = vrot.slane %v3131, 1
    %v3152 = vrot.slane %v3133, 1
    %v3153 = vsel %vm222, %v3151, %v3152
    %v3154 = vrot.slane %v3132, 1
    %v3155 = vrot.slane %v3134, 1
    %v3156 = vsel %vm222, %v3154, %v3155
    %v3157 = vrot.slane %v3135, 1
    %v3158 = vsel %vm222, %v3152, %v3157
    %v3159 = vrot.slane %v3136, 1
    %v3160 = vsel %vm222, %v3155, %v3159
    %v3161 = vrot.slane %v3137, 1
    %v3162 = vsel %vm222, %v3157, %v3161
    %v3163 = vrot.slane %v3138, 1
    %v3164 = vsel %vm222, %v3159, %v3163
    %v3165 = vrot.slane %v3139, 1
    %v3166 = vsel %vm222, %v3161, %v3165
    %v3167 = vrot.slane %v3140, 1
    %v3168 = vsel %vm222, %v3163, %v3167
    %v3177 = vsel %vm208, %v3153, 0.0
    %v3178 = vsel %vm208, %v3156, 0.0
    %v3179 = vsel %vm209, %v3158, 0.0
    %v3180 = vsel %vm209, %v3160, 0.0
    %v3181 = vsel %vm210, %v3162, 0.0
    %v3182 = vsel %vm210, %v3164, 0.0
    %v3183 = vsel %vm211, %v3166, 0.0
    %v3184 = vsel %vm211, %v3168, 0.0
    %v3185 = vpack.c.bf16 %v3179, %v3177
    %v3186 = vpack.c.bf16 %v3180, %v3178
    %v3187 = vpack.c.bf16 %v3183, %v3181
    %v3188 = vpack.c.bf16 %v3184, %v3182
    %s3189 = scalar_lea.vmem [#allocation4], 2304
    %v3190 = vld [vmem:[%s3189] sm:$0xff]
    %v3191 = vld [vmem:[%s3189 + $0x8] sm:$0xff]
    %v3192 = vld [vmem:[%s3189 + $0x10] sm:$0xff]
    %v3193 = vld [vmem:[%s3189 + $0x18] sm:$0xff]
    %v3194 = vld [vmem:[%s3189 + $0x20] sm:$0xff]
    %v3195 = vld [vmem:[%s3189 + $0x28] sm:$0xff]
    %v3196 = vld [vmem:[%s3189 + $0x30] sm:$0xff]
    %v3197 = vld [vmem:[%s3189 + $0x38] sm:$0xff]
    %v3198 = vld [vmem:[%s3189 + $0x40] sm:$0xff]
    %v3199 = vld [vmem:[%s3189 + $0x48] sm:$0xff]
    %v3200 = vld [vmem:[%s3189 + $0x50] sm:$0xff]
    %v3201 = vld [vmem:[%s3189 + $0x58] sm:$0xff]
    %v3202 = vld [vmem:[%s3189 + $0x60] sm:$0xff]
    %v3203 = vld [vmem:[%s3189 + $0x68] sm:$0xff]
    %v3204 = vld [vmem:[%s3189 + $0x70] sm:$0xff]
    %v3205 = vld [vmem:[%s3189 + $0x78] sm:$0xff]
    %v3206 = vld [vmem:[%s3189 + $0x80] sm:$0xff]
    %v3207 = vld [vmem:[%s3189 + $0x88] sm:$0xff]
    %v3208 = vld [vmem:[%s3189 + $0x90] sm:$0xff]
    %v3209 = vld [vmem:[%s3189 + $0x98] sm:$0xff]
    %v3210 = vld [vmem:[%s3189 + $0xa0] sm:$0xff]
    %v3211 = vld [vmem:[%s3189 + $0xa8] sm:$0xff]
    %v3212 = vld [vmem:[%s3189 + $0xb0] sm:$0xff]
    %v3213 = vld [vmem:[%s3189 + $0xb8] sm:$0xff]
    %v3214 = vld [vmem:[%s3189 + $0xc0] sm:$0xff]
    %v3215 = vld [vmem:[%s3189 + $0xc8] sm:$0xff]
    %v3216 = vld [vmem:[%s3189 + $0xd0] sm:$0xff]
    %v3217 = vld [vmem:[%s3189 + $0xd8] sm:$0xff]
    %v3218 = vld [vmem:[%s3189 + $0xe0] sm:$0xff]
    %v3219 = vld [vmem:[%s3189 + $0xe8] sm:$0xff]
    %v3220 = vld [vmem:[%s3189 + $0xf0] sm:$0xff]
    %v3221 = vld [vmem:[%s3189 + $0xf8] sm:$0xff]
    %s3222 = scalar_lea.vmem [#allocation4], 2560
    %v3223 = vld [vmem:[%s3222] sm:$0xff]
    %v3224 = vld [vmem:[%s3222 + $0x8] sm:$0xff]
    %v3225 = vld [vmem:[%s3222 + $0x10] sm:$0xff]
    %v3226 = vld [vmem:[%s3222 + $0x18] sm:$0xff]
    %v3227 = vld [vmem:[%s3222 + $0x20] sm:$0xff]
    %v3228 = vld [vmem:[%s3222 + $0x28] sm:$0xff]
    %v3229 = vld [vmem:[%s3222 + $0x30] sm:$0xff]
    %v3230 = vld [vmem:[%s3222 + $0x38] sm:$0xff]
    %v3231 = vld [vmem:[%s3222 + $0x40] sm:$0xff]
    %v3232 = vld [vmem:[%s3222 + $0x48] sm:$0xff]
    %v3233 = vld [vmem:[%s3222 + $0x50] sm:$0xff]
    %v3234 = vld [vmem:[%s3222 + $0x58] sm:$0xff]
    %v3235 = vld [vmem:[%s3222 + $0x60] sm:$0xff]
    %v3236 = vld [vmem:[%s3222 + $0x68] sm:$0xff]
    %v3237 = vld [vmem:[%s3222 + $0x70] sm:$0xff]
    %v3238 = vld [vmem:[%s3222 + $0x78] sm:$0xff]
    %v3239 = vld [vmem:[%s3222 + $0x80] sm:$0xff]
    %v3240 = vld [vmem:[%s3222 + $0x88] sm:$0xff]
    %v3241 = vld [vmem:[%s3222 + $0x90] sm:$0xff]
    %v3242 = vld [vmem:[%s3222 + $0x98] sm:$0xff]
    %v3243 = vld [vmem:[%s3222 + $0xa0] sm:$0xff]
    %v3244 = vld [vmem:[%s3222 + $0xa8] sm:$0xff]
    %v3245 = vld [vmem:[%s3222 + $0xb0] sm:$0xff]
    %v3246 = vld [vmem:[%s3222 + $0xb8] sm:$0xff]
    %v3247 = vld [vmem:[%s3222 + $0xc0] sm:$0xff]
    %v3248 = vld [vmem:[%s3222 + $0xc8] sm:$0xff]
    %v3249 = vld [vmem:[%s3222 + $0xd0] sm:$0xff]
    %v3250 = vld [vmem:[%s3222 + $0xd8] sm:$0xff]
    %v3251 = vld [vmem:[%s3222 + $0xe0] sm:$0xff]
    %v3252 = vld [vmem:[%s3222 + $0xe8] sm:$0xff]
    %v3253 = vld [vmem:[%s3222 + $0xf0] sm:$0xff]
    %v3254 = vld [vmem:[%s3222 + $0xf8] sm:$0xff]
    %v3287 = vunpack.c.l.b16 %v3223
    %v3288 = vunpack.c.h.b16 %v3223
    %v3289 = vunpack.c.l.b16 %v3224
    %v3290 = vunpack.c.h.b16 %v3224
    %v3291 = vunpack.c.l.b16 %v3225
    %v3292 = vunpack.c.h.b16 %v3225
    %v3293 = vunpack.c.l.b16 %v3226
    %v3294 = vunpack.c.h.b16 %v3226
    %v3295 = vunpack.c.l.b16 %v3227
    %v3296 = vunpack.c.h.b16 %v3227
    %v3297 = vunpack.c.l.b16 %v3228
    %v3298 = vunpack.c.h.b16 %v3228
    %v3299 = vunpack.c.l.b16 %v3229
    %v3300 = vunpack.c.h.b16 %v3229
    %v3301 = vunpack.c.l.b16 %v3230
    %v3302 = vunpack.c.h.b16 %v3230
    %v3303 = vunpack.c.l.b16 %v3231
    %v3304 = vunpack.c.h.b16 %v3231
    %v3305 = vunpack.c.l.b16 %v3232
    %v3306 = vunpack.c.h.b16 %v3232
    %v3307 = vunpack.c.l.b16 %v3233
    %v3308 = vunpack.c.h.b16 %v3233
    %v3309 = vunpack.c.l.b16 %v3234
    %v3310 = vunpack.c.h.b16 %v3234
    %v3311 = vunpack.c.l.b16 %v3235
    %v3312 = vunpack.c.h.b16 %v3235
    %v3313 = vunpack.c.l.b16 %v3236
    %v3314 = vunpack.c.h.b16 %v3236
    %v3315 = vunpack.c.l.b16 %v3237
    %v3316 = vunpack.c.h.b16 %v3237
    %v3317 = vunpack.c.l.b16 %v3238
    %v3318 = vunpack.c.h.b16 %v3238
    %v3319 = vunpack.c.l.b16 %v3239
    %v3320 = vunpack.c.h.b16 %v3239
    %v3321 = vunpack.c.l.b16 %v3240
    %v3322 = vunpack.c.h.b16 %v3240
    %v3323 = vunpack.c.l.b16 %v3241
    %v3324 = vunpack.c.h.b16 %v3241
    %v3325 = vunpack.c.l.b16 %v3242
    %v3326 = vunpack.c.h.b16 %v3242
    %v3327 = vunpack.c.l.b16 %v3243
    %v3328 = vunpack.c.h.b16 %v3243
    %v3329 = vunpack.c.l.b16 %v3244
    %v3330 = vunpack.c.h.b16 %v3244
    %v3331 = vunpack.c.l.b16 %v3245
    %v3332 = vunpack.c.h.b16 %v3245
    %v3333 = vunpack.c.l.b16 %v3246
    %v3334 = vunpack.c.h.b16 %v3246
    %v3335 = vunpack.c.l.b16 %v3247
    %v3336 = vunpack.c.h.b16 %v3247
    %v3337 = vunpack.c.l.b16 %v3248
    %v3338 = vunpack.c.h.b16 %v3248
    %v3339 = vunpack.c.l.b16 %v3249
    %v3340 = vunpack.c.h.b16 %v3249
    %v3341 = vunpack.c.l.b16 %v3250
    %v3342 = vunpack.c.h.b16 %v3250
    %v3343 = vunpack.c.l.b16 %v3251
    %v3344 = vunpack.c.h.b16 %v3251
    %v3345 = vunpack.c.l.b16 %v3252
    %v3346 = vunpack.c.h.b16 %v3252
    %v3347 = vunpack.c.l.b16 %v3253
    %v3348 = vunpack.c.h.b16 %v3253
    %v3349 = vunpack.c.l.b16 %v3254
    %v3350 = vunpack.c.h.b16 %v3254
    %v3351 = vpack.c.b16 %v3289, %v3287
    %v3352 = vpack.c.b16 %v3290, %v3288
    %v3353 = vpack.c.b16 %v3293, %v3291
    %v3354 = vpack.c.b16 %v3294, %v3292
    %v3355 = vpack.c.b16 %v3297, %v3295
    %v3356 = vpack.c.b16 %v3298, %v3296
    %v3357 = vpack.c.b16 %v3301, %v3299
    %v3358 = vpack.c.b16 %v3302, %v3300
    %v3359 = vpack.c.b16 %v3305, %v3303
    %v3360 = vpack.c.b16 %v3306, %v3304
    %v3361 = vpack.c.b16 %v3309, %v3307
    %v3362 = vpack.c.b16 %v3310, %v3308
    %v3363 = vpack.c.b16 %v3313, %v3311
    %v3364 = vpack.c.b16 %v3314, %v3312
    %v3365 = vpack.c.b16 %v3317, %v3315
    %v3366 = vpack.c.b16 %v3318, %v3316
    %v3367 = vpack.c.b16 %v3321, %v3319
    %v3368 = vpack.c.b16 %v3322, %v3320
    %v3369 = vpack.c.b16 %v3325, %v3323
    %v3370 = vpack.c.b16 %v3326, %v3324
    %v3371 = vpack.c.b16 %v3329, %v3327
    %v3372 = vpack.c.b16 %v3330, %v3328
    %v3373 = vpack.c.b16 %v3333, %v3331
    %v3374 = vpack.c.b16 %v3334, %v3332
    %v3375 = vpack.c.b16 %v3337, %v3335
    %v3376 = vpack.c.b16 %v3338, %v3336
    %v3377 = vpack.c.b16 %v3341, %v3339
    %v3378 = vpack.c.b16 %v3342, %v3340
    %v3379 = vpack.c.b16 %v3345, %v3343
    %v3380 = vpack.c.b16 %v3346, %v3344
    %v3381 = vpack.c.b16 %v3349, %v3347
    %v3382 = vpack.c.b16 %v3350, %v3348
    %3415 = vmatpush.bf16.msra.mxu0 %v3365
    %3416 = vmatpush.bf16.msra.mxu0 %v3363
    %3417 = vmatpush.bf16.msra.mxu0 %v3361
    %3418 = vmatpush.bf16.msra.mxu0 %v3359
    %3419 = vmatpush.bf16.msra.mxu0 %v3357
    %3420 = vmatpush.bf16.msra.mxu0 %v3355
    %3421 = vmatpush.bf16.msra.mxu0 %v3353
    %3422 = vmatpush.bf16.msra.mxu0 %v3351
    %3423 = vmatmul.bf16.gmra.mxu0 %v3069
    %v3424 = vpop.f32.mrf.mxu0
    %v3425 = vadd.f32 0.0, %v3424
    %v3426 = vpop.f32.mrf.mxu0
    %v3427 = vadd.f32 0.0, %v3426
    %3428 = vmatmul.bf16.gmra.mxu0 %v3071
    %v3429 = vpop.f32.mrf.mxu0
    %v3430 = vadd.f32 0.0, %v3429
    %v3431 = vpop.f32.mrf.mxu0
    %v3432 = vadd.f32 0.0, %v3431
    %3433 = vdwg.mxu0
    %3434 = vmatpush.bf16.msra.mxu0 %v3381
    %3435 = vmatpush.bf16.msra.mxu0 %v3379
    %3436 = vmatpush.bf16.msra.mxu0 %v3377
    %3437 = vmatpush.bf16.msra.mxu0 %v3375
    %3438 = vmatpush.bf16.msra.mxu0 %v3373
    %3439 = vmatpush.bf16.msra.mxu0 %v3371
    %3440 = vmatpush.bf16.msra.mxu0 %v3369
    %3441 = vmatpush.bf16.msra.mxu0 %v3367
    %3442 = vmatmul.bf16.gmra.mxu0 %v3070
    %v3443 = vpop.f32.mrf.mxu0
    %v3444 = vadd.f32 %v3425, %v3443
    %v3445 = vpop.f32.mrf.mxu0
    %v3446 = vadd.f32 %v3427, %v3445
    %3447 = vmatmul.bf16.gmra.mxu0 %v3072
    %v3448 = vpop.f32.mrf.mxu0
    %v3449 = vadd.f32 %v3430, %v3448
    %v3450 = vpop.f32.mrf.mxu0
    %v3451 = vadd.f32 %v3432, %v3450
    %3452 = vdwg.mxu0
    %3453 = vmatpush.bf16.msra.mxu0 %v3366
    %3454 = vmatpush.bf16.msra.mxu0 %v3364
    %3455 = vmatpush.bf16.msra.mxu0 %v3362
    %3456 = vmatpush.bf16.msra.mxu0 %v3360
    %3457 = vmatpush.bf16.msra.mxu0 %v3358
    %3458 = vmatpush.bf16.msra.mxu0 %v3356
    %3459 = vmatpush.bf16.msra.mxu0 %v3354
    %3460 = vmatpush.bf16.msra.mxu0 %v3352
    %3461 = vmatmul.bf16.gmra.mxu0 %v3069
    %v3462 = vpop.f32.mrf.mxu0
    %v3463 = vadd.f32 0.0, %v3462
    %v3464 = vpop.f32.mrf.mxu0
    %v3465 = vadd.f32 0.0, %v3464
    %3466 = vmatmul.bf16.gmra.mxu0 %v3071
    %v3467 = vpop.f32.mrf.mxu0
    %v3468 = vadd.f32 0.0, %v3467
    %v3469 = vpop.f32.mrf.mxu0
    %v3470 = vadd.f32 0.0, %v3469
    %3471 = vdwg.mxu0
    %3472 = vmatpush.bf16.msra.mxu0 %v3382
    %3473 = vmatpush.bf16.msra.mxu0 %v3380
    %3474 = vmatpush.bf16.msra.mxu0 %v3378
    %3475 = vmatpush.bf16.msra.mxu0 %v3376
    %3476 = vmatpush.bf16.msra.mxu0 %v3374
    %3477 = vmatpush.bf16.msra.mxu0 %v3372
    %3478 = vmatpush.bf16.msra.mxu0 %v3370
    %3479 = vmatpush.bf16.msra.mxu0 %v3368
    %3480 = vmatmul.bf16.gmra.mxu0 %v3070
    %v3481 = vpop.f32.mrf.mxu0
    %v3482 = vadd.f32 %v3463, %v3481
    %v3483 = vpop.f32.mrf.mxu0
    %v3484 = vadd.f32 %v3465, %v3483
    %3485 = vmatmul.bf16.gmra.mxu0 %v3072
    %v3486 = vpop.f32.mrf.mxu0
    %v3487 = vadd.f32 %v3468, %v3486
    %v3488 = vpop.f32.mrf.mxu0
    %v3489 = vadd.f32 %v3470, %v3488
    %3490 = vdwg.mxu0
    %v3523 = vunpack.c.l.b16 %v3190
    %v3524 = vunpack.c.h.b16 %v3190
    %v3525 = vunpack.c.l.b16 %v3191
    %v3526 = vunpack.c.h.b16 %v3191
    %v3527 = vunpack.c.l.b16 %v3192
    %v3528 = vunpack.c.h.b16 %v3192
    %v3529 = vunpack.c.l.b16 %v3193
    %v3530 = vunpack.c.h.b16 %v3193
    %v3531 = vunpack.c.l.b16 %v3194
    %v3532 = vunpack.c.h.b16 %v3194
    %v3533 = vunpack.c.l.b16 %v3195
    %v3534 = vunpack.c.h.b16 %v3195
    %v3535 = vunpack.c.l.b16 %v3196
    %v3536 = vunpack.c.h.b16 %v3196
    %v3537 = vunpack.c.l.b16 %v3197
    %v3538 = vunpack.c.h.b16 %v3197
    %v3539 = vunpack.c.l.b16 %v3198
    %v3540 = vunpack.c.h.b16 %v3198
    %v3541 = vunpack.c.l.b16 %v3199
    %v3542 = vunpack.c.h.b16 %v3199
    %v3543 = vunpack.c.l.b16 %v3200
    %v3544 = vunpack.c.h.b16 %v3200
    %v3545 = vunpack.c.l.b16 %v3201
    %v3546 = vunpack.c.h.b16 %v3201
    %v3547 = vunpack.c.l.b16 %v3202
    %v3548 = vunpack.c.h.b16 %v3202
    %v3549 = vunpack.c.l.b16 %v3203
    %v3550 = vunpack.c.h.b16 %v3203
    %v3551 = vunpack.c.l.b16 %v3204
    %v3552 = vunpack.c.h.b16 %v3204
    %v3553 = vunpack.c.l.b16 %v3205
    %v3554 = vunpack.c.h.b16 %v3205
    %v3555 = vunpack.c.l.b16 %v3206
    %v3556 = vunpack.c.h.b16 %v3206
    %v3557 = vunpack.c.l.b16 %v3207
    %v3558 = vunpack.c.h.b16 %v3207
    %v3559 = vunpack.c.l.b16 %v3208
    %v3560 = vunpack.c.h.b16 %v3208
    %v3561 = vunpack.c.l.b16 %v3209
    %v3562 = vunpack.c.h.b16 %v3209
    %v3563 = vunpack.c.l.b16 %v3210
    %v3564 = vunpack.c.h.b16 %v3210
    %v3565 = vunpack.c.l.b16 %v3211
    %v3566 = vunpack.c.h.b16 %v3211
    %v3567 = vunpack.c.l.b16 %v3212
    %v3568 = vunpack.c.h.b16 %v3212
    %v3569 = vunpack.c.l.b16 %v3213
    %v3570 = vunpack.c.h.b16 %v3213
    %v3571 = vunpack.c.l.b16 %v3214
    %v3572 = vunpack.c.h.b16 %v3214
    %v3573 = vunpack.c.l.b16 %v3215
    %v3574 = vunpack.c.h.b16 %v3215
    %v3575 = vunpack.c.l.b16 %v3216
    %v3576 = vunpack.c.h.b16 %v3216
    %v3577 = vunpack.c.l.b16 %v3217
    %v3578 = vunpack.c.h.b16 %v3217
    %v3579 = vunpack.c.l.b16 %v3218
    %v3580 = vunpack.c.h.b16 %v3218
    %v3581 = vunpack.c.l.b16 %v3219
    %v3582 = vunpack.c.h.b16 %v3219
    %v3583 = vunpack.c.l.b16 %v3220
    %v3584 = vunpack.c.h.b16 %v3220
    %v3585 = vunpack.c.l.b16 %v3221
    %v3586 = vunpack.c.h.b16 %v3221
    %v3587 = vpack.c.b16 %v3525, %v3523
    %v3588 = vpack.c.b16 %v3526, %v3524
    %v3589 = vpack.c.b16 %v3529, %v3527
    %v3590 = vpack.c.b16 %v3530, %v3528
    %v3591 = vpack.c.b16 %v3533, %v3531
    %v3592 = vpack.c.b16 %v3534, %v3532
    %v3593 = vpack.c.b16 %v3537, %v3535
    %v3594 = vpack.c.b16 %v3538, %v3536
    %v3595 = vpack.c.b16 %v3541, %v3539
    %v3596 = vpack.c.b16 %v3542, %v3540
    %v3597 = vpack.c.b16 %v3545, %v3543
    %v3598 = vpack.c.b16 %v3546, %v3544
    %v3599 = vpack.c.b16 %v3549, %v3547
    %v3600 = vpack.c.b16 %v3550, %v3548
    %v3601 = vpack.c.b16 %v3553, %v3551
    %v3602 = vpack.c.b16 %v3554, %v3552
    %v3603 = vpack.c.b16 %v3557, %v3555
    %v3604 = vpack.c.b16 %v3558, %v3556
    %v3605 = vpack.c.b16 %v3561, %v3559
    %v3606 = vpack.c.b16 %v3562, %v3560
    %v3607 = vpack.c.b16 %v3565, %v3563
    %v3608 = vpack.c.b16 %v3566, %v3564
    %v3609 = vpack.c.b16 %v3569, %v3567
    %v3610 = vpack.c.b16 %v3570, %v3568
    %v3611 = vpack.c.b16 %v3573, %v3571
    %v3612 = vpack.c.b16 %v3574, %v3572
    %v3613 = vpack.c.b16 %v3577, %v3575
    %v3614 = vpack.c.b16 %v3578, %v3576
    %v3615 = vpack.c.b16 %v3581, %v3579
    %v3616 = vpack.c.b16 %v3582, %v3580
    %v3617 = vpack.c.b16 %v3585, %v3583
    %v3618 = vpack.c.b16 %v3586, %v3584
    %3651 = vmatpush.bf16.msra.mxu0 %v3601
    %3652 = vmatpush.bf16.msra.mxu0 %v3599
    %3653 = vmatpush.bf16.msra.mxu0 %v3597
    %3654 = vmatpush.bf16.msra.mxu0 %v3595
    %3655 = vmatpush.bf16.msra.mxu0 %v3593
    %3656 = vmatpush.bf16.msra.mxu0 %v3591
    %3657 = vmatpush.bf16.msra.mxu0 %v3589
    %3658 = vmatpush.bf16.msra.mxu0 %v3587
    %3659 = vmatmul.bf16.gmra.mxu0 %v3127
    %v3660 = vpop.f32.mrf.mxu0
    %v3661 = vadd.f32 %v3444, %v3660
    %v3662 = vpop.f32.mrf.mxu0
    %v3663 = vadd.f32 %v3446, %v3662
    %3664 = vmatmul.bf16.gmra.mxu0 %v3129
    %v3665 = vpop.f32.mrf.mxu0
    %v3666 = vadd.f32 %v3449, %v3665
    %v3667 = vpop.f32.mrf.mxu0
    %v3668 = vadd.f32 %v3451, %v3667
    %3669 = vdwg.mxu0
    %3670 = vmatpush.bf16.msra.mxu0 %v3617
    %3671 = vmatpush.bf16.msra.mxu0 %v3615
    %3672 = vmatpush.bf16.msra.mxu0 %v3613
    %3673 = vmatpush.bf16.msra.mxu0 %v3611
    %3674 = vmatpush.bf16.msra.mxu0 %v3609
    %3675 = vmatpush.bf16.msra.mxu0 %v3607
    %3676 = vmatpush.bf16.msra.mxu0 %v3605
    %3677 = vmatpush.bf16.msra.mxu0 %v3603
    %3678 = vmatmul.bf16.gmra.mxu0 %v3128
    %v3679 = vpop.f32.mrf.mxu0
    %v3680 = vadd.f32 %v3661, %v3679
    %v3681 = vpop.f32.mrf.mxu0
    %v3682 = vadd.f32 %v3663, %v3681
    %3683 = vmatmul.bf16.gmra.mxu0 %v3130
    %v3684 = vpop.f32.mrf.mxu0
    %v3685 = vadd.f32 %v3666, %v3684
    %v3686 = vpop.f32.mrf.mxu0
    %v3687 = vadd.f32 %v3668, %v3686
    %3688 = vdwg.mxu0
    %3689 = vmatpush.bf16.msra.mxu0 %v3602
    %3690 = vmatpush.bf16.msra.mxu0 %v3600
    %3691 = vmatpush.bf16.msra.mxu0 %v3598
    %3692 = vmatpush.bf16.msra.mxu0 %v3596
    %3693 = vmatpush.bf16.msra.mxu0 %v3594
    %3694 = vmatpush.bf16.msra.mxu0 %v3592
    %3695 = vmatpush.bf16.msra.mxu0 %v3590
    %3696 = vmatpush.bf16.msra.mxu0 %v3588
    %3697 = vmatmul.bf16.gmra.mxu0 %v3127
    %v3698 = vpop.f32.mrf.mxu0
    %v3699 = vadd.f32 %v3482, %v3698
    %v3700 = vpop.f32.mrf.mxu0
    %v3701 = vadd.f32 %v3484, %v3700
    %3702 = vmatmul.bf16.gmra.mxu0 %v3129
    %v3703 = vpop.f32.mrf.mxu0
    %v3704 = vadd.f32 %v3487, %v3703
    %v3705 = vpop.f32.mrf.mxu0
    %v3706 = vadd.f32 %v3489, %v3705
    %3707 = vdwg.mxu0
    %3708 = vmatpush.bf16.msra.mxu0 %v3618
    %3709 = vmatpush.bf16.msra.mxu0 %v3616
    %3710 = vmatpush.bf16.msra.mxu0 %v3614
    %3711 = vmatpush.bf16.msra.mxu0 %v3612
    %3712 = vmatpush.bf16.msra.mxu0 %v3610
    %3713 = vmatpush.bf16.msra.mxu0 %v3608
    %3714 = vmatpush.bf16.msra.mxu0 %v3606
    %3715 = vmatpush.bf16.msra.mxu0 %v3604
    %3716 = vmatmul.bf16.gmra.mxu0 %v3128
    %v3717 = vpop.f32.mrf.mxu0
    %v3718 = vadd.f32 %v3699, %v3717
    %v3719 = vpop.f32.mrf.mxu0
    %v3720 = vadd.f32 %v3701, %v3719
    %3721 = vmatmul.bf16.gmra.mxu0 %v3130
    %v3722 = vpop.f32.mrf.mxu0
    %v3723 = vadd.f32 %v3704, %v3722
    %v3724 = vpop.f32.mrf.mxu0
    %v3725 = vadd.f32 %v3706, %v3724
    %3726 = vdwg.mxu0
    %s3727 = scalar_lea.vmem [#allocation4], 2816
    %v3728 = vld [vmem:[%s3727] sm:$0xff]
    %v3729 = vld [vmem:[%s3727 + $0x8] sm:$0xff]
    %v3730 = vld [vmem:[%s3727 + $0x10] sm:$0xff]
    %v3731 = vld [vmem:[%s3727 + $0x18] sm:$0xff]
    %v3732 = vld [vmem:[%s3727 + $0x20] sm:$0xff]
    %v3733 = vld [vmem:[%s3727 + $0x28] sm:$0xff]
    %v3734 = vld [vmem:[%s3727 + $0x30] sm:$0xff]
    %v3735 = vld [vmem:[%s3727 + $0x38] sm:$0xff]
    %v3736 = vld [vmem:[%s3727 + $0x40] sm:$0xff]
    %v3737 = vld [vmem:[%s3727 + $0x48] sm:$0xff]
    %v3738 = vld [vmem:[%s3727 + $0x50] sm:$0xff]
    %v3739 = vld [vmem:[%s3727 + $0x58] sm:$0xff]
    %v3740 = vld [vmem:[%s3727 + $0x60] sm:$0xff]
    %v3741 = vld [vmem:[%s3727 + $0x68] sm:$0xff]
    %v3742 = vld [vmem:[%s3727 + $0x70] sm:$0xff]
    %v3743 = vld [vmem:[%s3727 + $0x78] sm:$0xff]
    %v3744 = vld [vmem:[%s3727 + $0x80] sm:$0xff]
    %v3745 = vld [vmem:[%s3727 + $0x88] sm:$0xff]
    %v3746 = vld [vmem:[%s3727 + $0x90] sm:$0xff]
    %v3747 = vld [vmem:[%s3727 + $0x98] sm:$0xff]
    %v3748 = vld [vmem:[%s3727 + $0xa0] sm:$0xff]
    %v3749 = vld [vmem:[%s3727 + $0xa8] sm:$0xff]
    %v3750 = vld [vmem:[%s3727 + $0xb0] sm:$0xff]
    %v3751 = vld [vmem:[%s3727 + $0xb8] sm:$0xff]
    %v3752 = vld [vmem:[%s3727 + $0xc0] sm:$0xff]
    %v3753 = vld [vmem:[%s3727 + $0xc8] sm:$0xff]
    %v3754 = vld [vmem:[%s3727 + $0xd0] sm:$0xff]
    %v3755 = vld [vmem:[%s3727 + $0xd8] sm:$0xff]
    %v3756 = vld [vmem:[%s3727 + $0xe0] sm:$0xff]
    %v3757 = vld [vmem:[%s3727 + $0xe8] sm:$0xff]
    %v3758 = vld [vmem:[%s3727 + $0xf0] sm:$0xff]
    %v3759 = vld [vmem:[%s3727 + $0xf8] sm:$0xff]
    %v3792 = vunpack.c.l.b16 %v3728
    %v3793 = vunpack.c.h.b16 %v3728
    %v3794 = vunpack.c.l.b16 %v3729
    %v3795 = vunpack.c.h.b16 %v3729
    %v3796 = vunpack.c.l.b16 %v3730
    %v3797 = vunpack.c.h.b16 %v3730
    %v3798 = vunpack.c.l.b16 %v3731
    %v3799 = vunpack.c.h.b16 %v3731
    %v3800 = vunpack.c.l.b16 %v3732
    %v3801 = vunpack.c.h.b16 %v3732
    %v3802 = vunpack.c.l.b16 %v3733
    %v3803 = vunpack.c.h.b16 %v3733
    %v3804 = vunpack.c.l.b16 %v3734
    %v3805 = vunpack.c.h.b16 %v3734
    %v3806 = vunpack.c.l.b16 %v3735
    %v3807 = vunpack.c.h.b16 %v3735
    %v3808 = vunpack.c.l.b16 %v3736
    %v3809 = vunpack.c.h.b16 %v3736
    %v3810 = vunpack.c.l.b16 %v3737
    %v3811 = vunpack.c.h.b16 %v3737
    %v3812 = vunpack.c.l.b16 %v3738
    %v3813 = vunpack.c.h.b16 %v3738
    %v3814 = vunpack.c.l.b16 %v3739
    %v3815 = vunpack.c.h.b16 %v3739
    %v3816 = vunpack.c.l.b16 %v3740
    %v3817 = vunpack.c.h.b16 %v3740
    %v3818 = vunpack.c.l.b16 %v3741
    %v3819 = vunpack.c.h.b16 %v3741
    %v3820 = vunpack.c.l.b16 %v3742
    %v3821 = vunpack.c.h.b16 %v3742
    %v3822 = vunpack.c.l.b16 %v3743
    %v3823 = vunpack.c.h.b16 %v3743
    %v3824 = vunpack.c.l.b16 %v3744
    %v3825 = vunpack.c.h.b16 %v3744
    %v3826 = vunpack.c.l.b16 %v3745
    %v3827 = vunpack.c.h.b16 %v3745
    %v3828 = vunpack.c.l.b16 %v3746
    %v3829 = vunpack.c.h.b16 %v3746
    %v3830 = vunpack.c.l.b16 %v3747
    %v3831 = vunpack.c.h.b16 %v3747
    %v3832 = vunpack.c.l.b16 %v3748
    %v3833 = vunpack.c.h.b16 %v3748
    %v3834 = vunpack.c.l.b16 %v3749
    %v3835 = vunpack.c.h.b16 %v3749
    %v3836 = vunpack.c.l.b16 %v3750
    %v3837 = vunpack.c.h.b16 %v3750
    %v3838 = vunpack.c.l.b16 %v3751
    %v3839 = vunpack.c.h.b16 %v3751
    %v3840 = vunpack.c.l.b16 %v3752
    %v3841 = vunpack.c.h.b16 %v3752
    %v3842 = vunpack.c.l.b16 %v3753
    %v3843 = vunpack.c.h.b16 %v3753
    %v3844 = vunpack.c.l.b16 %v3754
    %v3845 = vunpack.c.h.b16 %v3754
    %v3846 = vunpack.c.l.b16 %v3755
    %v3847 = vunpack.c.h.b16 %v3755
    %v3848 = vunpack.c.l.b16 %v3756
    %v3849 = vunpack.c.h.b16 %v3756
    %v3850 = vunpack.c.l.b16 %v3757
    %v3851 = vunpack.c.h.b16 %v3757
    %v3852 = vunpack.c.l.b16 %v3758
    %v3853 = vunpack.c.h.b16 %v3758
    %v3854 = vunpack.c.l.b16 %v3759
    %v3855 = vunpack.c.h.b16 %v3759
    %v3856 = vpack.c.b16 %v3794, %v3792
    %v3857 = vpack.c.b16 %v3795, %v3793
    %v3858 = vpack.c.b16 %v3798, %v3796
    %v3859 = vpack.c.b16 %v3799, %v3797
    %v3860 = vpack.c.b16 %v3802, %v3800
    %v3861 = vpack.c.b16 %v3803, %v3801
    %v3862 = vpack.c.b16 %v3806, %v3804
    %v3863 = vpack.c.b16 %v3807, %v3805
    %v3864 = vpack.c.b16 %v3810, %v3808
    %v3865 = vpack.c.b16 %v3811, %v3809
    %v3866 = vpack.c.b16 %v3814, %v3812
    %v3867 = vpack.c.b16 %v3815, %v3813
    %v3868 = vpack.c.b16 %v3818, %v3816
    %v3869 = vpack.c.b16 %v3819, %v3817
    %v3870 = vpack.c.b16 %v3822, %v3820
    %v3871 = vpack.c.b16 %v3823, %v3821
    %v3872 = vpack.c.b16 %v3826, %v3824
    %v3873 = vpack.c.b16 %v3827, %v3825
    %v3874 = vpack.c.b16 %v3830, %v3828
    %v3875 = vpack.c.b16 %v3831, %v3829
    %v3876 = vpack.c.b16 %v3834, %v3832
    %v3877 = vpack.c.b16 %v3835, %v3833
    %v3878 = vpack.c.b16 %v3838, %v3836
    %v3879 = vpack.c.b16 %v3839, %v3837
    %v3880 = vpack.c.b16 %v3842, %v3840
    %v3881 = vpack.c.b16 %v3843, %v3841
    %v3882 = vpack.c.b16 %v3846, %v3844
    %v3883 = vpack.c.b16 %v3847, %v3845
    %v3884 = vpack.c.b16 %v3850, %v3848
    %v3885 = vpack.c.b16 %v3851, %v3849
    %v3886 = vpack.c.b16 %v3854, %v3852
    %v3887 = vpack.c.b16 %v3855, %v3853
    %3920 = vmatpush.bf16.msra.mxu0 %v3870
    %3921 = vmatpush.bf16.msra.mxu0 %v3868
    %3922 = vmatpush.bf16.msra.mxu0 %v3866
    %3923 = vmatpush.bf16.msra.mxu0 %v3864
    %3924 = vmatpush.bf16.msra.mxu0 %v3862
    %3925 = vmatpush.bf16.msra.mxu0 %v3860
    %3926 = vmatpush.bf16.msra.mxu0 %v3858
    %3927 = vmatpush.bf16.msra.mxu0 %v3856
    %3928 = vmatmul.bf16.gmra.mxu0 %v3185
    %v3929 = vpop.f32.mrf.mxu0
    %v3930 = vadd.f32 0.0, %v3929
    %v3931 = vpop.f32.mrf.mxu0
    %v3932 = vadd.f32 0.0, %v3931
    %3933 = vmatmul.bf16.gmra.mxu0 %v3187
    %v3934 = vpop.f32.mrf.mxu0
    %v3935 = vadd.f32 0.0, %v3934
    %v3936 = vpop.f32.mrf.mxu0
    %v3937 = vadd.f32 0.0, %v3936
    %3938 = vdwg.mxu0
    %3939 = vmatpush.bf16.msra.mxu0 %v3886
    %3940 = vmatpush.bf16.msra.mxu0 %v3884
    %3941 = vmatpush.bf16.msra.mxu0 %v3882
    %3942 = vmatpush.bf16.msra.mxu0 %v3880
    %3943 = vmatpush.bf16.msra.mxu0 %v3878
    %3944 = vmatpush.bf16.msra.mxu0 %v3876
    %3945 = vmatpush.bf16.msra.mxu0 %v3874
    %3946 = vmatpush.bf16.msra.mxu0 %v3872
    %3947 = vmatmul.bf16.gmra.mxu0 %v3186
    %v3948 = vpop.f32.mrf.mxu0
    %v3949 = vadd.f32 %v3930, %v3948
    %v3950 = vpop.f32.mrf.mxu0
    %v3951 = vadd.f32 %v3932, %v3950
    %3952 = vmatmul.bf16.gmra.mxu0 %v3188
    %v3953 = vpop.f32.mrf.mxu0
    %v3954 = vadd.f32 %v3935, %v3953
    %v3955 = vpop.f32.mrf.mxu0
    %v3956 = vadd.f32 %v3937, %v3955
    %3957 = vdwg.mxu0
    %3958 = vmatpush.bf16.msra.mxu0 %v3871
    %3959 = vmatpush.bf16.msra.mxu0 %v3869
    %3960 = vmatpush.bf16.msra.mxu0 %v3867
    %3961 = vmatpush.bf16.msra.mxu0 %v3865
    %3962 = vmatpush.bf16.msra.mxu0 %v3863
    %3963 = vmatpush.bf16.msra.mxu0 %v3861
    %3964 = vmatpush.bf16.msra.mxu0 %v3859
    %3965 = vmatpush.bf16.msra.mxu0 %v3857
    %3966 = vmatmul.bf16.gmra.mxu0 %v3185
    %v3967 = vpop.f32.mrf.mxu0
    %v3968 = vadd.f32 0.0, %v3967
    %v3969 = vpop.f32.mrf.mxu0
    %v3970 = vadd.f32 0.0, %v3969
    %3971 = vmatmul.bf16.gmra.mxu0 %v3187
    %v3972 = vpop.f32.mrf.mxu0
    %v3973 = vadd.f32 0.0, %v3972
    %v3974 = vpop.f32.mrf.mxu0
    %v3975 = vadd.f32 0.0, %v3974
    %3976 = vdwg.mxu0
    %3977 = vmatpush.bf16.msra.mxu0 %v3887
    %3978 = vmatpush.bf16.msra.mxu0 %v3885
    %3979 = vmatpush.bf16.msra.mxu0 %v3883
    %3980 = vmatpush.bf16.msra.mxu0 %v3881
    %3981 = vmatpush.bf16.msra.mxu0 %v3879
    %3982 = vmatpush.bf16.msra.mxu0 %v3877
    %3983 = vmatpush.bf16.msra.mxu0 %v3875
    %3984 = vmatpush.bf16.msra.mxu0 %v3873
    %3985 = vmatmul.bf16.gmra.mxu0 %v3186
    %v3986 = vpop.f32.mrf.mxu0
    %v3987 = vadd.f32 %v3968, %v3986
    %v3988 = vpop.f32.mrf.mxu0
    %v3989 = vadd.f32 %v3970, %v3988
    %3990 = vmatmul.bf16.gmra.mxu0 %v3188
    %v3991 = vpop.f32.mrf.mxu0
    %v3992 = vadd.f32 %v3973, %v3991
    %v3993 = vpop.f32.mrf.mxu0
    %v3994 = vadd.f32 %v3975, %v3993
    %3995 = vdwg.mxu0
    %v3996 = vadd.f32 %v3680, %v3949
    %v3997 = vadd.f32 %v3718, %v3987
    %v3998 = vadd.f32 %v3682, %v3951
    %v3999 = vadd.f32 %v3720, %v3989
    %v4000 = vadd.f32 %v3685, %v3954
    %v4001 = vadd.f32 %v3723, %v3992
    %v4002 = vadd.f32 %v3687, %v3956
    %v4003 = vadd.f32 %v3725, %v3994
    %s4004 = scalar_lea.vmem [#allocation6], 6
    %v4005 = vld [vmem:[%s4004] sm:$0x3]
    %v4007 = vperm.slane %v4005, 0
    %v4008 = vperm.slane %v4005, 1
    %v4011 = vadd.f32 %v3996, %v4007
    %v4012 = vadd.f32 %v3997, %v4008
    %v4013 = vadd.f32 %v3998, %v4007
    %v4014 = vadd.f32 %v3999, %v4008
    %v4015 = vadd.f32 %v4000, %v4007
    %v4016 = vadd.f32 %v4001, %v4008
    %v4017 = vadd.f32 %v4002, %v4007
    %v4018 = vadd.f32 %v4003, %v4008
    %v4019 = vmax.f32 %v4011, 0.0
    %v4020 = vmax.f32 %v4012, 0.0
    %v4021 = vmax.f32 %v4013, 0.0
    %v4022 = vmax.f32 %v4014, 0.0
    %v4023 = vmax.f32 %v4015, 0.0
    %v4024 = vmax.f32 %v4016, 0.0
    %v4025 = vmax.f32 %v4017, 0.0
    %v4026 = vmax.f32 %v4018, 0.0
    %4027 = vst [vmem:[#allocation2 + $0x10] sm:$0xff] %v4019
    %4028 = vst [vmem:[#allocation2 + $0x18] sm:$0xff] %v4020
    %4029 = vst [vmem:[#allocation2 + $0x20] sm:$0xff] %v4021
    %4030 = vst [vmem:[#allocation2 + $0x28] sm:$0xff] %v4022
    %4031 = vst [vmem:[#allocation2 + $0x30] sm:$0xff] %v4023
    %4032 = vst [vmem:[#allocation2 + $0x38] sm:$0xff] %v4024
    %4033 = vst [vmem:[#allocation2 + $0x40] sm:$0xff] %v4025
    %4034 = vst [vmem:[#allocation2 + $0x48] sm:$0xff] %v4026
    %v4035 = vpack.c.bf16 %v4021, %v4019
    %v4036 = vpack.c.bf16 %v4022, %v4020
    %v4037 = vpack.c.bf16 %v4025, %v4023
    %v4038 = vpack.c.bf16 %v4026, %v4024
    %v4039 = vld [vmem:[#allocation2] sm:$0x80]
    %v4040 = vld [vmem:[#allocation2 + $0x8] sm:$0x80]
    %v4041 = vld [vmem:[#allocation2 + $0x10] sm:$0xff]
    %v4042 = vld [vmem:[#allocation2 + $0x18] sm:$0xff]
    %v4043 = vld [vmem:[#allocation2 + $0x20] sm:$0xff]
    %v4044 = vld [vmem:[#allocation2 + $0x28] sm:$0xff]
    %v4045 = vld [vmem:[#allocation2 + $0x30] sm:$0xff]
    %v4046 = vld [vmem:[#allocation2 + $0x38] sm:$0xff]
    %v4047 = vld [vmem:[#allocation2 + $0x40] sm:$0x7f]
    %v4048 = vld [vmem:[#allocation2 + $0x48] sm:$0x7f]
    %v4059 = vrot.slane %v4039, 7
    %v4060 = vrot.slane %v4041, 7
    %v4061 = vsel %vm155, %v4059, %v4060
    %v4062 = vrot.slane %v4040, 7
    %v4063 = vrot.slane %v4042, 7
    %v4064 = vsel %vm155, %v4062, %v4063
    %v4065 = vrot.slane %v4043, 7
    %v4066 = vsel %vm155, %v4060, %v4065
    %v4067 = vrot.slane %v4044, 7
    %v4068 = vsel %vm155, %v4063, %v4067
    %v4069 = vrot.slane %v4045, 7
    %v4070 = vsel %vm155, %v4065, %v4069
    %v4071 = vrot.slane %v4046, 7
    %v4072 = vsel %vm155, %v4067, %v4071
    %v4073 = vrot.slane %v4047, 7
    %v4074 = vsel %vm155, %v4069, %v4073
    %v4075 = vrot.slane %v4048, 7
    %v4076 = vsel %vm155, %v4071, %v4075
    %v4085 = vsel %vm141, %v4061, 0.0
    %v4086 = vsel %vm141, %v4064, 0.0
    %v4087 = vsel %vm142, %v4066, 0.0
    %v4088 = vsel %vm142, %v4068, 0.0
    %v4089 = vsel %vm143, %v4070, 0.0
    %v4090 = vsel %vm143, %v4072, 0.0
    %v4091 = vsel %vm144, %v4074, 0.0
    %v4092 = vsel %vm144, %v4076, 0.0
    %v4093 = vpack.c.bf16 %v4087, %v4085
    %v4094 = vpack.c.bf16 %v4088, %v4086
    %v4095 = vpack.c.bf16 %v4091, %v4089
    %v4096 = vpack.c.bf16 %v4092, %v4090
    %v4097 = vld [vmem:[#allocation2 + $0x10] sm:$0xfe]
    %v4098 = vld [vmem:[#allocation2 + $0x18] sm:$0xfe]
    %v4099 = vld [vmem:[#allocation2 + $0x20] sm:$0xff]
    %v4100 = vld [vmem:[#allocation2 + $0x28] sm:$0xff]
    %v4101 = vld [vmem:[#allocation2 + $0x30] sm:$0xff]
    %v4102 = vld [vmem:[#allocation2 + $0x38] sm:$0xff]
    %v4103 = vld [vmem:[#allocation2 + $0x40] sm:$0xff]
    %v4104 = vld [vmem:[#allocation2 + $0x48] sm:$0xff]
    %v4105 = vld [vmem:[#allocation2 + $0x50] sm:$0x1]
    %v4106 = vld [vmem:[#allocation2 + $0x58] sm:$0x1]
    %v4117 = vrot.slane %v4097, 1
    %v4118 = vrot.slane %v4099, 1
    %v4119 = vsel %vm222, %v4117, %v4118
    %v4120 = vrot.slane %v4098, 1
    %v4121 = vrot.slane %v4100, 1
    %v4122 = vsel %vm222, %v4120, %v4121
    %v4123 = vrot.slane %v4101, 1
    %v4124 = vsel %vm222, %v4118, %v4123
    %v4125 = vrot.slane %v4102, 1
    %v4126 = vsel %vm222, %v4121, %v4125
    %v4127 = vrot.slane %v4103, 1
    %v4128 = vsel %vm222, %v4123, %v4127
    %v4129 = vrot.slane %v4104, 1
    %v4130 = vsel %vm222, %v4125, %v4129
    %v4131 = vrot.slane %v4105, 1
    %v4132 = vsel %vm222, %v4127, %v4131
    %v4133 = vrot.slane %v4106, 1
    %v4134 = vsel %vm222, %v4129, %v4133
    %v4143 = vsel %vm208, %v4119, 0.0
    %v4144 = vsel %vm208, %v4122, 0.0
    %v4145 = vsel %vm209, %v4124, 0.0
    %v4146 = vsel %vm209, %v4126, 0.0
    %v4147 = vsel %vm210, %v4128, 0.0
    %v4148 = vsel %vm210, %v4130, 0.0
    %v4149 = vsel %vm211, %v4132, 0.0
    %v4150 = vsel %vm211, %v4134, 0.0
    %v4151 = vpack.c.bf16 %v4145, %v4143
    %v4152 = vpack.c.bf16 %v4146, %v4144
    %v4153 = vpack.c.bf16 %v4149, %v4147
    %v4154 = vpack.c.bf16 %v4150, %v4148
    %s4155 = scalar_lea.vmem [#allocation4], 3072
    %v4156 = vld [vmem:[%s4155] sm:$0xff]
    %v4157 = vld [vmem:[%s4155 + $0x8] sm:$0xff]
    %v4158 = vld [vmem:[%s4155 + $0x10] sm:$0xff]
    %v4159 = vld [vmem:[%s4155 + $0x18] sm:$0xff]
    %v4160 = vld [vmem:[%s4155 + $0x20] sm:$0xff]
    %v4161 = vld [vmem:[%s4155 + $0x28] sm:$0xff]
    %v4162 = vld [vmem:[%s4155 + $0x30] sm:$0xff]
    %v4163 = vld [vmem:[%s4155 + $0x38] sm:$0xff]
    %v4164 = vld [vmem:[%s4155 + $0x40] sm:$0xff]
    %v4165 = vld [vmem:[%s4155 + $0x48] sm:$0xff]
    %v4166 = vld [vmem:[%s4155 + $0x50] sm:$0xff]
    %v4167 = vld [vmem:[%s4155 + $0x58] sm:$0xff]
    %v4168 = vld [vmem:[%s4155 + $0x60] sm:$0xff]
    %v4169 = vld [vmem:[%s4155 + $0x68] sm:$0xff]
    %v4170 = vld [vmem:[%s4155 + $0x70] sm:$0xff]
    %v4171 = vld [vmem:[%s4155 + $0x78] sm:$0xff]
    %v4172 = vld [vmem:[%s4155 + $0x80] sm:$0xff]
    %v4173 = vld [vmem:[%s4155 + $0x88] sm:$0xff]
    %v4174 = vld [vmem:[%s4155 + $0x90] sm:$0xff]
    %v4175 = vld [vmem:[%s4155 + $0x98] sm:$0xff]
    %v4176 = vld [vmem:[%s4155 + $0xa0] sm:$0xff]
    %v4177 = vld [vmem:[%s4155 + $0xa8] sm:$0xff]
    %v4178 = vld [vmem:[%s4155 + $0xb0] sm:$0xff]
    %v4179 = vld [vmem:[%s4155 + $0xb8] sm:$0xff]
    %v4180 = vld [vmem:[%s4155 + $0xc0] sm:$0xff]
    %v4181 = vld [vmem:[%s4155 + $0xc8] sm:$0xff]
    %v4182 = vld [vmem:[%s4155 + $0xd0] sm:$0xff]
    %v4183 = vld [vmem:[%s4155 + $0xd8] sm:$0xff]
    %v4184 = vld [vmem:[%s4155 + $0xe0] sm:$0xff]
    %v4185 = vld [vmem:[%s4155 + $0xe8] sm:$0xff]
    %v4186 = vld [vmem:[%s4155 + $0xf0] sm:$0xff]
    %v4187 = vld [vmem:[%s4155 + $0xf8] sm:$0xff]
    %s4188 = scalar_lea.vmem [#allocation4], 3328
    %v4189 = vld [vmem:[%s4188] sm:$0xff]
    %v4190 = vld [vmem:[%s4188 + $0x8] sm:$0xff]
    %v4191 = vld [vmem:[%s4188 + $0x10] sm:$0xff]
    %v4192 = vld [vmem:[%s4188 + $0x18] sm:$0xff]
    %v4193 = vld [vmem:[%s4188 + $0x20] sm:$0xff]
    %v4194 = vld [vmem:[%s4188 + $0x28] sm:$0xff]
    %v4195 = vld [vmem:[%s4188 + $0x30] sm:$0xff]
    %v4196 = vld [vmem:[%s4188 + $0x38] sm:$0xff]
    %v4197 = vld [vmem:[%s4188 + $0x40] sm:$0xff]
    %v4198 = vld [vmem:[%s4188 + $0x48] sm:$0xff]
    %v4199 = vld [vmem:[%s4188 + $0x50] sm:$0xff]
    %v4200 = vld [vmem:[%s4188 + $0x58] sm:$0xff]
    %v4201 = vld [vmem:[%s4188 + $0x60] sm:$0xff]
    %v4202 = vld [vmem:[%s4188 + $0x68] sm:$0xff]
    %v4203 = vld [vmem:[%s4188 + $0x70] sm:$0xff]
    %v4204 = vld [vmem:[%s4188 + $0x78] sm:$0xff]
    %v4205 = vld [vmem:[%s4188 + $0x80] sm:$0xff]
    %v4206 = vld [vmem:[%s4188 + $0x88] sm:$0xff]
    %v4207 = vld [vmem:[%s4188 + $0x90] sm:$0xff]
    %v4208 = vld [vmem:[%s4188 + $0x98] sm:$0xff]
    %v4209 = vld [vmem:[%s4188 + $0xa0] sm:$0xff]
    %v4210 = vld [vmem:[%s4188 + $0xa8] sm:$0xff]
    %v4211 = vld [vmem:[%s4188 + $0xb0] sm:$0xff]
    %v4212 = vld [vmem:[%s4188 + $0xb8] sm:$0xff]
    %v4213 = vld [vmem:[%s4188 + $0xc0] sm:$0xff]
    %v4214 = vld [vmem:[%s4188 + $0xc8] sm:$0xff]
    %v4215 = vld [vmem:[%s4188 + $0xd0] sm:$0xff]
    %v4216 = vld [vmem:[%s4188 + $0xd8] sm:$0xff]
    %v4217 = vld [vmem:[%s4188 + $0xe0] sm:$0xff]
    %v4218 = vld [vmem:[%s4188 + $0xe8] sm:$0xff]
    %v4219 = vld [vmem:[%s4188 + $0xf0] sm:$0xff]
    %v4220 = vld [vmem:[%s4188 + $0xf8] sm:$0xff]
    %v4253 = vunpack.c.l.b16 %v4189
    %v4254 = vunpack.c.h.b16 %v4189
    %v4255 = vunpack.c.l.b16 %v4190
    %v4256 = vunpack.c.h.b16 %v4190
    %v4257 = vunpack.c.l.b16 %v4191
    %v4258 = vunpack.c.h.b16 %v4191
    %v4259 = vunpack.c.l.b16 %v4192
    %v4260 = vunpack.c.h.b16 %v4192
    %v4261 = vunpack.c.l.b16 %v4193
    %v4262 = vunpack.c.h.b16 %v4193
    %v4263 = vunpack.c.l.b16 %v4194
    %v4264 = vunpack.c.h.b16 %v4194
    %v4265 = vunpack.c.l.b16 %v4195
    %v4266 = vunpack.c.h.b16 %v4195
    %v4267 = vunpack.c.l.b16 %v4196
    %v4268 = vunpack.c.h.b16 %v4196
    %v4269 = vunpack.c.l.b16 %v4197
    %v4270 = vunpack.c.h.b16 %v4197
    %v4271 = vunpack.c.l.b16 %v4198
    %v4272 = vunpack.c.h.b16 %v4198
    %v4273 = vunpack.c.l.b16 %v4199
    %v4274 = vunpack.c.h.b16 %v4199
    %v4275 = vunpack.c.l.b16 %v4200
    %v4276 = vunpack.c.h.b16 %v4200
    %v4277 = vunpack.c.l.b16 %v4201
    %v4278 = vunpack.c.h.b16 %v4201
    %v4279 = vunpack.c.l.b16 %v4202
    %v4280 = vunpack.c.h.b16 %v4202
    %v4281 = vunpack.c.l.b16 %v4203
    %v4282 = vunpack.c.h.b16 %v4203
    %v4283 = vunpack.c.l.b16 %v4204
    %v4284 = vunpack.c.h.b16 %v4204
    %v4285 = vunpack.c.l.b16 %v4205
    %v4286 = vunpack.c.h.b16 %v4205
    %v4287 = vunpack.c.l.b16 %v4206
    %v4288 = vunpack.c.h.b16 %v4206
    %v4289 = vunpack.c.l.b16 %v4207
    %v4290 = vunpack.c.h.b16 %v4207
    %v4291 = vunpack.c.l.b16 %v4208
    %v4292 = vunpack.c.h.b16 %v4208
    %v4293 = vunpack.c.l.b16 %v4209
    %v4294 = vunpack.c.h.b16 %v4209
    %v4295 = vunpack.c.l.b16 %v4210
    %v4296 = vunpack.c.h.b16 %v4210
    %v4297 = vunpack.c.l.b16 %v4211
    %v4298 = vunpack.c.h.b16 %v4211
    %v4299 = vunpack.c.l.b16 %v4212
    %v4300 = vunpack.c.h.b16 %v4212
    %v4301 = vunpack.c.l.b16 %v4213
    %v4302 = vunpack.c.h.b16 %v4213
    %v4303 = vunpack.c.l.b16 %v4214
    %v4304 = vunpack.c.h.b16 %v4214
    %v4305 = vunpack.c.l.b16 %v4215
    %v4306 = vunpack.c.h.b16 %v4215
    %v4307 = vunpack.c.l.b16 %v4216
    %v4308 = vunpack.c.h.b16 %v4216
    %v4309 = vunpack.c.l.b16 %v4217
    %v4310 = vunpack.c.h.b16 %v4217
    %v4311 = vunpack.c.l.b16 %v4218
    %v4312 = vunpack.c.h.b16 %v4218
    %v4313 = vunpack.c.l.b16 %v4219
    %v4314 = vunpack.c.h.b16 %v4219
    %v4315 = vunpack.c.l.b16 %v4220
    %v4316 = vunpack.c.h.b16 %v4220
    %v4317 = vpack.c.b16 %v4255, %v4253
    %v4318 = vpack.c.b16 %v4256, %v4254
    %v4319 = vpack.c.b16 %v4259, %v4257
    %v4320 = vpack.c.b16 %v4260, %v4258
    %v4321 = vpack.c.b16 %v4263, %v4261
    %v4322 = vpack.c.b16 %v4264, %v4262
    %v4323 = vpack.c.b16 %v4267, %v4265
    %v4324 = vpack.c.b16 %v4268, %v4266
    %v4325 = vpack.c.b16 %v4271, %v4269
    %v4326 = vpack.c.b16 %v4272, %v4270
    %v4327 = vpack.c.b16 %v4275, %v4273
    %v4328 = vpack.c.b16 %v4276, %v4274
    %v4329 = vpack.c.b16 %v4279, %v4277
    %v4330 = vpack.c.b16 %v4280, %v4278
    %v4331 = vpack.c.b16 %v4283, %v4281
    %v4332 = vpack.c.b16 %v4284, %v4282
    %v4333 = vpack.c.b16 %v4287, %v4285
    %v4334 = vpack.c.b16 %v4288, %v4286
    %v4335 = vpack.c.b16 %v4291, %v4289
    %v4336 = vpack.c.b16 %v4292, %v4290
    %v4337 = vpack.c.b16 %v4295, %v4293
    %v4338 = vpack.c.b16 %v4296, %v4294
    %v4339 = vpack.c.b16 %v4299, %v4297
    %v4340 = vpack.c.b16 %v4300, %v4298
    %v4341 = vpack.c.b16 %v4303, %v4301
    %v4342 = vpack.c.b16 %v4304, %v4302
    %v4343 = vpack.c.b16 %v4307, %v4305
    %v4344 = vpack.c.b16 %v4308, %v4306
    %v4345 = vpack.c.b16 %v4311, %v4309
    %v4346 = vpack.c.b16 %v4312, %v4310
    %v4347 = vpack.c.b16 %v4315, %v4313
    %v4348 = vpack.c.b16 %v4316, %v4314
    %4381 = vmatpush.bf16.msra.mxu0 %v4331
    %4382 = vmatpush.bf16.msra.mxu0 %v4329
    %4383 = vmatpush.bf16.msra.mxu0 %v4327
    %4384 = vmatpush.bf16.msra.mxu0 %v4325
    %4385 = vmatpush.bf16.msra.mxu0 %v4323
    %4386 = vmatpush.bf16.msra.mxu0 %v4321
    %4387 = vmatpush.bf16.msra.mxu0 %v4319
    %4388 = vmatpush.bf16.msra.mxu0 %v4317
    %4389 = vmatmul.bf16.gmra.mxu0 %v4035
    %v4390 = vpop.f32.mrf.mxu0
    %v4391 = vadd.f32 0.0, %v4390
    %v4392 = vpop.f32.mrf.mxu0
    %v4393 = vadd.f32 0.0, %v4392
    %4394 = vmatmul.bf16.gmra.mxu0 %v4037
    %v4395 = vpop.f32.mrf.mxu0
    %v4396 = vadd.f32 0.0, %v4395
    %v4397 = vpop.f32.mrf.mxu0
    %v4398 = vadd.f32 0.0, %v4397
    %4399 = vdwg.mxu0
    %4400 = vmatpush.bf16.msra.mxu0 %v4347
    %4401 = vmatpush.bf16.msra.mxu0 %v4345
    %4402 = vmatpush.bf16.msra.mxu0 %v4343
    %4403 = vmatpush.bf16.msra.mxu0 %v4341
    %4404 = vmatpush.bf16.msra.mxu0 %v4339
    %4405 = vmatpush.bf16.msra.mxu0 %v4337
    %4406 = vmatpush.bf16.msra.mxu0 %v4335
    %4407 = vmatpush.bf16.msra.mxu0 %v4333
    %4408 = vmatmul.bf16.gmra.mxu0 %v4036
    %v4409 = vpop.f32.mrf.mxu0
    %v4410 = vadd.f32 %v4391, %v4409
    %v4411 = vpop.f32.mrf.mxu0
    %v4412 = vadd.f32 %v4393, %v4411
    %4413 = vmatmul.bf16.gmra.mxu0 %v4038
    %v4414 = vpop.f32.mrf.mxu0
    %v4415 = vadd.f32 %v4396, %v4414
    %v4416 = vpop.f32.mrf.mxu0
    %v4417 = vadd.f32 %v4398, %v4416
    %4418 = vdwg.mxu0
    %4419 = vmatpush.bf16.msra.mxu0 %v4332
    %4420 = vmatpush.bf16.msra.mxu0 %v4330
    %4421 = vmatpush.bf16.msra.mxu0 %v4328
    %4422 = vmatpush.bf16.msra.mxu0 %v4326
    %4423 = vmatpush.bf16.msra.mxu0 %v4324
    %4424 = vmatpush.bf16.msra.mxu0 %v4322
    %4425 = vmatpush.bf16.msra.mxu0 %v4320
    %4426 = vmatpush.bf16.msra.mxu0 %v4318
    %4427 = vmatmul.bf16.gmra.mxu0 %v4035
    %v4428 = vpop.f32.mrf.mxu0
    %v4429 = vadd.f32 0.0, %v4428
    %v4430 = vpop.f32.mrf.mxu0
    %v4431 = vadd.f32 0.0, %v4430
    %4432 = vmatmul.bf16.gmra.mxu0 %v4037
    %v4433 = vpop.f32.mrf.mxu0
    %v4434 = vadd.f32 0.0, %v4433
    %v4435 = vpop.f32.mrf.mxu0
    %v4436 = vadd.f32 0.0, %v4435
    %4437 = vdwg.mxu0
    %4438 = vmatpush.bf16.msra.mxu0 %v4348
    %4439 = vmatpush.bf16.msra.mxu0 %v4346
    %4440 = vmatpush.bf16.msra.mxu0 %v4344
    %4441 = vmatpush.bf16.msra.mxu0 %v4342
    %4442 = vmatpush.bf16.msra.mxu0 %v4340
    %4443 = vmatpush.bf16.msra.mxu0 %v4338
    %4444 = vmatpush.bf16.msra.mxu0 %v4336
    %4445 = vmatpush.bf16.msra.mxu0 %v4334
    %4446 = vmatmul.bf16.gmra.mxu0 %v4036
    %v4447 = vpop.f32.mrf.mxu0
    %v4448 = vadd.f32 %v4429, %v4447
    %v4449 = vpop.f32.mrf.mxu0
    %v4450 = vadd.f32 %v4431, %v4449
    %4451 = vmatmul.bf16.gmra.mxu0 %v4038
    %v4452 = vpop.f32.mrf.mxu0
    %v4453 = vadd.f32 %v4434, %v4452
    %v4454 = vpop.f32.mrf.mxu0
    %v4455 = vadd.f32 %v4436, %v4454
    %4456 = vdwg.mxu0
    %v4489 = vunpack.c.l.b16 %v4156
    %v4490 = vunpack.c.h.b16 %v4156
    %v4491 = vunpack.c.l.b16 %v4157
    %v4492 = vunpack.c.h.b16 %v4157
    %v4493 = vunpack.c.l.b16 %v4158
    %v4494 = vunpack.c.h.b16 %v4158
    %v4495 = vunpack.c.l.b16 %v4159
    %v4496 = vunpack.c.h.b16 %v4159
    %v4497 = vunpack.c.l.b16 %v4160
    %v4498 = vunpack.c.h.b16 %v4160
    %v4499 = vunpack.c.l.b16 %v4161
    %v4500 = vunpack.c.h.b16 %v4161
    %v4501 = vunpack.c.l.b16 %v4162
    %v4502 = vunpack.c.h.b16 %v4162
    %v4503 = vunpack.c.l.b16 %v4163
    %v4504 = vunpack.c.h.b16 %v4163
    %v4505 = vunpack.c.l.b16 %v4164
    %v4506 = vunpack.c.h.b16 %v4164
    %v4507 = vunpack.c.l.b16 %v4165
    %v4508 = vunpack.c.h.b16 %v4165
    %v4509 = vunpack.c.l.b16 %v4166
    %v4510 = vunpack.c.h.b16 %v4166
    %v4511 = vunpack.c.l.b16 %v4167
    %v4512 = vunpack.c.h.b16 %v4167
    %v4513 = vunpack.c.l.b16 %v4168
    %v4514 = vunpack.c.h.b16 %v4168
    %v4515 = vunpack.c.l.b16 %v4169
    %v4516 = vunpack.c.h.b16 %v4169
    %v4517 = vunpack.c.l.b16 %v4170
    %v4518 = vunpack.c.h.b16 %v4170
    %v4519 = vunpack.c.l.b16 %v4171
    %v4520 = vunpack.c.h.b16 %v4171
    %v4521 = vunpack.c.l.b16 %v4172
    %v4522 = vunpack.c.h.b16 %v4172
    %v4523 = vunpack.c.l.b16 %v4173
    %v4524 = vunpack.c.h.b16 %v4173
    %v4525 = vunpack.c.l.b16 %v4174
    %v4526 = vunpack.c.h.b16 %v4174
    %v4527 = vunpack.c.l.b16 %v4175
    %v4528 = vunpack.c.h.b16 %v4175
    %v4529 = vunpack.c.l.b16 %v4176
    %v4530 = vunpack.c.h.b16 %v4176
    %v4531 = vunpack.c.l.b16 %v4177
    %v4532 = vunpack.c.h.b16 %v4177
    %v4533 = vunpack.c.l.b16 %v4178
    %v4534 = vunpack.c.h.b16 %v4178
    %v4535 = vunpack.c.l.b16 %v4179
    %v4536 = vunpack.c.h.b16 %v4179
    %v4537 = vunpack.c.l.b16 %v4180
    %v4538 = vunpack.c.h.b16 %v4180
    %v4539 = vunpack.c.l.b16 %v4181
    %v4540 = vunpack.c.h.b16 %v4181
    %v4541 = vunpack.c.l.b16 %v4182
    %v4542 = vunpack.c.h.b16 %v4182
    %v4543 = vunpack.c.l.b16 %v4183
    %v4544 = vunpack.c.h.b16 %v4183
    %v4545 = vunpack.c.l.b16 %v4184
    %v4546 = vunpack.c.h.b16 %v4184
    %v4547 = vunpack.c.l.b16 %v4185
    %v4548 = vunpack.c.h.b16 %v4185
    %v4549 = vunpack.c.l.b16 %v4186
    %v4550 = vunpack.c.h.b16 %v4186
    %v4551 = vunpack.c.l.b16 %v4187
    %v4552 = vunpack.c.h.b16 %v4187
    %v4553 = vpack.c.b16 %v4491, %v4489
    %v4554 = vpack.c.b16 %v4492, %v4490
    %v4555 = vpack.c.b16 %v4495, %v4493
    %v4556 = vpack.c.b16 %v4496, %v4494
    %v4557 = vpack.c.b16 %v4499, %v4497
    %v4558 = vpack.c.b16 %v4500, %v4498
    %v4559 = vpack.c.b16 %v4503, %v4501
    %v4560 = vpack.c.b16 %v4504, %v4502
    %v4561 = vpack.c.b16 %v4507, %v4505
    %v4562 = vpack.c.b16 %v4508, %v4506
    %v4563 = vpack.c.b16 %v4511, %v4509
    %v4564 = vpack.c.b16 %v4512, %v4510
    %v4565 = vpack.c.b16 %v4515, %v4513
    %v4566 = vpack.c.b16 %v4516, %v4514
    %v4567 = vpack.c.b16 %v4519, %v4517
    %v4568 = vpack.c.b16 %v4520, %v4518
    %v4569 = vpack.c.b16 %v4523, %v4521
    %v4570 = vpack.c.b16 %v4524, %v4522
    %v4571 = vpack.c.b16 %v4527, %v4525
    %v4572 = vpack.c.b16 %v4528, %v4526
    %v4573 = vpack.c.b16 %v4531, %v4529
    %v4574 = vpack.c.b16 %v4532, %v4530
    %v4575 = vpack.c.b16 %v4535, %v4533
    %v4576 = vpack.c.b16 %v4536, %v4534
    %v4577 = vpack.c.b16 %v4539, %v4537
    %v4578 = vpack.c.b16 %v4540, %v4538
    %v4579 = vpack.c.b16 %v4543, %v4541
    %v4580 = vpack.c.b16 %v4544, %v4542
    %v4581 = vpack.c.b16 %v4547, %v4545
    %v4582 = vpack.c.b16 %v4548, %v4546
    %v4583 = vpack.c.b16 %v4551, %v4549
    %v4584 = vpack.c.b16 %v4552, %v4550
    %4617 = vmatpush.bf16.msra.mxu0 %v4567
    %4618 = vmatpush.bf16.msra.mxu0 %v4565
    %4619 = vmatpush.bf16.msra.mxu0 %v4563
    %4620 = vmatpush.bf16.msra.mxu0 %v4561
    %4621 = vmatpush.bf16.msra.mxu0 %v4559
    %4622 = vmatpush.bf16.msra.mxu0 %v4557
    %4623 = vmatpush.bf16.msra.mxu0 %v4555
    %4624 = vmatpush.bf16.msra.mxu0 %v4553
    %4625 = vmatmul.bf16.gmra.mxu0 %v4093
    %v4626 = vpop.f32.mrf.mxu0
    %v4627 = vadd.f32 %v4410, %v4626
    %v4628 = vpop.f32.mrf.mxu0
    %v4629 = vadd.f32 %v4412, %v4628
    %4630 = vmatmul.bf16.gmra.mxu0 %v4095
    %v4631 = vpop.f32.mrf.mxu0
    %v4632 = vadd.f32 %v4415, %v4631
    %v4633 = vpop.f32.mrf.mxu0
    %v4634 = vadd.f32 %v4417, %v4633
    %4635 = vdwg.mxu0
    %4636 = vmatpush.bf16.msra.mxu0 %v4583
    %4637 = vmatpush.bf16.msra.mxu0 %v4581
    %4638 = vmatpush.bf16.msra.mxu0 %v4579
    %4639 = vmatpush.bf16.msra.mxu0 %v4577
    %4640 = vmatpush.bf16.msra.mxu0 %v4575
    %4641 = vmatpush.bf16.msra.mxu0 %v4573
    %4642 = vmatpush.bf16.msra.mxu0 %v4571
    %4643 = vmatpush.bf16.msra.mxu0 %v4569
    %4644 = vmatmul.bf16.gmra.mxu0 %v4094
    %v4645 = vpop.f32.mrf.mxu0
    %v4646 = vadd.f32 %v4627, %v4645
    %v4647 = vpop.f32.mrf.mxu0
    %v4648 = vadd.f32 %v4629, %v4647
    %4649 = vmatmul.bf16.gmra.mxu0 %v4096
    %v4650 = vpop.f32.mrf.mxu0
    %v4651 = vadd.f32 %v4632, %v4650
    %v4652 = vpop.f32.mrf.mxu0
    %v4653 = vadd.f32 %v4634, %v4652
    %4654 = vdwg.mxu0
    %4655 = vmatpush.bf16.msra.mxu0 %v4568
    %4656 = vmatpush.bf16.msra.mxu0 %v4566
    %4657 = vmatpush.bf16.msra.mxu0 %v4564
    %4658 = vmatpush.bf16.msra.mxu0 %v4562
    %4659 = vmatpush.bf16.msra.mxu0 %v4560
    %4660 = vmatpush.bf16.msra.mxu0 %v4558
    %4661 = vmatpush.bf16.msra.mxu0 %v4556
    %4662 = vmatpush.bf16.msra.mxu0 %v4554
    %4663 = vmatmul.bf16.gmra.mxu0 %v4093
    %v4664 = vpop.f32.mrf.mxu0
    %v4665 = vadd.f32 %v4448, %v4664
    %v4666 = vpop.f32.mrf.mxu0
    %v4667 = vadd.f32 %v4450, %v4666
    %4668 = vmatmul.bf16.gmra.mxu0 %v4095
    %v4669 = vpop.f32.mrf.mxu0
    %v4670 = vadd.f32 %v4453, %v4669
    %v4671 = vpop.f32.mrf.mxu0
    %v4672 = vadd.f32 %v4455, %v4671
    %4673 = vdwg.mxu0
    %4674 = vmatpush.bf16.msra.mxu0 %v4584
    %4675 = vmatpush.bf16.msra.mxu0 %v4582
    %4676 = vmatpush.bf16.msra.mxu0 %v4580
    %4677 = vmatpush.bf16.msra.mxu0 %v4578
    %4678 = vmatpush.bf16.msra.mxu0 %v4576
    %4679 = vmatpush.bf16.msra.mxu0 %v4574
    %4680 = vmatpush.bf16.msra.mxu0 %v4572
    %4681 = vmatpush.bf16.msra.mxu0 %v4570
    %4682 = vmatmul.bf16.gmra.mxu0 %v4094
    %v4683 = vpop.f32.mrf.mxu0
    %v4684 = vadd.f32 %v4665, %v4683
    %v4685 = vpop.f32.mrf.mxu0
    %v4686 = vadd.f32 %v4667, %v4685
    %4687 = vmatmul.bf16.gmra.mxu0 %v4096
    %v4688 = vpop.f32.mrf.mxu0
    %v4689 = vadd.f32 %v4670, %v4688
    %v4690 = vpop.f32.mrf.mxu0
    %v4691 = vadd.f32 %v4672, %v4690
    %4692 = vdwg.mxu0
    %s4693 = scalar_lea.vmem [#allocation4], 3584
    %v4694 = vld [vmem:[%s4693] sm:$0xff]
    %v4695 = vld [vmem:[%s4693 + $0x8] sm:$0xff]
    %v4696 = vld [vmem:[%s4693 + $0x10] sm:$0xff]
    %v4697 = vld [vmem:[%s4693 + $0x18] sm:$0xff]
    %v4698 = vld [vmem:[%s4693 + $0x20] sm:$0xff]
    %v4699 = vld [vmem:[%s4693 + $0x28] sm:$0xff]
    %v4700 = vld [vmem:[%s4693 + $0x30] sm:$0xff]
    %v4701 = vld [vmem:[%s4693 + $0x38] sm:$0xff]
    %v4702 = vld [vmem:[%s4693 + $0x40] sm:$0xff]
    %v4703 = vld [vmem:[%s4693 + $0x48] sm:$0xff]
    %v4704 = vld [vmem:[%s4693 + $0x50] sm:$0xff]
    %v4705 = vld [vmem:[%s4693 + $0x58] sm:$0xff]
    %v4706 = vld [vmem:[%s4693 + $0x60] sm:$0xff]
    %v4707 = vld [vmem:[%s4693 + $0x68] sm:$0xff]
    %v4708 = vld [vmem:[%s4693 + $0x70] sm:$0xff]
    %v4709 = vld [vmem:[%s4693 + $0x78] sm:$0xff]
    %v4710 = vld [vmem:[%s4693 + $0x80] sm:$0xff]
    %v4711 = vld [vmem:[%s4693 + $0x88] sm:$0xff]
    %v4712 = vld [vmem:[%s4693 + $0x90] sm:$0xff]
    %v4713 = vld [vmem:[%s4693 + $0x98] sm:$0xff]
    %v4714 = vld [vmem:[%s4693 + $0xa0] sm:$0xff]
    %v4715 = vld [vmem:[%s4693 + $0xa8] sm:$0xff]
    %v4716 = vld [vmem:[%s4693 + $0xb0] sm:$0xff]
    %v4717 = vld [vmem:[%s4693 + $0xb8] sm:$0xff]
    %v4718 = vld [vmem:[%s4693 + $0xc0] sm:$0xff]
    %v4719 = vld [vmem:[%s4693 + $0xc8] sm:$0xff]
    %v4720 = vld [vmem:[%s4693 + $0xd0] sm:$0xff]
    %v4721 = vld [vmem:[%s4693 + $0xd8] sm:$0xff]
    %v4722 = vld [vmem:[%s4693 + $0xe0] sm:$0xff]
    %v4723 = vld [vmem:[%s4693 + $0xe8] sm:$0xff]
    %v4724 = vld [vmem:[%s4693 + $0xf0] sm:$0xff]
    %v4725 = vld [vmem:[%s4693 + $0xf8] sm:$0xff]
    %v4758 = vunpack.c.l.b16 %v4694
    %v4759 = vunpack.c.h.b16 %v4694
    %v4760 = vunpack.c.l.b16 %v4695
    %v4761 = vunpack.c.h.b16 %v4695
    %v4762 = vunpack.c.l.b16 %v4696
    %v4763 = vunpack.c.h.b16 %v4696
    %v4764 = vunpack.c.l.b16 %v4697
    %v4765 = vunpack.c.h.b16 %v4697
    %v4766 = vunpack.c.l.b16 %v4698
    %v4767 = vunpack.c.h.b16 %v4698
    %v4768 = vunpack.c.l.b16 %v4699
    %v4769 = vunpack.c.h.b16 %v4699
    %v4770 = vunpack.c.l.b16 %v4700
    %v4771 = vunpack.c.h.b16 %v4700
    %v4772 = vunpack.c.l.b16 %v4701
    %v4773 = vunpack.c.h.b16 %v4701
    %v4774 = vunpack.c.l.b16 %v4702
    %v4775 = vunpack.c.h.b16 %v4702
    %v4776 = vunpack.c.l.b16 %v4703
    %v4777 = vunpack.c.h.b16 %v4703
    %v4778 = vunpack.c.l.b16 %v4704
    %v4779 = vunpack.c.h.b16 %v4704
    %v4780 = vunpack.c.l.b16 %v4705
    %v4781 = vunpack.c.h.b16 %v4705
    %v4782 = vunpack.c.l.b16 %v4706
    %v4783 = vunpack.c.h.b16 %v4706
    %v4784 = vunpack.c.l.b16 %v4707
    %v4785 = vunpack.c.h.b16 %v4707
    %v4786 = vunpack.c.l.b16 %v4708
    %v4787 = vunpack.c.h.b16 %v4708
    %v4788 = vunpack.c.l.b16 %v4709
    %v4789 = vunpack.c.h.b16 %v4709
    %v4790 = vunpack.c.l.b16 %v4710
    %v4791 = vunpack.c.h.b16 %v4710
    %v4792 = vunpack.c.l.b16 %v4711
    %v4793 = vunpack.c.h.b16 %v4711
    %v4794 = vunpack.c.l.b16 %v4712
    %v4795 = vunpack.c.h.b16 %v4712
    %v4796 = vunpack.c.l.b16 %v4713
    %v4797 = vunpack.c.h.b16 %v4713
    %v4798 = vunpack.c.l.b16 %v4714
    %v4799 = vunpack.c.h.b16 %v4714
    %v4800 = vunpack.c.l.b16 %v4715
    %v4801 = vunpack.c.h.b16 %v4715
    %v4802 = vunpack.c.l.b16 %v4716
    %v4803 = vunpack.c.h.b16 %v4716
    %v4804 = vunpack.c.l.b16 %v4717
    %v4805 = vunpack.c.h.b16 %v4717
    %v4806 = vunpack.c.l.b16 %v4718
    %v4807 = vunpack.c.h.b16 %v4718
    %v4808 = vunpack.c.l.b16 %v4719
    %v4809 = vunpack.c.h.b16 %v4719
    %v4810 = vunpack.c.l.b16 %v4720
    %v4811 = vunpack.c.h.b16 %v4720
    %v4812 = vunpack.c.l.b16 %v4721
    %v4813 = vunpack.c.h.b16 %v4721
    %v4814 = vunpack.c.l.b16 %v4722
    %v4815 = vunpack.c.h.b16 %v4722
    %v4816 = vunpack.c.l.b16 %v4723
    %v4817 = vunpack.c.h.b16 %v4723
    %v4818 = vunpack.c.l.b16 %v4724
    %v4819 = vunpack.c.h.b16 %v4724
    %v4820 = vunpack.c.l.b16 %v4725
    %v4821 = vunpack.c.h.b16 %v4725
    %v4822 = vpack.c.b16 %v4760, %v4758
    %v4823 = vpack.c.b16 %v4761, %v4759
    %v4824 = vpack.c.b16 %v4764, %v4762
    %v4825 = vpack.c.b16 %v4765, %v4763
    %v4826 = vpack.c.b16 %v4768, %v4766
    %v4827 = vpack.c.b16 %v4769, %v4767
    %v4828 = vpack.c.b16 %v4772, %v4770
    %v4829 = vpack.c.b16 %v4773, %v4771
    %v4830 = vpack.c.b16 %v4776, %v4774
    %v4831 = vpack.c.b16 %v4777, %v4775
    %v4832 = vpack.c.b16 %v4780, %v4778
    %v4833 = vpack.c.b16 %v4781, %v4779
    %v4834 = vpack.c.b16 %v4784, %v4782
    %v4835 = vpack.c.b16 %v4785, %v4783
    %v4836 = vpack.c.b16 %v4788, %v4786
    %v4837 = vpack.c.b16 %v4789, %v4787
    %v4838 = vpack.c.b16 %v4792, %v4790
    %v4839 = vpack.c.b16 %v4793, %v4791
    %v4840 = vpack.c.b16 %v4796, %v4794
    %v4841 = vpack.c.b16 %v4797, %v4795
    %v4842 = vpack.c.b16 %v4800, %v4798
    %v4843 = vpack.c.b16 %v4801, %v4799
    %v4844 = vpack.c.b16 %v4804, %v4802
    %v4845 = vpack.c.b16 %v4805, %v4803
    %v4846 = vpack.c.b16 %v4808, %v4806
    %v4847 = vpack.c.b16 %v4809, %v4807
    %v4848 = vpack.c.b16 %v4812, %v4810
    %v4849 = vpack.c.b16 %v4813, %v4811
    %v4850 = vpack.c.b16 %v4816, %v4814
    %v4851 = vpack.c.b16 %v4817, %v4815
    %v4852 = vpack.c.b16 %v4820, %v4818
    %v4853 = vpack.c.b16 %v4821, %v4819
    %4886 = vmatpush.bf16.msra.mxu0 %v4836
    %4887 = vmatpush.bf16.msra.mxu0 %v4834
    %4888 = vmatpush.bf16.msra.mxu0 %v4832
    %4889 = vmatpush.bf16.msra.mxu0 %v4830
    %4890 = vmatpush.bf16.msra.mxu0 %v4828
    %4891 = vmatpush.bf16.msra.mxu0 %v4826
    %4892 = vmatpush.bf16.msra.mxu0 %v4824
    %4893 = vmatpush.bf16.msra.mxu0 %v4822
    %4894 = vmatmul.bf16.gmra.mxu0 %v4151
    %v4895 = vpop.f32.mrf.mxu0
    %v4896 = vadd.f32 0.0, %v4895
    %v4897 = vpop.f32.mrf.mxu0
    %v4898 = vadd.f32 0.0, %v4897
    %4899 = vmatmul.bf16.gmra.mxu0 %v4153
    %v4900 = vpop.f32.mrf.mxu0
    %v4901 = vadd.f32 0.0, %v4900
    %v4902 = vpop.f32.mrf.mxu0
    %v4903 = vadd.f32 0.0, %v4902
    %4904 = vdwg.mxu0
    %4905 = vmatpush.bf16.msra.mxu0 %v4852
    %4906 = vmatpush.bf16.msra.mxu0 %v4850
    %4907 = vmatpush.bf16.msra.mxu0 %v4848
    %4908 = vmatpush.bf16.msra.mxu0 %v4846
    %4909 = vmatpush.bf16.msra.mxu0 %v4844
    %4910 = vmatpush.bf16.msra.mxu0 %v4842
    %4911 = vmatpush.bf16.msra.mxu0 %v4840
    %4912 = vmatpush.bf16.msra.mxu0 %v4838
    %4913 = vmatmul.bf16.gmra.mxu0 %v4152
    %v4914 = vpop.f32.mrf.mxu0
    %v4915 = vadd.f32 %v4896, %v4914
    %v4916 = vpop.f32.mrf.mxu0
    %v4917 = vadd.f32 %v4898, %v4916
    %4918 = vmatmul.bf16.gmra.mxu0 %v4154
    %v4919 = vpop.f32.mrf.mxu0
    %v4920 = vadd.f32 %v4901, %v4919
    %v4921 = vpop.f32.mrf.mxu0
    %v4922 = vadd.f32 %v4903, %v4921
    %4923 = vdwg.mxu0
    %4924 = vmatpush.bf16.msra.mxu0 %v4837
    %4925 = vmatpush.bf16.msra.mxu0 %v4835
    %4926 = vmatpush.bf16.msra.mxu0 %v4833
    %4927 = vmatpush.bf16.msra.mxu0 %v4831
    %4928 = vmatpush.bf16.msra.mxu0 %v4829
    %4929 = vmatpush.bf16.msra.mxu0 %v4827
    %4930 = vmatpush.bf16.msra.mxu0 %v4825
    %4931 = vmatpush.bf16.msra.mxu0 %v4823
    %4932 = vmatmul.bf16.gmra.mxu0 %v4151
    %v4933 = vpop.f32.mrf.mxu0
    %v4934 = vadd.f32 0.0, %v4933
    %v4935 = vpop.f32.mrf.mxu0
    %v4936 = vadd.f32 0.0, %v4935
    %4937 = vmatmul.bf16.gmra.mxu0 %v4153
    %v4938 = vpop.f32.mrf.mxu0
    %v4939 = vadd.f32 0.0, %v4938
    %v4940 = vpop.f32.mrf.mxu0
    %v4941 = vadd.f32 0.0, %v4940
    %4942 = vdwg.mxu0
    %4943 = vmatpush.bf16.msra.mxu0 %v4853
    %4944 = vmatpush.bf16.msra.mxu0 %v4851
    %4945 = vmatpush.bf16.msra.mxu0 %v4849
    %4946 = vmatpush.bf16.msra.mxu0 %v4847
    %4947 = vmatpush.bf16.msra.mxu0 %v4845
    %4948 = vmatpush.bf16.msra.mxu0 %v4843
    %4949 = vmatpush.bf16.msra.mxu0 %v4841
    %4950 = vmatpush.bf16.msra.mxu0 %v4839
    %4951 = vmatmul.bf16.gmra.mxu0 %v4152
    %v4952 = vpop.f32.mrf.mxu0
    %v4953 = vadd.f32 %v4934, %v4952
    %v4954 = vpop.f32.mrf.mxu0
    %v4955 = vadd.f32 %v4936, %v4954
    %4956 = vmatmul.bf16.gmra.mxu0 %v4154
    %v4957 = vpop.f32.mrf.mxu0
    %v4958 = vadd.f32 %v4939, %v4957
    %v4959 = vpop.f32.mrf.mxu0
    %v4960 = vadd.f32 %v4941, %v4959
    %4961 = vdwg.mxu0
    %v4962 = vadd.f32 %v4646, %v4915
    %v4963 = vadd.f32 %v4684, %v4953
    %v4964 = vadd.f32 %v4648, %v4917
    %v4965 = vadd.f32 %v4686, %v4955
    %v4966 = vadd.f32 %v4651, %v4920
    %v4967 = vadd.f32 %v4689, %v4958
    %v4968 = vadd.f32 %v4653, %v4922
    %v4969 = vadd.f32 %v4691, %v4960
    %s4970 = scalar_lea.vmem [#allocation6], 8
    %v4971 = vld [vmem:[%s4970] sm:$0x3]
    %v4973 = vperm.slane %v4971, 0
    %v4974 = vperm.slane %v4971, 1
    %v4977 = vadd.f32 %v4962, %v4973
    %v4978 = vadd.f32 %v4963, %v4974
    %v4979 = vadd.f32 %v4964, %v4973
    %v4980 = vadd.f32 %v4965, %v4974
    %v4981 = vadd.f32 %v4966, %v4973
    %v4982 = vadd.f32 %v4967, %v4974
    %v4983 = vadd.f32 %v4968, %v4973
    %v4984 = vadd.f32 %v4969, %v4974
    %v4985 = vld [vmem:[#allocation3] sm:$0xff]
    %v4986 = vld [vmem:[#allocation3 + $0x8] sm:$0xff]
    %v4987 = vld [vmem:[#allocation3 + $0x10] sm:$0xff]
    %v4988 = vld [vmem:[#allocation3 + $0x18] sm:$0xff]
    %v4989 = vld [vmem:[#allocation3 + $0x20] sm:$0xff]
    %v4990 = vld [vmem:[#allocation3 + $0x28] sm:$0xff]
    %v4991 = vld [vmem:[#allocation3 + $0x30] sm:$0xff]
    %v4992 = vld [vmem:[#allocation3 + $0x38] sm:$0xff]
    %v4993 = vadd.f32 %v4977, %v4985
    %v4994 = vadd.f32 %v4978, %v4986
    %v4995 = vadd.f32 %v4979, %v4987
    %v4996 = vadd.f32 %v4980, %v4988
    %v4997 = vadd.f32 %v4981, %v4989
    %v4998 = vadd.f32 %v4982, %v4990
    %v4999 = vadd.f32 %v4983, %v4991
    %v5000 = vadd.f32 %v4984, %v4992
    %v5001 = vmax.f32 %v4993, 0.0
    %v5002 = vmax.f32 %v4994, 0.0
    %v5003 = vmax.f32 %v4995, 0.0
    %v5004 = vmax.f32 %v4996, 0.0
    %v5005 = vmax.f32 %v4997, 0.0
    %v5006 = vmax.f32 %v4998, 0.0
    %v5007 = vmax.f32 %v4999, 0.0
    %v5008 = vmax.f32 %v5000, 0.0
    %5009 = vst [vmem:[%s3] sm:$0xff] %v5001
    %5010 = vst [vmem:[%s3 + $0x8] sm:$0xff] %v5002
    %5011 = vst [vmem:[%s3 + $0x10] sm:$0xff] %v5003
    %5012 = vst [vmem:[%s3 + $0x18] sm:$0xff] %v5004
    %5013 = vst [vmem:[%s3 + $0x20] sm:$0xff] %v5005
    %5014 = vst [vmem:[%s3 + $0x28] sm:$0xff] %v5006
    %5015 = vst [vmem:[%s3 + $0x30] sm:$0xff] %v5007
    %5016 = vst [vmem:[%s3 + $0x38] sm:$0xff] %v5008
    // Predicated region
    $region22: #{resnet1layer_forward.1} parent=1 // pred_check
      _
    $region23: #{resnet1layer_forward.1} parent=1 // pred_check_branch
      %5018 = sbr.rel (0) target = $region25
    $region24: #{resnet1layer_forward.1} parent=1 // pred_region
      _
    $region25: #{resnet1layer_forward.1} parent=1 // pred_fallthru
      _
    // Predicated region
    $region26: #{resnet1layer_forward.1} parent=1 // pred_check
      _
    $region27: #{resnet1layer_forward.1} parent=1 // pred_check_branch
      %5020 = sbr.rel (0) target = $region29
    $region28: #{resnet1layer_forward.1} parent=1 // pred_region
      _
    $region29: #{resnet1layer_forward.1} parent=1 // pred_fallthru
      _
    %5021 = vsyncpa [#allocation5], 1
    %5022 = vsyncpa [#allocation7], 1

</llo_original>
